<compile_context>
chip_gen: v5e
topology: v5e:2x2
jax: 0.10.0
libtpu: 0.0.40
codegen_flags: <defaults>
</compile_context>

<pallas_src>
import jax
import jax.numpy as jnp
from jax.experimental import pallas as pl
from jax.experimental.pallas import tpu as pltpu


def _round_up(x, m):
    return (x + m - 1) // m * m


# ---------------------------------------------------------------------------
# Fused kernel: [optional BN-affine + ReLU on the input channels] -> 3x3 conv
#               -> per-sample per-channel (sum, sum^2) of the raw conv output
# One grid step == one sample; all outputs are grid-indexed (no resident
# blocks), so the batch axis is fully "parallel".
# ---------------------------------------------------------------------------
def make_conv3x3_kernel(Cin, Co, W, Lp, apply_act):
    Wp = W + 2

    def kernel(x_ref, scale_ref, shift_ref, w_ref, b_ref, mask_ref,
               y_ref, stats_ref):
        # x_ref    : (Cin, Lp)  padded-flat input channels              (VMEM)
        # scale/shift : (Cin, 1) folded BN affine of the previous stage (VMEM)
        # w_ref    : (Co, Cin*9) conv weights, tap index along lanes    (VMEM)
        # b_ref    : (Co, 1)    conv bias                               (VMEM)
        # mask_ref : (1, Lp)    1.0 on interior (valid) positions       (VMEM)
        # y_ref    : (Co, Lp)   raw conv output, padded-flat            (VMEM)
        # stats_ref: (Co, 2)    this sample's per-channel (sum, sum^2)  (VMEM)
        mask = mask_ref[...]                                   # (1, Lp)
        x = x_ref[...].astype(jnp.float32)                     # (Cin, Lp)
        if apply_act:
            # Previous-stage BN + ReLU, hoisted out of the tap loop; the mask
            # restores the zero border (the BN shift makes pads nonzero).
            x = jnp.maximum(x * scale_ref[...] + shift_ref[...], 0.0) * mask
        wmat = w_ref[...]                                      # (Co, Cin*9)

        acc = jnp.zeros((Co, Lp), jnp.float32)
        for dh in range(3):
            for dw in range(3):
                off = (dh - 1) * Wp + (dw - 1)     # constant lane offset
                # One XLU lane-roll shifts ALL input channels for this tap;
                # any wrap-around only lands on (masked) border positions.
                shifted = x if off == 0 else pltpu.roll(x, (-off) % Lp, 1)
                for ci in range(Cin):
                    t = ci * 9 + dh * 3 + dw
                    # Packed broadcast-FMA: (Co,1) weight column x (1,Lp) row.
                    acc = acc + wmat[:, t:t + 1] * shifted[ci:ci + 1, :]

        y = (acc + b_ref[...]) * mask              # add bias, zero pad lanes
        y_ref[...] = y.astype(y_ref.dtype)         # one lane-dense block store
        # Coalesced per-sample BN statistics (pads are already zero in y).
        stats_ref[:, 0:1] = jnp.sum(y, axis=1, keepdims=True)
        stats_ref[:, 1:2] = jnp.sum(y * y, axis=1, keepdims=True)

    return kernel


def conv3x3_stage(x_flat, w, b, scale, shift, mask, *, W, apply_act):
    """3x3 conv on padded-flat inputs + per-sample BN statistics."""
    N, Cin, Lp = x_flat.shape
    Co = w.shape[0]
    wmat = w.reshape(Co, Cin * 9).astype(jnp.float32)

    def full(shape):          # whole-array block, reused every grid step
        return pl.BlockSpec(shape, lambda n, _r=len(shape): (0,) * _r)

    y, stats = pl.pallas_call(
        make_conv3x3_kernel(Cin, Co, W, Lp, apply_act),
        out_shape=(jax.ShapeDtypeStruct((N, Co, Lp), jnp.float32),
                   jax.ShapeDtypeStruct((N, Co, 2), jnp.float32)),
        grid_spec=pltpu.PrefetchScalarGridSpec(
            num_scalar_prefetch=0,
            grid=(N,),
            in_specs=[pl.BlockSpec((None, Cin, Lp), lambda n: (n, 0, 0)),
                      full((Cin, 1)), full((Cin, 1)),
                      full((Co, Cin * 9)), full((Co, 1)), full((1, Lp))],
            out_specs=(pl.BlockSpec((None, Co, Lp), lambda n: (n, 0, 0)),
                       pl.BlockSpec((None, Co, 2), lambda n: (n, 0, 0))),
        ),
        # No resident accumulators -> batch axis is parallel (megacore-ready).
        compiler_params=pltpu.CompilerParams(
            dimension_semantics=("parallel",)),
    )(x_flat, scale.astype(jnp.float32), shift.astype(jnp.float32),
      wmat, b.reshape(Co, 1).astype(jnp.float32), mask)
    return y, stats


# ---------------------------------------------------------------------------
# Wrapper: fold training-mode BatchNorm into per-channel (scale, shift)
# ---------------------------------------------------------------------------
def bn_affine(stats, count, gamma, beta, eps):
    s = jnp.sum(stats[:, :, 0], axis=0)
    ss = jnp.sum(stats[:, :, 1], axis=0)
    mean = s / count
    # TODO(synk): E[x^2]-E[x]^2 can cancel badly for huge counts / large means;
    #             switch to a shifted / Welford-style accumulation if scaled up.
    var = ss / count - mean * mean              # biased variance (training BN)
    rstd = jax.lax.rsqrt(var + eps)
    scale = gamma.astype(jnp.float32) * rstd
    shift = beta.astype(jnp.float32) - mean * scale
    return scale, shift


def conv_relu_forward(x, params, eps=1e-5):
    """Forward pass of the PyTorch `conv_Relu` module. Input/output are NCHW."""
    N, Cin, H, W = x.shape
    Hp, Wp = H + 2, W + 2
    L = Hp * Wp
    Lp = _round_up(L, 128)                      # lane-dense flat length (384)
    Co = params["w1"].shape[0]
    count = N * H * W
    f32 = jnp.float32

    # Interior mask in the padded-flat layout (constant, folded by XLA).
    rr = jnp.arange(Hp)[:, None]
    cc = jnp.arange(Wp)[None, :]
    m2d = ((rr >= 1) & (rr <= H) & (cc >= 1) & (cc <= W)).astype(f32)
    mask = jnp.pad(m2d.reshape(1, L), ((0, 0), (0, Lp - L)))

    # Pack the network input once into the padded-flat lane-dense layout; the
    # intermediate y1 is produced directly in this layout by the kernel, so it
    # never round-trips through an XLA pad.
    xp = jnp.pad(x.astype(f32), ((0, 0), (0, 0), (1, 1), (1, 1)))
    x_flat = jnp.pad(xp.reshape(N, Cin, L), ((0, 0), (0, 0), (0, Lp - L)))

    ones = jnp.ones((Cin, 1), f32)
    zeros = jnp.zeros((Cin, 1), f32)

    # stage 1: conv1 + per-sample stats of its raw output
    y1, st1 = conv3x3_stage(x_flat, params["w1"], params["b1"], ones, zeros,
                            mask, W=W, apply_act=False)
    scale1, shift1 = bn_affine(st1, count, params["g1"], params["bt1"], eps)

    # stage 2: BN1 + ReLU fused into conv2, + stats of conv2's raw output
    y2, st2 = conv3x3_stage(y1, params["w2"], params["b2"],
                            scale1.reshape(Co, 1), shift1.reshape(Co, 1),
                            mask, W=W, apply_act=True)
    scale2, shift2 = bn_affine(st2, count, params["g2"], params["bt2"], eps)

    # final BN2 + ReLU: tiny elementwise op, left to XLA (fuses with the
    # layout unpack below; a third pallas_call is pure overhead at this size).
    out = jnp.maximum(y2 * scale2.reshape(1, Co, 1) + shift2.reshape(1, Co, 1),
                      0.0)
    return out[:, :, :L].reshape(N, Co, Hp, Wp)[:, :, 1:H + 1, 1:W + 1]


# ---------------------------------------------------------------------------
# Deterministic parameter init (mirrors Conv2d/BatchNorm2d shapes)
# ---------------------------------------------------------------------------
def init_params(key, inplanes, outplanes):
    ks = jax.random.split(key, 8)
    s1 = (2.0 / (inplanes * 9)) ** 0.5
    s2 = (2.0 / (outplanes * 9)) ** 0.5
    return dict(
        w1=jax.random.normal(ks[0], (outplanes, inplanes, 3, 3), jnp.float32) * s1,
        b1=0.1 * jax.random.normal(ks[1], (outplanes,), jnp.float32),
        w2=jax.random.normal(ks[2], (outplanes, outplanes, 3, 3), jnp.float32) * s2,
        b2=0.1 * jax.random.normal(ks[3], (outplanes,), jnp.float32),
        g1=1.0 + 0.1 * jax.random.normal(ks[4], (outplanes,), jnp.float32),
        bt1=0.1 * jax.random.normal(ks[5], (outplanes,), jnp.float32),
        g2=1.0 + 0.1 * jax.random.normal(ks[6], (outplanes,), jnp.float32),
        bt2=0.1 * jax.random.normal(ks[7], (outplanes,), jnp.float32),
    )


# ---------------------------------------------------------------------------
# Pure-JAX reference (full f32 precision) for the sanity check
# ---------------------------------------------------------------------------
def reference_forward(x, p, eps=1e-5):
    def conv(v, w, b):
        y = jax.lax.conv_general_dilated(
            v, w, window_strides=(1, 1), padding=((1, 1), (1, 1)),
            dimension_numbers=("NCHW", "OIHW", "NCHW"),
            precision=jax.lax.Precision.HIGHEST)
        return y + b.reshape(1, -1, 1, 1)

    def bnrelu(y, g, bt):
        mean = jnp.mean(y, axis=(0, 2, 3), keepdims=True)
        var = jnp.mean((y - mean) ** 2, axis=(0, 2, 3), keepdims=True)
        yn = (y - mean) * jax.lax.rsqrt(var + eps) * g.reshape(1, -1, 1, 1) \
             + bt.reshape(1, -1, 1, 1)
        return jnp.maximum(yn, 0.0)

    y = bnrelu(conv(x, p["w1"], p["b1"]), p["g1"], p["bt1"])
    y = bnrelu(conv(y, p["w2"], p["b2"]), p["g2"], p["bt2"])
    return y


if __name__ == "__main__":
    inplanes, outplanes = 4, 8
    N, H, W = 2, 16, 16

    key = jax.random.PRNGKey(0)
    kx, kp = jax.random.split(key)
    x = jax.random.normal(kx, (N, inplanes, H, W), jnp.float32)
    params = init_params(kp, inplanes, outplanes)

    fwd = jax.jit(conv_relu_forward)
    y = fwd(x, params)
    jax.block_until_ready(y)

    ref = reference_forward(x, params)
    assert y.shape == (N, outplanes, H, W)
    err = float(jnp.max(jnp.abs(y - ref)))
    assert err < 1e-3, f"max abs err {err}"

    print("KERNEL_OK")
</pallas_src>

<mosaic_0001>
module attributes {stable_mosaic.version = 11 : i64} {
  func.func @kernel(%arg0: i32, %arg1: memref<1x4x384xf32, #tpu.memory_space<vmem>>, %arg2: memref<4x1xf32, #tpu.memory_space<vmem>>, %arg3: memref<4x1xf32, #tpu.memory_space<vmem>>, %arg4: memref<8x36xf32, #tpu.memory_space<vmem>>, %arg5: memref<8x1xf32, #tpu.memory_space<vmem>>, %arg6: memref<1x384xf32, #tpu.memory_space<vmem>>, %arg7: memref<1x8x384xf32, #tpu.memory_space<vmem>>, %arg8: memref<1x8x2xf32, #tpu.memory_space<vmem>>) attributes {dimension_semantics = [#tpu.dimension_semantics<parallel>], iteration_bounds = array<i64: 2>, scalar_prefetch = 0 : i64, scratch_operands = 0 : i64, tpu.core_type = #tpu.core_type<tc>, window_params = [{transform_indices = @transform_0, window_bounds = array<i64: 1, 4, 384>}, {pipeline_mode = #tpu.pipeline_mode<synchronous>, transform_indices = @transform_1, window_bounds = array<i64: 4, 1>}, {pipeline_mode = #tpu.pipeline_mode<synchronous>, transform_indices = @transform_2, window_bounds = array<i64: 4, 1>}, {pipeline_mode = #tpu.pipeline_mode<synchronous>, transform_indices = @transform_3, window_bounds = array<i64: 8, 36>}, {pipeline_mode = #tpu.pipeline_mode<synchronous>, transform_indices = @transform_4, window_bounds = array<i64: 8, 1>}, {pipeline_mode = #tpu.pipeline_mode<synchronous>, transform_indices = @transform_5, window_bounds = array<i64: 1, 384>}, {transform_indices = @transform_6, window_bounds = array<i64: 1, 8, 384>}, {transform_indices = @transform_7, window_bounds = array<i64: 1, 8, 2>}]} {
    %c0 = arith.constant 0 : index
    %c0_0 = arith.constant 0 : index
    %0 = vector.load %arg6[%c0, %c0_0] : memref<1x384xf32, #tpu.memory_space<vmem>>, vector<1x384xf32>
    %c0_1 = arith.constant 0 : index
    %c0_2 = arith.constant 0 : index
    %c0_3 = arith.constant 0 : index
    %1 = vector.load %arg1[%c0_1, %c0_2, %c0_3] : memref<1x4x384xf32, #tpu.memory_space<vmem>>, vector<1x4x384xf32>
    %2 = vector.shape_cast %1 : vector<1x4x384xf32> to vector<4x384xf32>
    %c0_4 = arith.constant 0 : index
    %c0_5 = arith.constant 0 : index
    %3 = vector.load %arg4[%c0_4, %c0_5] : memref<8x36xf32, #tpu.memory_space<vmem>>, vector<8x36xf32>
    %cst = arith.constant 0.000000e+00 : f32
    %4 = vector.broadcast %cst : f32 to vector<8x384xf32>
    %c19_i32 = arith.constant 19 : i32
    %5 = tpu.dynamic_rotate %2 by %c19_i32 dim 1 : vector<4x384xf32>, i32 -> vector<4x384xf32>
    %6 = vector.extract_strided_slice %3 {offsets = [0, 0], sizes = [8, 1], strides = [1, 1]} : vector<8x36xf32> to vector<8x1xf32>
    %7 = vector.extract_strided_slice %5 {offsets = [0, 0], sizes = [1, 384], strides = [1, 1]} : vector<4x384xf32> to vector<1x384xf32>
    %8 = vector.broadcast %6 : vector<8x1xf32> to vector<8x384xf32>
    %9 = vector.broadcast %7 : vector<1x384xf32> to vector<8x384xf32>
    %10 = arith.mulf %8, %9 : vector<8x384xf32>
    %11 = arith.addf %4, %10 : vector<8x384xf32>
    %12 = vector.extract_strided_slice %3 {offsets = [0, 9], sizes = [8, 1], strides = [1, 1]} : vector<8x36xf32> to vector<8x1xf32>
    %13 = vector.extract_strided_slice %5 {offsets = [1, 0], sizes = [1, 384], strides = [1, 1]} : vector<4x384xf32> to vector<1x384xf32>
    %14 = vector.broadcast %12 : vector<8x1xf32> to vector<8x384xf32>
    %15 = vector.broadcast %13 : vector<1x384xf32> to vector<8x384xf32>
    %16 = arith.mulf %14, %15 : vector<8x384xf32>
    %17 = arith.addf %11, %16 : vector<8x384xf32>
    %18 = vector.extract_strided_slice %3 {offsets = [0, 18], sizes = [8, 1], strides = [1, 1]} : vector<8x36xf32> to vector<8x1xf32>
    %19 = vector.extract_strided_slice %5 {offsets = [2, 0], sizes = [1, 384], strides = [1, 1]} : vector<4x384xf32> to vector<1x384xf32>
    %20 = vector.broadcast %18 : vector<8x1xf32> to vector<8x384xf32>
    %21 = vector.broadcast %19 : vector<1x384xf32> to vector<8x384xf32>
    %22 = arith.mulf %20, %21 : vector<8x384xf32>
    %23 = arith.addf %17, %22 : vector<8x384xf32>
    %24 = vector.extract_strided_slice %3 {offsets = [0, 27], sizes = [8, 1], strides = [1, 1]} : vector<8x36xf32> to vector<8x1xf32>
    %25 = vector.extract_strided_slice %5 {offsets = [3, 0], sizes = [1, 384], strides = [1, 1]} : vector<4x384xf32> to vector<1x384xf32>
    %26 = vector.broadcast %24 : vector<8x1xf32> to vector<8x384xf32>
    %27 = vector.broadcast %25 : vector<1x384xf32> to vector<8x384xf32>
    %28 = arith.mulf %26, %27 : vector<8x384xf32>
    %29 = arith.addf %23, %28 : vector<8x384xf32>
    %c18_i32 = arith.constant 18 : i32
    %30 = tpu.dynamic_rotate %2 by %c18_i32 dim 1 : vector<4x384xf32>, i32 -> vector<4x384xf32>
    %31 = vector.extract_strided_slice %3 {offsets = [0, 1], sizes = [8, 1], strides = [1, 1]} : vector<8x36xf32> to vector<8x1xf32>
    %32 = vector.extract_strided_slice %30 {offsets = [0, 0], sizes = [1, 384], strides = [1, 1]} : vector<4x384xf32> to vector<1x384xf32>
    %33 = vector.broadcast %31 : vector<8x1xf32> to vector<8x384xf32>
    %34 = vector.broadcast %32 : vector<1x384xf32> to vector<8x384xf32>
    %35 = arith.mulf %33, %34 : vector<8x384xf32>
    %36 = arith.addf %29, %35 : vector<8x384xf32>
    %37 = vector.extract_strided_slice %3 {offsets = [0, 10], sizes = [8, 1], strides = [1, 1]} : vector<8x36xf32> to vector<8x1xf32>
    %38 = vector.extract_strided_slice %30 {offsets = [1, 0], sizes = [1, 384], strides = [1, 1]} : vector<4x384xf32> to vector<1x384xf32>
    %39 = vector.broadcast %37 : vector<8x1xf32> to vector<8x384xf32>
    %40 = vector.broadcast %38 : vector<1x384xf32> to vector<8x384xf32>
    %41 = arith.mulf %39, %40 : vector<8x384xf32>
    %42 = arith.addf %36, %41 : vector<8x384xf32>
    %43 = vector.extract_strided_slice %3 {offsets = [0, 19], sizes = [8, 1], strides = [1, 1]} : vector<8x36xf32> to vector<8x1xf32>
    %44 = vector.extract_strided_slice %30 {offsets = [2, 0], sizes = [1, 384], strides = [1, 1]} : vector<4x384xf32> to vector<1x384xf32>
    %45 = vector.broadcast %43 : vector<8x1xf32> to vector<8x384xf32>
    %46 = vector.broadcast %44 : vector<1x384xf32> to vector<8x384xf32>
    %47 = arith.mulf %45, %46 : vector<8x384xf32>
    %48 = arith.addf %42, %47 : vector<8x384xf32>
    %49 = vector.extract_strided_slice %3 {offsets = [0, 28], sizes = [8, 1], strides = [1, 1]} : vector<8x36xf32> to vector<8x1xf32>
    %50 = vector.extract_strided_slice %30 {offsets = [3, 0], sizes = [1, 384], strides = [1, 1]} : vector<4x384xf32> to vector<1x384xf32>
    %51 = vector.broadcast %49 : vector<8x1xf32> to vector<8x384xf32>
    %52 = vector.broadcast %50 : vector<1x384xf32> to vector<8x384xf32>
    %53 = arith.mulf %51, %52 : vector<8x384xf32>
    %54 = arith.addf %48, %53 : vector<8x384xf32>
    %c17_i32 = arith.constant 17 : i32
    %55 = tpu.dynamic_rotate %2 by %c17_i32 dim 1 : vector<4x384xf32>, i32 -> vector<4x384xf32>
    %56 = vector.extract_strided_slice %3 {offsets = [0, 2], sizes = [8, 1], strides = [1, 1]} : vector<8x36xf32> to vector<8x1xf32>
    %57 = vector.extract_strided_slice %55 {offsets = [0, 0], sizes = [1, 384], strides = [1, 1]} : vector<4x384xf32> to vector<1x384xf32>
    %58 = vector.broadcast %56 : vector<8x1xf32> to vector<8x384xf32>
    %59 = vector.broadcast %57 : vector<1x384xf32> to vector<8x384xf32>
    %60 = arith.mulf %58, %59 : vector<8x384xf32>
    %61 = arith.addf %54, %60 : vector<8x384xf32>
    %62 = vector.extract_strided_slice %3 {offsets = [0, 11], sizes = [8, 1], strides = [1, 1]} : vector<8x36xf32> to vector<8x1xf32>
    %63 = vector.extract_strided_slice %55 {offsets = [1, 0], sizes = [1, 384], strides = [1, 1]} : vector<4x384xf32> to vector<1x384xf32>
    %64 = vector.broadcast %62 : vector<8x1xf32> to vector<8x384xf32>
    %65 = vector.broadcast %63 : vector<1x384xf32> to vector<8x384xf32>
    %66 = arith.mulf %64, %65 : vector<8x384xf32>
    %67 = arith.addf %61, %66 : vector<8x384xf32>
    %68 = vector.extract_strided_slice %3 {offsets = [0, 20], sizes = [8, 1], strides = [1, 1]} : vector<8x36xf32> to vector<8x1xf32>
    %69 = vector.extract_strided_slice %55 {offsets = [2, 0], sizes = [1, 384], strides = [1, 1]} : vector<4x384xf32> to vector<1x384xf32>
    %70 = vector.broadcast %68 : vector<8x1xf32> to vector<8x384xf32>
    %71 = vector.broadcast %69 : vector<1x384xf32> to vector<8x384xf32>
    %72 = arith.mulf %70, %71 : vector<8x384xf32>
    %73 = arith.addf %67, %72 : vector<8x384xf32>
    %74 = vector.extract_strided_slice %3 {offsets = [0, 29], sizes = [8, 1], strides = [1, 1]} : vector<8x36xf32> to vector<8x1xf32>
    %75 = vector.extract_strided_slice %55 {offsets = [3, 0], sizes = [1, 384], strides = [1, 1]} : vector<4x384xf32> to vector<1x384xf32>
    %76 = vector.broadcast %74 : vector<8x1xf32> to vector<8x384xf32>
    %77 = vector.broadcast %75 : vector<1x384xf32> to vector<8x384xf32>
    %78 = arith.mulf %76, %77 : vector<8x384xf32>
    %79 = arith.addf %73, %78 : vector<8x384xf32>
    %c1_i32 = arith.constant 1 : i32
    %80 = tpu.dynamic_rotate %2 by %c1_i32 dim 1 : vector<4x384xf32>, i32 -> vector<4x384xf32>
    %81 = vector.extract_strided_slice %3 {offsets = [0, 3], sizes = [8, 1], strides = [1, 1]} : vector<8x36xf32> to vector<8x1xf32>
    %82 = vector.extract_strided_slice %80 {offsets = [0, 0], sizes = [1, 384], strides = [1, 1]} : vector<4x384xf32> to vector<1x384xf32>
    %83 = vector.broadcast %81 : vector<8x1xf32> to vector<8x384xf32>
    %84 = vector.broadcast %82 : vector<1x384xf32> to vector<8x384xf32>
    %85 = arith.mulf %83, %84 : vector<8x384xf32>
    %86 = arith.addf %79, %85 : vector<8x384xf32>
    %87 = vector.extract_strided_slice %3 {offsets = [0, 12], sizes = [8, 1], strides = [1, 1]} : vector<8x36xf32> to vector<8x1xf32>
    %88 = vector.extract_strided_slice %80 {offsets = [1, 0], sizes = [1, 384], strides = [1, 1]} : vector<4x384xf32> to vector<1x384xf32>
    %89 = vector.broadcast %87 : vector<8x1xf32> to vector<8x384xf32>
    %90 = vector.broadcast %88 : vector<1x384xf32> to vector<8x384xf32>
    %91 = arith.mulf %89, %90 : vector<8x384xf32>
    %92 = arith.addf %86, %91 : vector<8x384xf32>
    %93 = vector.extract_strided_slice %3 {offsets = [0, 21], sizes = [8, 1], strides = [1, 1]} : vector<8x36xf32> to vector<8x1xf32>
    %94 = vector.extract_strided_slice %80 {offsets = [2, 0], sizes = [1, 384], strides = [1, 1]} : vector<4x384xf32> to vector<1x384xf32>
    %95 = vector.broadcast %93 : vector<8x1xf32> to vector<8x384xf32>
    %96 = vector.broadcast %94 : vector<1x384xf32> to vector<8x384xf32>
    %97 = arith.mulf %95, %96 : vector<8x384xf32>
    %98 = arith.addf %92, %97 : vector<8x384xf32>
    %99 = vector.extract_strided_slice %3 {offsets = [0, 30], sizes = [8, 1], strides = [1, 1]} : vector<8x36xf32> to vector<8x1xf32>
    %100 = vector.extract_strided_slice %80 {offsets = [3, 0], sizes = [1, 384], strides = [1, 1]} : vector<4x384xf32> to vector<1x384xf32>
    %101 = vector.broadcast %99 : vector<8x1xf32> to vector<8x384xf32>
    %102 = vector.broadcast %100 : vector<1x384xf32> to vector<8x384xf32>
    %103 = arith.mulf %101, %102 : vector<8x384xf32>
    %104 = arith.addf %98, %103 : vector<8x384xf32>
    %105 = vector.extract_strided_slice %3 {offsets = [0, 4], sizes = [8, 1], strides = [1, 1]} : vector<8x36xf32> to vector<8x1xf32>
    %106 = vector.extract_strided_slice %2 {offsets = [0, 0], sizes = [1, 384], strides = [1, 1]} : vector<4x384xf32> to vector<1x384xf32>
    %107 = vector.broadcast %105 : vector<8x1xf32> to vector<8x384xf32>
    %108 = vector.broadcast %106 : vector<1x384xf32> to vector<8x384xf32>
    %109 = arith.mulf %107, %108 : vector<8x384xf32>
    %110 = arith.addf %104, %109 : vector<8x384xf32>
    %111 = vector.extract_strided_slice %3 {offsets = [0, 13], sizes = [8, 1], strides = [1, 1]} : vector<8x36xf32> to vector<8x1xf32>
    %112 = vector.extract_strided_slice %2 {offsets = [1, 0], sizes = [1, 384], strides = [1, 1]} : vector<4x384xf32> to vector<1x384xf32>
    %113 = vector.broadcast %111 : vector<8x1xf32> to vector<8x384xf32>
    %114 = vector.broadcast %112 : vector<1x384xf32> to vector<8x384xf32>
    %115 = arith.mulf %113, %114 : vector<8x384xf32>
    %116 = arith.addf %110, %115 : vector<8x384xf32>
    %117 = vector.extract_strided_slice %3 {offsets = [0, 22], sizes = [8, 1], strides = [1, 1]} : vector<8x36xf32> to vector<8x1xf32>
    %118 = vector.extract_strided_slice %2 {offsets = [2, 0], sizes = [1, 384], strides = [1, 1]} : vector<4x384xf32> to vector<1x384xf32>
    %119 = vector.broadcast %117 : vector<8x1xf32> to vector<8x384xf32>
    %120 = vector.broadcast %118 : vector<1x384xf32> to vector<8x384xf32>
    %121 = arith.mulf %119, %120 : vector<8x384xf32>
    %122 = arith.addf %116, %121 : vector<8x384xf32>
    %123 = vector.extract_strided_slice %3 {offsets = [0, 31], sizes = [8, 1], strides = [1, 1]} : vector<8x36xf32> to vector<8x1xf32>
    %124 = vector.extract_strided_slice %2 {offsets = [3, 0], sizes = [1, 384], strides = [1, 1]} : vector<4x384xf32> to vector<1x384xf32>
    %125 = vector.broadcast %123 : vector<8x1xf32> to vector<8x384xf32>
    %126 = vector.broadcast %124 : vector<1x384xf32> to vector<8x384xf32>
    %127 = arith.mulf %125, %126 : vector<8x384xf32>
    %128 = arith.addf %122, %127 : vector<8x384xf32>
    %c383_i32 = arith.constant 383 : i32
    %129 = tpu.dynamic_rotate %2 by %c383_i32 dim 1 : vector<4x384xf32>, i32 -> vector<4x384xf32>
    %130 = vector.extract_strided_slice %3 {offsets = [0, 5], sizes = [8, 1], strides = [1, 1]} : vector<8x36xf32> to vector<8x1xf32>
    %131 = vector.extract_strided_slice %129 {offsets = [0, 0], sizes = [1, 384], strides = [1, 1]} : vector<4x384xf32> to vector<1x384xf32>
    %132 = vector.broadcast %130 : vector<8x1xf32> to vector<8x384xf32>
    %133 = vector.broadcast %131 : vector<1x384xf32> to vector<8x384xf32>
    %134 = arith.mulf %132, %133 : vector<8x384xf32>
    %135 = arith.addf %128, %134 : vector<8x384xf32>
    %136 = vector.extract_strided_slice %3 {offsets = [0, 14], sizes = [8, 1], strides = [1, 1]} : vector<8x36xf32> to vector<8x1xf32>
    %137 = vector.extract_strided_slice %129 {offsets = [1, 0], sizes = [1, 384], strides = [1, 1]} : vector<4x384xf32> to vector<1x384xf32>
    %138 = vector.broadcast %136 : vector<8x1xf32> to vector<8x384xf32>
    %139 = vector.broadcast %137 : vector<1x384xf32> to vector<8x384xf32>
    %140 = arith.mulf %138, %139 : vector<8x384xf32>
    %141 = arith.addf %135, %140 : vector<8x384xf32>
    %142 = vector.extract_strided_slice %3 {offsets = [0, 23], sizes = [8, 1], strides = [1, 1]} : vector<8x36xf32> to vector<8x1xf32>
    %143 = vector.extract_strided_slice %129 {offsets = [2, 0], sizes = [1, 384], strides = [1, 1]} : vector<4x384xf32> to vector<1x384xf32>
    %144 = vector.broadcast %142 : vector<8x1xf32> to vector<8x384xf32>
    %145 = vector.broadcast %143 : vector<1x384xf32> to vector<8x384xf32>
    %146 = arith.mulf %144, %145 : vector<8x384xf32>
    %147 = arith.addf %141, %146 : vector<8x384xf32>
    %148 = vector.extract_strided_slice %3 {offsets = [0, 32], sizes = [8, 1], strides = [1, 1]} : vector<8x36xf32> to vector<8x1xf32>
    %149 = vector.extract_strided_slice %129 {offsets = [3, 0], sizes = [1, 384], strides = [1, 1]} : vector<4x384xf32> to vector<1x384xf32>
    %150 = vector.broadcast %148 : vector<8x1xf32> to vector<8x384xf32>
    %151 = vector.broadcast %149 : vector<1x384xf32> to vector<8x384xf32>
    %152 = arith.mulf %150, %151 : vector<8x384xf32>
    %153 = arith.addf %147, %152 : vector<8x384xf32>
    %c367_i32 = arith.constant 367 : i32
    %154 = tpu.dynamic_rotate %2 by %c367_i32 dim 1 : vector<4x384xf32>, i32 -> vector<4x384xf32>
    %155 = vector.extract_strided_slice %3 {offsets = [0, 6], sizes = [8, 1], strides = [1, 1]} : vector<8x36xf32> to vector<8x1xf32>
    %156 = vector.extract_strided_slice %154 {offsets = [0, 0], sizes = [1, 384], strides = [1, 1]} : vector<4x384xf32> to vector<1x384xf32>
    %157 = vector.broadcast %155 : vector<8x1xf32> to vector<8x384xf32>
    %158 = vector.broadcast %156 : vector<1x384xf32> to vector<8x384xf32>
    %159 = arith.mulf %157, %158 : vector<8x384xf32>
    %160 = arith.addf %153, %159 : vector<8x384xf32>
    %161 = vector.extract_strided_slice %3 {offsets = [0, 15], sizes = [8, 1], strides = [1, 1]} : vector<8x36xf32> to vector<8x1xf32>
    %162 = vector.extract_strided_slice %154 {offsets = [1, 0], sizes = [1, 384], strides = [1, 1]} : vector<4x384xf32> to vector<1x384xf32>
    %163 = vector.broadcast %161 : vector<8x1xf32> to vector<8x384xf32>
    %164 = vector.broadcast %162 : vector<1x384xf32> to vector<8x384xf32>
    %165 = arith.mulf %163, %164 : vector<8x384xf32>
    %166 = arith.addf %160, %165 : vector<8x384xf32>
    %167 = vector.extract_strided_slice %3 {offsets = [0, 24], sizes = [8, 1], strides = [1, 1]} : vector<8x36xf32> to vector<8x1xf32>
    %168 = vector.extract_strided_slice %154 {offsets = [2, 0], sizes = [1, 384], strides = [1, 1]} : vector<4x384xf32> to vector<1x384xf32>
    %169 = vector.broadcast %167 : vector<8x1xf32> to vector<8x384xf32>
    %170 = vector.broadcast %168 : vector<1x384xf32> to vector<8x384xf32>
    %171 = arith.mulf %169, %170 : vector<8x384xf32>
    %172 = arith.addf %166, %171 : vector<8x384xf32>
    %173 = vector.extract_strided_slice %3 {offsets = [0, 33], sizes = [8, 1], strides = [1, 1]} : vector<8x36xf32> to vector<8x1xf32>
    %174 = vector.extract_strided_slice %154 {offsets = [3, 0], sizes = [1, 384], strides = [1, 1]} : vector<4x384xf32> to vector<1x384xf32>
    %175 = vector.broadcast %173 : vector<8x1xf32> to vector<8x384xf32>
    %176 = vector.broadcast %174 : vector<1x384xf32> to vector<8x384xf32>
    %177 = arith.mulf %175, %176 : vector<8x384xf32>
    %178 = arith.addf %172, %177 : vector<8x384xf32>
    %c366_i32 = arith.constant 366 : i32
    %179 = tpu.dynamic_rotate %2 by %c366_i32 dim 1 : vector<4x384xf32>, i32 -> vector<4x384xf32>
    %180 = vector.extract_strided_slice %3 {offsets = [0, 7], sizes = [8, 1], strides = [1, 1]} : vector<8x36xf32> to vector<8x1xf32>
    %181 = vector.extract_strided_slice %179 {offsets = [0, 0], sizes = [1, 384], strides = [1, 1]} : vector<4x384xf32> to vector<1x384xf32>
    %182 = vector.broadcast %180 : vector<8x1xf32> to vector<8x384xf32>
    %183 = vector.broadcast %181 : vector<1x384xf32> to vector<8x384xf32>
    %184 = arith.mulf %182, %183 : vector<8x384xf32>
    %185 = arith.addf %178, %184 : vector<8x384xf32>
    %186 = vector.extract_strided_slice %3 {offsets = [0, 16], sizes = [8, 1], strides = [1, 1]} : vector<8x36xf32> to vector<8x1xf32>
    %187 = vector.extract_strided_slice %179 {offsets = [1, 0], sizes = [1, 384], strides = [1, 1]} : vector<4x384xf32> to vector<1x384xf32>
    %188 = vector.broadcast %186 : vector<8x1xf32> to vector<8x384xf32>
    %189 = vector.broadcast %187 : vector<1x384xf32> to vector<8x384xf32>
    %190 = arith.mulf %188, %189 : vector<8x384xf32>
    %191 = arith.addf %185, %190 : vector<8x384xf32>
    %192 = vector.extract_strided_slice %3 {offsets = [0, 25], sizes = [8, 1], strides = [1, 1]} : vector<8x36xf32> to vector<8x1xf32>
    %193 = vector.extract_strided_slice %179 {offsets = [2, 0], sizes = [1, 384], strides = [1, 1]} : vector<4x384xf32> to vector<1x384xf32>
    %194 = vector.broadcast %192 : vector<8x1xf32> to vector<8x384xf32>
    %195 = vector.broadcast %193 : vector<1x384xf32> to vector<8x384xf32>
    %196 = arith.mulf %194, %195 : vector<8x384xf32>
    %197 = arith.addf %191, %196 : vector<8x384xf32>
    %198 = vector.extract_strided_slice %3 {offsets = [0, 34], sizes = [8, 1], strides = [1, 1]} : vector<8x36xf32> to vector<8x1xf32>
    %199 = vector.extract_strided_slice %179 {offsets = [3, 0], sizes = [1, 384], strides = [1, 1]} : vector<4x384xf32> to vector<1x384xf32>
    %200 = vector.broadcast %198 : vector<8x1xf32> to vector<8x384xf32>
    %201 = vector.broadcast %199 : vector<1x384xf32> to vector<8x384xf32>
    %202 = arith.mulf %200, %201 : vector<8x384xf32>
    %203 = arith.addf %197, %202 : vector<8x384xf32>
    %c365_i32 = arith.constant 365 : i32
    %204 = tpu.dynamic_rotate %2 by %c365_i32 dim 1 : vector<4x384xf32>, i32 -> vector<4x384xf32>
    %205 = vector.extract_strided_slice %3 {offsets = [0, 8], sizes = [8, 1], strides = [1, 1]} : vector<8x36xf32> to vector<8x1xf32>
    %206 = vector.extract_strided_slice %204 {offsets = [0, 0], sizes = [1, 384], strides = [1, 1]} : vector<4x384xf32> to vector<1x384xf32>
    %207 = vector.broadcast %205 : vector<8x1xf32> to vector<8x384xf32>
    %208 = vector.broadcast %206 : vector<1x384xf32> to vector<8x384xf32>
    %209 = arith.mulf %207, %208 : vector<8x384xf32>
    %210 = arith.addf %203, %209 : vector<8x384xf32>
    %211 = vector.extract_strided_slice %3 {offsets = [0, 17], sizes = [8, 1], strides = [1, 1]} : vector<8x36xf32> to vector<8x1xf32>
    %212 = vector.extract_strided_slice %204 {offsets = [1, 0], sizes = [1, 384], strides = [1, 1]} : vector<4x384xf32> to vector<1x384xf32>
    %213 = vector.broadcast %211 : vector<8x1xf32> to vector<8x384xf32>
    %214 = vector.broadcast %212 : vector<1x384xf32> to vector<8x384xf32>
    %215 = arith.mulf %213, %214 : vector<8x384xf32>
    %216 = arith.addf %210, %215 : vector<8x384xf32>
    %217 = vector.extract_strided_slice %3 {offsets = [0, 26], sizes = [8, 1], strides = [1, 1]} : vector<8x36xf32> to vector<8x1xf32>
    %218 = vector.extract_strided_slice %204 {offsets = [2, 0], sizes = [1, 384], strides = [1, 1]} : vector<4x384xf32> to vector<1x384xf32>
    %219 = vector.broadcast %217 : vector<8x1xf32> to vector<8x384xf32>
    %220 = vector.broadcast %218 : vector<1x384xf32> to vector<8x384xf32>
    %221 = arith.mulf %219, %220 : vector<8x384xf32>
    %222 = arith.addf %216, %221 : vector<8x384xf32>
    %223 = vector.extract_strided_slice %3 {offsets = [0, 35], sizes = [8, 1], strides = [1, 1]} : vector<8x36xf32> to vector<8x1xf32>
    %224 = vector.extract_strided_slice %204 {offsets = [3, 0], sizes = [1, 384], strides = [1, 1]} : vector<4x384xf32> to vector<1x384xf32>
    %225 = vector.broadcast %223 : vector<8x1xf32> to vector<8x384xf32>
    %226 = vector.broadcast %224 : vector<1x384xf32> to vector<8x384xf32>
    %227 = arith.mulf %225, %226 : vector<8x384xf32>
    %228 = arith.addf %222, %227 : vector<8x384xf32>
    %c0_6 = arith.constant 0 : index
    %c0_7 = arith.constant 0 : index
    %229 = vector.load %arg5[%c0_6, %c0_7] : memref<8x1xf32, #tpu.memory_space<vmem>>, vector<8x1xf32>
    %230 = vector.broadcast %229 : vector<8x1xf32> to vector<8x384xf32>
    %231 = arith.addf %228, %230 : vector<8x384xf32>
    %232 = vector.broadcast %0 : vector<1x384xf32> to vector<8x384xf32>
    %233 = arith.mulf %231, %232 : vector<8x384xf32>
    %c0_8 = arith.constant 0 : index
    %c0_9 = arith.constant 0 : index
    %c0_10 = arith.constant 0 : index
    %234 = vector.load %arg7[%c0_8, %c0_9, %c0_10] : memref<1x8x384xf32, #tpu.memory_space<vmem>>, vector<1x8x384xf32>
    %235 = vector.shape_cast %234 : vector<1x8x384xf32> to vector<8x384xf32>
    %236 = vector.shape_cast %233 : vector<8x384xf32> to vector<1x8x384xf32>
    tpu.vector_store %arg7[%c0_8, %c0_9, %c0_10], %236 {strides = array<i32>} : memref<1x8x384xf32, #tpu.memory_space<vmem>>, vector<1x8x384xf32>,
    %cst_11 = arith.constant dense<0.000000e+00> : vector<8xf32>
    %237 = vector.multi_reduction <add>, %233, %cst_11 [1] : vector<8x384xf32> to vector<8xf32>
    %238 = vector.shape_cast %237 : vector<8xf32> to vector<8x1xf32>
    %c0_12 = arith.constant 0 : index
    %c0_13 = arith.constant 0 : index
    %c0_14 = arith.constant 0 : index
    %239 = vector.load %arg8[%c0_12, %c0_13, %c0_14] : memref<1x8x2xf32, #tpu.memory_space<vmem>>, vector<1x8x1xf32>
    %240 = vector.shape_cast %239 : vector<1x8x1xf32> to vector<8x1xf32>
    %241 = vector.shape_cast %238 : vector<8x1xf32> to vector<1x8x1xf32>
    tpu.vector_store %arg8[%c0_12, %c0_13, %c0_14], %241 {strides = array<i32>} : memref<1x8x2xf32, #tpu.memory_space<vmem>>, vector<1x8x1xf32>,
    %242 = arith.mulf %233, %233 : vector<8x384xf32>
    %cst_15 = arith.constant dense<0.000000e+00> : vector<8xf32>
    %243 = vector.multi_reduction <add>, %242, %cst_15 [1] : vector<8x384xf32> to vector<8xf32>
    %244 = vector.shape_cast %243 : vector<8xf32> to vector<8x1xf32>
    %c0_16 = arith.constant 0 : index
    %c0_17 = arith.constant 0 : index
    %c1 = arith.constant 1 : index
    %245 = vector.load %arg8[%c0_16, %c0_17, %c1] : memref<1x8x2xf32, #tpu.memory_space<vmem>>, vector<1x8x1xf32>
    %246 = vector.shape_cast %245 : vector<1x8x1xf32> to vector<8x1xf32>
    %247 = vector.shape_cast %244 : vector<8x1xf32> to vector<1x8x1xf32>
    tpu.vector_store %arg8[%c0_16, %c0_17, %c1], %247 {strides = array<i32>} : memref<1x8x2xf32, #tpu.memory_space<vmem>>, vector<1x8x1xf32>,
    return
  }
  func.func @transform_0(%arg0: i32) -> (i32, i32, i32) {
    %c0_i32 = arith.constant 0 : i32
    %c0_i32_0 = arith.constant 0 : i32
    %c0_i32_1 = arith.constant 0 : i32
    return %arg0, %c0_i32, %c0_i32_0 : i32, i32, i32
  }
  func.func @transform_1(%arg0: i32) -> (i32, i32) {
    %c0_i32 = arith.constant 0 : i32
    %c0_i32_0 = arith.constant 0 : i32
    %c0_i32_1 = arith.constant 0 : i32
    return %c0_i32, %c0_i32_0 : i32, i32
  }
  func.func @transform_2(%arg0: i32) -> (i32, i32) {
    %c0_i32 = arith.constant 0 : i32
    %c0_i32_0 = arith.constant 0 : i32
    %c0_i32_1 = arith.constant 0 : i32
    return %c0_i32, %c0_i32_0 : i32, i32
  }
  func.func @transform_3(%arg0: i32) -> (i32, i32) {
    %c0_i32 = arith.constant 0 : i32
    %c0_i32_0 = arith.constant 0 : i32
    %c0_i32_1 = arith.constant 0 : i32
    return %c0_i32, %c0_i32_0 : i32, i32
  }
  func.func @transform_4(%arg0: i32) -> (i32, i32) {
    %c0_i32 = arith.constant 0 : i32
    %c0_i32_0 = arith.constant 0 : i32
    %c0_i32_1 = arith.constant 0 : i32
    return %c0_i32, %c0_i32_0 : i32, i32
  }
  func.func @transform_5(%arg0: i32) -> (i32, i32) {
    %c0_i32 = arith.constant 0 : i32
    %c0_i32_0 = arith.constant 0 : i32
    %c0_i32_1 = arith.constant 0 : i32
    return %c0_i32, %c0_i32_0 : i32, i32
  }
  func.func @transform_6(%arg0: i32) -> (i32, i32, i32) {
    %c0_i32 = arith.constant 0 : i32
    %c0_i32_0 = arith.constant 0 : i32
    %c0_i32_1 = arith.constant 0 : i32
    return %arg0, %c0_i32, %c0_i32_0 : i32, i32, i32
  }
  func.func @transform_7(%arg0: i32) -> (i32, i32, i32) {
    %c0_i32 = arith.constant 0 : i32
    %c0_i32_0 = arith.constant 0 : i32
    %c0_i32_1 = arith.constant 0 : i32
    return %arg0, %c0_i32, %c0_i32_0 : i32, i32, i32
  }
}

module attributes {stable_mosaic.version = 11 : i64} {
  func.func @kernel(%arg0: i32, %arg1: memref<1x8x384xf32, #tpu.memory_space<vmem>>, %arg2: memref<8x1xf32, #tpu.memory_space<vmem>>, %arg3: memref<8x1xf32, #tpu.memory_space<vmem>>, %arg4: memref<8x72xf32, #tpu.memory_space<vmem>>, %arg5: memref<8x1xf32, #tpu.memory_space<vmem>>, %arg6: memref<1x384xf32, #tpu.memory_space<vmem>>, %arg7: memref<1x8x384xf32, #tpu.memory_space<vmem>>, %arg8: memref<1x8x2xf32, #tpu.memory_space<vmem>>) attributes {dimension_semantics = [#tpu.dimension_semantics<parallel>], iteration_bounds = array<i64: 2>, scalar_prefetch = 0 : i64, scratch_operands = 0 : i64, tpu.core_type = #tpu.core_type<tc>, window_params = [{transform_indices = @transform_0, window_bounds = array<i64: 1, 8, 384>}, {pipeline_mode = #tpu.pipeline_mode<synchronous>, transform_indices = @transform_1, window_bounds = array<i64: 8, 1>}, {pipeline_mode = #tpu.pipeline_mode<synchronous>, transform_indices = @transform_2, window_bounds = array<i64: 8, 1>}, {pipeline_mode = #tpu.pipeline_mode<synchronous>, transform_indices = @transform_3, window_bounds = array<i64: 8, 72>}, {pipeline_mode = #tpu.pipeline_mode<synchronous>, transform_indices = @transform_4, window_bounds = array<i64: 8, 1>}, {pipeline_mode = #tpu.pipeline_mode<synchronous>, transform_indices = @transform_5, window_bounds = array<i64: 1, 384>}, {transform_indices = @transform_6, window_bounds = array<i64: 1, 8, 384>}, {transform_indices = @transform_7, window_bounds = array<i64: 1, 8, 2>}]} {
    %c0 = arith.constant 0 : index
    %c0_0 = arith.constant 0 : index
    %0 = vector.load %arg6[%c0, %c0_0] : memref<1x384xf32, #tpu.memory_space<vmem>>, vector<1x384xf32>
    %c0_1 = arith.constant 0 : index
    %c0_2 = arith.constant 0 : index
    %c0_3 = arith.constant 0 : index
    %1 = vector.load %arg1[%c0_1, %c0_2, %c0_3] : memref<1x8x384xf32, #tpu.memory_space<vmem>>, vector<1x8x384xf32>
    %2 = vector.shape_cast %1 : vector<1x8x384xf32> to vector<8x384xf32>
    %c0_4 = arith.constant 0 : index
    %c0_5 = arith.constant 0 : index
    %3 = vector.load %arg2[%c0_4, %c0_5] : memref<8x1xf32, #tpu.memory_space<vmem>>, vector<8x1xf32>
    %4 = vector.broadcast %3 : vector<8x1xf32> to vector<8x384xf32>
    %5 = arith.mulf %2, %4 : vector<8x384xf32>
    %c0_6 = arith.constant 0 : index
    %c0_7 = arith.constant 0 : index
    %6 = vector.load %arg3[%c0_6, %c0_7] : memref<8x1xf32, #tpu.memory_space<vmem>>, vector<8x1xf32>
    %7 = vector.broadcast %6 : vector<8x1xf32> to vector<8x384xf32>
    %8 = arith.addf %5, %7 : vector<8x384xf32>
    %cst = arith.constant 0.000000e+00 : f32
    %9 = vector.broadcast %cst : f32 to vector<8x384xf32>
    %10 = arith.maximumf %8, %9 : vector<8x384xf32>
    %11 = vector.broadcast %0 : vector<1x384xf32> to vector<8x384xf32>
    %12 = arith.mulf %10, %11 : vector<8x384xf32>
    %c0_8 = arith.constant 0 : index
    %c0_9 = arith.constant 0 : index
    %13 = vector.load %arg4[%c0_8, %c0_9] : memref<8x72xf32, #tpu.memory_space<vmem>>, vector<8x72xf32>
    %cst_10 = arith.constant 0.000000e+00 : f32
    %14 = vector.broadcast %cst_10 : f32 to vector<8x384xf32>
    %c19_i32 = arith.constant 19 : i32
    %15 = tpu.dynamic_rotate %12 by %c19_i32 dim 1 : vector<8x384xf32>, i32 -> vector<8x384xf32>
    %16 = vector.extract_strided_slice %13 {offsets = [0, 0], sizes = [8, 1], strides = [1, 1]} : vector<8x72xf32> to vector<8x1xf32>
    %17 = vector.extract_strided_slice %15 {offsets = [0, 0], sizes = [1, 384], strides = [1, 1]} : vector<8x384xf32> to vector<1x384xf32>
    %18 = vector.broadcast %16 : vector<8x1xf32> to vector<8x384xf32>
    %19 = vector.broadcast %17 : vector<1x384xf32> to vector<8x384xf32>
    %20 = arith.mulf %18, %19 : vector<8x384xf32>
    %21 = arith.addf %14, %20 : vector<8x384xf32>
    %22 = vector.extract_strided_slice %13 {offsets = [0, 9], sizes = [8, 1], strides = [1, 1]} : vector<8x72xf32> to vector<8x1xf32>
    %23 = vector.extract_strided_slice %15 {offsets = [1, 0], sizes = [1, 384], strides = [1, 1]} : vector<8x384xf32> to vector<1x384xf32>
    %24 = vector.broadcast %22 : vector<8x1xf32> to vector<8x384xf32>
    %25 = vector.broadcast %23 : vector<1x384xf32> to vector<8x384xf32>
    %26 = arith.mulf %24, %25 : vector<8x384xf32>
    %27 = arith.addf %21, %26 : vector<8x384xf32>
    %28 = vector.extract_strided_slice %13 {offsets = [0, 18], sizes = [8, 1], strides = [1, 1]} : vector<8x72xf32> to vector<8x1xf32>
    %29 = vector.extract_strided_slice %15 {offsets = [2, 0], sizes = [1, 384], strides = [1, 1]} : vector<8x384xf32> to vector<1x384xf32>
    %30 = vector.broadcast %28 : vector<8x1xf32> to vector<8x384xf32>
    %31 = vector.broadcast %29 : vector<1x384xf32> to vector<8x384xf32>
    %32 = arith.mulf %30, %31 : vector<8x384xf32>
    %33 = arith.addf %27, %32 : vector<8x384xf32>
    %34 = vector.extract_strided_slice %13 {offsets = [0, 27], sizes = [8, 1], strides = [1, 1]} : vector<8x72xf32> to vector<8x1xf32>
    %35 = vector.extract_strided_slice %15 {offsets = [3, 0], sizes = [1, 384], strides = [1, 1]} : vector<8x384xf32> to vector<1x384xf32>
    %36 = vector.broadcast %34 : vector<8x1xf32> to vector<8x384xf32>
    %37 = vector.broadcast %35 : vector<1x384xf32> to vector<8x384xf32>
    %38 = arith.mulf %36, %37 : vector<8x384xf32>
    %39 = arith.addf %33, %38 : vector<8x384xf32>
    %40 = vector.extract_strided_slice %13 {offsets = [0, 36], sizes = [8, 1], strides = [1, 1]} : vector<8x72xf32> to vector<8x1xf32>
    %41 = vector.extract_strided_slice %15 {offsets = [4, 0], sizes = [1, 384], strides = [1, 1]} : vector<8x384xf32> to vector<1x384xf32>
    %42 = vector.broadcast %40 : vector<8x1xf32> to vector<8x384xf32>
    %43 = vector.broadcast %41 : vector<1x384xf32> to vector<8x384xf32>
    %44 = arith.mulf %42, %43 : vector<8x384xf32>
    %45 = arith.addf %39, %44 : vector<8x384xf32>
    %46 = vector.extract_strided_slice %13 {offsets = [0, 45], sizes = [8, 1], strides = [1, 1]} : vector<8x72xf32> to vector<8x1xf32>
    %47 = vector.extract_strided_slice %15 {offsets = [5, 0], sizes = [1, 384], strides = [1, 1]} : vector<8x384xf32> to vector<1x384xf32>
    %48 = vector.broadcast %46 : vector<8x1xf32> to vector<8x384xf32>
    %49 = vector.broadcast %47 : vector<1x384xf32> to vector<8x384xf32>
    %50 = arith.mulf %48, %49 : vector<8x384xf32>
    %51 = arith.addf %45, %50 : vector<8x384xf32>
    %52 = vector.extract_strided_slice %13 {offsets = [0, 54], sizes = [8, 1], strides = [1, 1]} : vector<8x72xf32> to vector<8x1xf32>
    %53 = vector.extract_strided_slice %15 {offsets = [6, 0], sizes = [1, 384], strides = [1, 1]} : vector<8x384xf32> to vector<1x384xf32>
    %54 = vector.broadcast %52 : vector<8x1xf32> to vector<8x384xf32>
    %55 = vector.broadcast %53 : vector<1x384xf32> to vector<8x384xf32>
    %56 = arith.mulf %54, %55 : vector<8x384xf32>
    %57 = arith.addf %51, %56 : vector<8x384xf32>
    %58 = vector.extract_strided_slice %13 {offsets = [0, 63], sizes = [8, 1], strides = [1, 1]} : vector<8x72xf32> to vector<8x1xf32>
    %59 = vector.extract_strided_slice %15 {offsets = [7, 0], sizes = [1, 384], strides = [1, 1]} : vector<8x384xf32> to vector<1x384xf32>
    %60 = vector.broadcast %58 : vector<8x1xf32> to vector<8x384xf32>
    %61 = vector.broadcast %59 : vector<1x384xf32> to vector<8x384xf32>
    %62 = arith.mulf %60, %61 : vector<8x384xf32>
    %63 = arith.addf %57, %62 : vector<8x384xf32>
    %c18_i32 = arith.constant 18 : i32
    %64 = tpu.dynamic_rotate %12 by %c18_i32 dim 1 : vector<8x384xf32>, i32 -> vector<8x384xf32>
    %65 = vector.extract_strided_slice %13 {offsets = [0, 1], sizes = [8, 1], strides = [1, 1]} : vector<8x72xf32> to vector<8x1xf32>
    %66 = vector.extract_strided_slice %64 {offsets = [0, 0], sizes = [1, 384], strides = [1, 1]} : vector<8x384xf32> to vector<1x384xf32>
    %67 = vector.broadcast %65 : vector<8x1xf32> to vector<8x384xf32>
    %68 = vector.broadcast %66 : vector<1x384xf32> to vector<8x384xf32>
    %69 = arith.mulf %67, %68 : vector<8x384xf32>
    %70 = arith.addf %63, %69 : vector<8x384xf32>
    %71 = vector.extract_strided_slice %13 {offsets = [0, 10], sizes = [8, 1], strides = [1, 1]} : vector<8x72xf32> to vector<8x1xf32>
    %72 = vector.extract_strided_slice %64 {offsets = [1, 0], sizes = [1, 384], strides = [1, 1]} : vector<8x384xf32> to vector<1x384xf32>
    %73 = vector.broadcast %71 : vector<8x1xf32> to vector<8x384xf32>
    %74 = vector.broadcast %72 : vector<1x384xf32> to vector<8x384xf32>
    %75 = arith.mulf %73, %74 : vector<8x384xf32>
    %76 = arith.addf %70, %75 : vector<8x384xf32>
    %77 = vector.extract_strided_slice %13 {offsets = [0, 19], sizes = [8, 1], strides = [1, 1]} : vector<8x72xf32> to vector<8x1xf32>
    %78 = vector.extract_strided_slice %64 {offsets = [2, 0], sizes = [1, 384], strides = [1, 1]} : vector<8x384xf32> to vector<1x384xf32>
    %79 = vector.broadcast %77 : vector<8x1xf32> to vector<8x384xf32>
    %80 = vector.broadcast %78 : vector<1x384xf32> to vector<8x384xf32>
    %81 = arith.mulf %79, %80 : vector<8x384xf32>
    %82 = arith.addf %76, %81 : vector<8x384xf32>
    %83 = vector.extract_strided_slice %13 {offsets = [0, 28], sizes = [8, 1], strides = [1, 1]} : vector<8x72xf32> to vector<8x1xf32>
    %84 = vector.extract_strided_slice %64 {offsets = [3, 0], sizes = [1, 384], strides = [1, 1]} : vector<8x384xf32> to vector<1x384xf32>
    %85 = vector.broadcast %83 : vector<8x1xf32> to vector<8x384xf32>
    %86 = vector.broadcast %84 : vector<1x384xf32> to vector<8x384xf32>
    %87 = arith.mulf %85, %86 : vector<8x384xf32>
    %88 = arith.addf %82, %87 : vector<8x384xf32>
    %89 = vector.extract_strided_slice %13 {offsets = [0, 37], sizes = [8, 1], strides = [1, 1]} : vector<8x72xf32> to vector<8x1xf32>
    %90 = vector.extract_strided_slice %64 {offsets = [4, 0], sizes = [1, 384], strides = [1, 1]} : vector<8x384xf32> to vector<1x384xf32>
    %91 = vector.broadcast %89 : vector<8x1xf32> to vector<8x384xf32>
    %92 = vector.broadcast %90 : vector<1x384xf32> to vector<8x384xf32>
    %93 = arith.mulf %91, %92 : vector<8x384xf32>
    %94 = arith.addf %88, %93 : vector<8x384xf32>
    %95 = vector.extract_strided_slice %13 {offsets = [0, 46], sizes = [8, 1], strides = [1, 1]} : vector<8x72xf32> to vector<8x1xf32>
    %96 = vector.extract_strided_slice %64 {offsets = [5, 0], sizes = [1, 384], strides = [1, 1]} : vector<8x384xf32> to vector<1x384xf32>
    %97 = vector.broadcast %95 : vector<8x1xf32> to vector<8x384xf32>
    %98 = vector.broadcast %96 : vector<1x384xf32> to vector<8x384xf32>
    %99 = arith.mulf %97, %98 : vector<8x384xf32>
    %100 = arith.addf %94, %99 : vector<8x384xf32>
    %101 = vector.extract_strided_slice %13 {offsets = [0, 55], sizes = [8, 1], strides = [1, 1]} : vector<8x72xf32> to vector<8x1xf32>
    %102 = vector.extract_strided_slice %64 {offsets = [6, 0], sizes = [1, 384], strides = [1, 1]} : vector<8x384xf32> to vector<1x384xf32>
    %103 = vector.broadcast %101 : vector<8x1xf32> to vector<8x384xf32>
    %104 = vector.broadcast %102 : vector<1x384xf32> to vector<8x384xf32>
    %105 = arith.mulf %103, %104 : vector<8x384xf32>
    %106 = arith.addf %100, %105 : vector<8x384xf32>
    %107 = vector.extract_strided_slice %13 {offsets = [0, 64], sizes = [8, 1], strides = [1, 1]} : vector<8x72xf32> to vector<8x1xf32>
    %108 = vector.extract_strided_slice %64 {offsets = [7, 0], sizes = [1, 384], strides = [1, 1]} : vector<8x384xf32> to vector<1x384xf32>
    %109 = vector.broadcast %107 : vector<8x1xf32> to vector<8x384xf32>
    %110 = vector.broadcast %108 : vector<1x384xf32> to vector<8x384xf32>
    %111 = arith.mulf %109, %110 : vector<8x384xf32>
    %112 = arith.addf %106, %111 : vector<8x384xf32>
    %c17_i32 = arith.constant 17 : i32
    %113 = tpu.dynamic_rotate %12 by %c17_i32 dim 1 : vector<8x384xf32>, i32 -> vector<8x384xf32>
    %114 = vector.extract_strided_slice %13 {offsets = [0, 2], sizes = [8, 1], strides = [1, 1]} : vector<8x72xf32> to vector<8x1xf32>
    %115 = vector.extract_strided_slice %113 {offsets = [0, 0], sizes = [1, 384], strides = [1, 1]} : vector<8x384xf32> to vector<1x384xf32>
    %116 = vector.broadcast %114 : vector<8x1xf32> to vector<8x384xf32>
    %117 = vector.broadcast %115 : vector<1x384xf32> to vector<8x384xf32>
    %118 = arith.mulf %116, %117 : vector<8x384xf32>
    %119 = arith.addf %112, %118 : vector<8x384xf32>
    %120 = vector.extract_strided_slice %13 {offsets = [0, 11], sizes = [8, 1], strides = [1, 1]} : vector<8x72xf32> to vector<8x1xf32>
    %121 = vector.extract_strided_slice %113 {offsets = [1, 0], sizes = [1, 384], strides = [1, 1]} : vector<8x384xf32> to vector<1x384xf32>
    %122 = vector.broadcast %120 : vector<8x1xf32> to vector<8x384xf32>
    %123 = vector.broadcast %121 : vector<1x384xf32> to vector<8x384xf32>
    %124 = arith.mulf %122, %123 : vector<8x384xf32>
    %125 = arith.addf %119, %124 : vector<8x384xf32>
    %126 = vector.extract_strided_slice %13 {offsets = [0, 20], sizes = [8, 1], strides = [1, 1]} : vector<8x72xf32> to vector<8x1xf32>
    %127 = vector.extract_strided_slice %113 {offsets = [2, 0], sizes = [1, 384], strides = [1, 1]} : vector<8x384xf32> to vector<1x384xf32>
    %128 = vector.broadcast %126 : vector<8x1xf32> to vector<8x384xf32>
    %129 = vector.broadcast %127 : vector<1x384xf32> to vector<8x384xf32>
    %130 = arith.mulf %128, %129 : vector<8x384xf32>
    %131 = arith.addf %125, %130 : vector<8x384xf32>
    %132 = vector.extract_strided_slice %13 {offsets = [0, 29], sizes = [8, 1], strides = [1, 1]} : vector<8x72xf32> to vector<8x1xf32>
    %133 = vector.extract_strided_slice %113 {offsets = [3, 0], sizes = [1, 384], strides = [1, 1]} : vector<8x384xf32> to vector<1x384xf32>
    %134 = vector.broadcast %132 : vector<8x1xf32> to vector<8x384xf32>
    %135 = vector.broadcast %133 : vector<1x384xf32> to vector<8x384xf32>
    %136 = arith.mulf %134, %135 : vector<8x384xf32>
    %137 = arith.addf %131, %136 : vector<8x384xf32>
    %138 = vector.extract_strided_slice %13 {offsets = [0, 38], sizes = [8, 1], strides = [1, 1]} : vector<8x72xf32> to vector<8x1xf32>
    %139 = vector.extract_strided_slice %113 {offsets = [4, 0], sizes = [1, 384], strides = [1, 1]} : vector<8x384xf32> to vector<1x384xf32>
    %140 = vector.broadcast %138 : vector<8x1xf32> to vector<8x384xf32>
    %141 = vector.broadcast %139 : vector<1x384xf32> to vector<8x384xf32>
    %142 = arith.mulf %140, %141 : vector<8x384xf32>
    %143 = arith.addf %137, %142 : vector<8x384xf32>
    %144 = vector.extract_strided_slice %13 {offsets = [0, 47], sizes = [8, 1], strides = [1, 1]} : vector<8x72xf32> to vector<8x1xf32>
    %145 = vector.extract_strided_slice %113 {offsets = [5, 0], sizes = [1, 384], strides = [1, 1]} : vector<8x384xf32> to vector<1x384xf32>
    %146 = vector.broadcast %144 : vector<8x1xf32> to vector<8x384xf32>
    %147 = vector.broadcast %145 : vector<1x384xf32> to vector<8x384xf32>
    %148 = arith.mulf %146, %147 : vector<8x384xf32>
    %149 = arith.addf %143, %148 : vector<8x384xf32>
    %150 = vector.extract_strided_slice %13 {offsets = [0, 56], sizes = [8, 1], strides = [1, 1]} : vector<8x72xf32> to vector<8x1xf32>
    %151 = vector.extract_strided_slice %113 {offsets = [6, 0], sizes = [1, 384], strides = [1, 1]} : vector<8x384xf32> to vector<1x384xf32>
    %152 = vector.broadcast %150 : vector<8x1xf32> to vector<8x384xf32>
    %153 = vector.broadcast %151 : vector<1x384xf32> to vector<8x384xf32>
    %154 = arith.mulf %152, %153 : vector<8x384xf32>
    %155 = arith.addf %149, %154 : vector<8x384xf32>
    %156 = vector.extract_strided_slice %13 {offsets = [0, 65], sizes = [8, 1], strides = [1, 1]} : vector<8x72xf32> to vector<8x1xf32>
    %157 = vector.extract_strided_slice %113 {offsets = [7, 0], sizes = [1, 384], strides = [1, 1]} : vector<8x384xf32> to vector<1x384xf32>
    %158 = vector.broadcast %156 : vector<8x1xf32> to vector<8x384xf32>
    %159 = vector.broadcast %157 : vector<1x384xf32> to vector<8x384xf32>
    %160 = arith.mulf %158, %159 : vector<8x384xf32>
    %161 = arith.addf %155, %160 : vector<8x384xf32>
    %c1_i32 = arith.constant 1 : i32
    %162 = tpu.dynamic_rotate %12 by %c1_i32 dim 1 : vector<8x384xf32>, i32 -> vector<8x384xf32>
    %163 = vector.extract_strided_slice %13 {offsets = [0, 3], sizes = [8, 1], strides = [1, 1]} : vector<8x72xf32> to vector<8x1xf32>
    %164 = vector.extract_strided_slice %162 {offsets = [0, 0], sizes = [1, 384], strides = [1, 1]} : vector<8x384xf32> to vector<1x384xf32>
    %165 = vector.broadcast %163 : vector<8x1xf32> to vector<8x384xf32>
    %166 = vector.broadcast %164 : vector<1x384xf32> to vector<8x384xf32>
    %167 = arith.mulf %165, %166 : vector<8x384xf32>
    %168 = arith.addf %161, %167 : vector<8x384xf32>
    %169 = vector.extract_strided_slice %13 {offsets = [0, 12], sizes = [8, 1], strides = [1, 1]} : vector<8x72xf32> to vector<8x1xf32>
    %170 = vector.extract_strided_slice %162 {offsets = [1, 0], sizes = [1, 384], strides = [1, 1]} : vector<8x384xf32> to vector<1x384xf32>
    %171 = vector.broadcast %169 : vector<8x1xf32> to vector<8x384xf32>
    %172 = vector.broadcast %170 : vector<1x384xf32> to vector<8x384xf32>
    %173 = arith.mulf %171, %172 : vector<8x384xf32>
    %174 = arith.addf %168, %173 : vector<8x384xf32>
    %175 = vector.extract_strided_slice %13 {offsets = [0, 21], sizes = [8, 1], strides = [1, 1]} : vector<8x72xf32> to vector<8x1xf32>
    %176 = vector.extract_strided_slice %162 {offsets = [2, 0], sizes = [1, 384], strides = [1, 1]} : vector<8x384xf32> to vector<1x384xf32>
    %177 = vector.broadcast %175 : vector<8x1xf32> to vector<8x384xf32>
    %178 = vector.broadcast %176 : vector<1x384xf32> to vector<8x384xf32>
    %179 = arith.mulf %177, %178 : vector<8x384xf32>
    %180 = arith.addf %174, %179 : vector<8x384xf32>
    %181 = vector.extract_strided_slice %13 {offsets = [0, 30], sizes = [8, 1], strides = [1, 1]} : vector<8x72xf32> to vector<8x1xf32>
    %182 = vector.extract_strided_slice %162 {offsets = [3, 0], sizes = [1, 384], strides = [1, 1]} : vector<8x384xf32> to vector<1x384xf32>
    %183 = vector.broadcast %181 : vector<8x1xf32> to vector<8x384xf32>
    %184 = vector.broadcast %182 : vector<1x384xf32> to vector<8x384xf32>
    %185 = arith.mulf %183, %184 : vector<8x384xf32>
    %186 = arith.addf %180, %185 : vector<8x384xf32>
    %187 = vector.extract_strided_slice %13 {offsets = [0, 39], sizes = [8, 1], strides = [1, 1]} : vector<8x72xf32> to vector<8x1xf32>
    %188 = vector.extract_strided_slice %162 {offsets = [4, 0], sizes = [1, 384], strides = [1, 1]} : vector<8x384xf32> to vector<1x384xf32>
    %189 = vector.broadcast %187 : vector<8x1xf32> to vector<8x384xf32>
    %190 = vector.broadcast %188 : vector<1x384xf32> to vector<8x384xf32>
    %191 = arith.mulf %189, %190 : vector<8x384xf32>
    %192 = arith.addf %186, %191 : vector<8x384xf32>
    %193 = vector.extract_strided_slice %13 {offsets = [0, 48], sizes = [8, 1], strides = [1, 1]} : vector<8x72xf32> to vector<8x1xf32>
    %194 = vector.extract_strided_slice %162 {offsets = [5, 0], sizes = [1, 384], strides = [1, 1]} : vector<8x384xf32> to vector<1x384xf32>
    %195 = vector.broadcast %193 : vector<8x1xf32> to vector<8x384xf32>
    %196 = vector.broadcast %194 : vector<1x384xf32> to vector<8x384xf32>
    %197 = arith.mulf %195, %196 : vector<8x384xf32>
    %198 = arith.addf %192, %197 : vector<8x384xf32>
    %199 = vector.extract_strided_slice %13 {offsets = [0, 57], sizes = [8, 1], strides = [1, 1]} : vector<8x72xf32> to vector<8x1xf32>
    %200 = vector.extract_strided_slice %162 {offsets = [6, 0], sizes = [1, 384], strides = [1, 1]} : vector<8x384xf32> to vector<1x384xf32>
    %201 = vector.broadcast %199 : vector<8x1xf32> to vector<8x384xf32>
    %202 = vector.broadcast %200 : vector<1x384xf32> to vector<8x384xf32>
    %203 = arith.mulf %201, %202 : vector<8x384xf32>
    %204 = arith.addf %198, %203 : vector<8x384xf32>
    %205 = vector.extract_strided_slice %13 {offsets = [0, 66], sizes = [8, 1], strides = [1, 1]} : vector<8x72xf32> to vector<8x1xf32>
    %206 = vector.extract_strided_slice %162 {offsets = [7, 0], sizes = [1, 384], strides = [1, 1]} : vector<8x384xf32> to vector<1x384xf32>
    %207 = vector.broadcast %205 : vector<8x1xf32> to vector<8x384xf32>
    %208 = vector.broadcast %206 : vector<1x384xf32> to vector<8x384xf32>
    %209 = arith.mulf %207, %208 : vector<8x384xf32>
    %210 = arith.addf %204, %209 : vector<8x384xf32>
    %211 = vector.extract_strided_slice %13 {offsets = [0, 4], sizes = [8, 1], strides = [1, 1]} : vector<8x72xf32> to vector<8x1xf32>
    %212 = vector.extract_strided_slice %12 {offsets = [0, 0], sizes = [1, 384], strides = [1, 1]} : vector<8x384xf32> to vector<1x384xf32>
    %213 = vector.broadcast %211 : vector<8x1xf32> to vector<8x384xf32>
    %214 = vector.broadcast %212 : vector<1x384xf32> to vector<8x384xf32>
    %215 = arith.mulf %213, %214 : vector<8x384xf32>
    %216 = arith.addf %210, %215 : vector<8x384xf32>
    %217 = vector.extract_strided_slice %13 {offsets = [0, 13], sizes = [8, 1], strides = [1, 1]} : vector<8x72xf32> to vector<8x1xf32>
    %218 = vector.extract_strided_slice %12 {offsets = [1, 0], sizes = [1, 384], strides = [1, 1]} : vector<8x384xf32> to vector<1x384xf32>
    %219 = vector.broadcast %217 : vector<8x1xf32> to vector<8x384xf32>
    %220 = vector.broadcast %218 : vector<1x384xf32> to vector<8x384xf32>
    %221 = arith.mulf %219, %220 : vector<8x384xf32>
    %222 = arith.addf %216, %221 : vector<8x384xf32>
    %223 = vector.extract_strided_slice %13 {offsets = [0, 22], sizes = [8, 1], strides = [1, 1]} : vector<8x72xf32> to vector<8x1xf32>
    %224 = vector.extract_strided_slice %12 {offsets = [2, 0], sizes = [1, 384], strides = [1, 1]} : vector<8x384xf32> to vector<1x384xf32>
    %225 = vector.broadcast %223 : vector<8x1xf32> to vector<8x384xf32>
    %226 = vector.broadcast %224 : vector<1x384xf32> to vector<8x384xf32>
    %227 = arith.mulf %225, %226 : vector<8x384xf32>
    %228 = arith.addf %222, %227 : vector<8x384xf32>
    %229 = vector.extract_strided_slice %13 {offsets = [0, 31], sizes = [8, 1], strides = [1, 1]} : vector<8x72xf32> to vector<8x1xf32>
    %230 = vector.extract_strided_slice %12 {offsets = [3, 0], sizes = [1, 384], strides = [1, 1]} : vector<8x384xf32> to vector<1x384xf32>
    %231 = vector.broadcast %229 : vector<8x1xf32> to vector<8x384xf32>
    %232 = vector.broadcast %230 : vector<1x384xf32> to vector<8x384xf32>
    %233 = arith.mulf %231, %232 : vector<8x384xf32>
    %234 = arith.addf %228, %233 : vector<8x384xf32>
    %235 = vector.extract_strided_slice %13 {offsets = [0, 40], sizes = [8, 1], strides = [1, 1]} : vector<8x72xf32> to vector<8x1xf32>
    %236 = vector.extract_strided_slice %12 {offsets = [4, 0], sizes = [1, 384], strides = [1, 1]} : vector<8x384xf32> to vector<1x384xf32>
    %237 = vector.broadcast %235 : vector<8x1xf32> to vector<8x384xf32>
    %238 = vector.broadcast %236 : vector<1x384xf32> to vector<8x384xf32>
    %239 = arith.mulf %237, %238 : vector<8x384xf32>
    %240 = arith.addf %234, %239 : vector<8x384xf32>
    %241 = vector.extract_strided_slice %13 {offsets = [0, 49], sizes = [8, 1], strides = [1, 1]} : vector<8x72xf32> to vector<8x1xf32>
    %242 = vector.extract_strided_slice %12 {offsets = [5, 0], sizes = [1, 384], strides = [1, 1]} : vector<8x384xf32> to vector<1x384xf32>
    %243 = vector.broadcast %241 : vector<8x1xf32> to vector<8x384xf32>
    %244 = vector.broadcast %242 : vector<1x384xf32> to vector<8x384xf32>
    %245 = arith.mulf %243, %244 : vector<8x384xf32>
    %246 = arith.addf %240, %245 : vector<8x384xf32>
    %247 = vector.extract_strided_slice %13 {offsets = [0, 58], sizes = [8, 1], strides = [1, 1]} : vector<8x72xf32> to vector<8x1xf32>
    %248 = vector.extract_strided_slice %12 {offsets = [6, 0], sizes = [1, 384], strides = [1, 1]} : vector<8x384xf32> to vector<1x384xf32>
    %249 = vector.broadcast %247 : vector<8x1xf32> to vector<8x384xf32>
    %250 = vector.broadcast %248 : vector<1x384xf32> to vector<8x384xf32>
    %251 = arith.mulf %249, %250 : vector<8x384xf32>
    %252 = arith.addf %246, %251 : vector<8x384xf32>
    %253 = vector.extract_strided_slice %13 {offsets = [0, 67], sizes = [8, 1], strides = [1, 1]} : vector<8x72xf32> to vector<8x1xf32>
    %254 = vector.extract_strided_slice %12 {offsets = [7, 0], sizes = [1, 384], strides = [1, 1]} : vector<8x384xf32> to vector<1x384xf32>
    %255 = vector.broadcast %253 : vector<8x1xf32> to vector<8x384xf32>
    %256 = vector.broadcast %254 : vector<1x384xf32> to vector<8x384xf32>
    %257 = arith.mulf %255, %256 : vector<8x384xf32>
    %258 = arith.addf %252, %257 : vector<8x384xf32>
    %c383_i32 = arith.constant 383 : i32
    %259 = tpu.dynamic_rotate %12 by %c383_i32 dim 1 : vector<8x384xf32>, i32 -> vector<8x384xf32>
    %260 = vector.extract_strided_slice %13 {offsets = [0, 5], sizes = [8, 1], strides = [1, 1]} : vector<8x72xf32> to vector<8x1xf32>
    %261 = vector.extract_strided_slice %259 {offsets = [0, 0], sizes = [1, 384], strides = [1, 1]} : vector<8x384xf32> to vector<1x384xf32>
    %262 = vector.broadcast %260 : vector<8x1xf32> to vector<8x384xf32>
    %263 = vector.broadcast %261 : vector<1x384xf32> to vector<8x384xf32>
    %264 = arith.mulf %262, %263 : vector<8x384xf32>
    %265 = arith.addf %258, %264 : vector<8x384xf32>
    %266 = vector.extract_strided_slice %13 {offsets = [0, 14], sizes = [8, 1], strides = [1, 1]} : vector<8x72xf32> to vector<8x1xf32>
    %267 = vector.extract_strided_slice %259 {offsets = [1, 0], sizes = [1, 384], strides = [1, 1]} : vector<8x384xf32> to vector<1x384xf32>
    %268 = vector.broadcast %266 : vector<8x1xf32> to vector<8x384xf32>
    %269 = vector.broadcast %267 : vector<1x384xf32> to vector<8x384xf32>
    %270 = arith.mulf %268, %269 : vector<8x384xf32>
    %271 = arith.addf %265, %270 : vector<8x384xf32>
    %272 = vector.extract_strided_slice %13 {offsets = [0, 23], sizes = [8, 1], strides = [1, 1]} : vector<8x72xf32> to vector<8x1xf32>
    %273 = vector.extract_strided_slice %259 {offsets = [2, 0], sizes = [1, 384], strides = [1, 1]} : vector<8x384xf32> to vector<1x384xf32>
    %274 = vector.broadcast %272 : vector<8x1xf32> to vector<8x384xf32>
    %275 = vector.broadcast %273 : vector<1x384xf32> to vector<8x384xf32>
    %276 = arith.mulf %274, %275 : vector<8x384xf32>
    %277 = arith.addf %271, %276 : vector<8x384xf32>
    %278 = vector.extract_strided_slice %13 {offsets = [0, 32], sizes = [8, 1], strides = [1, 1]} : vector<8x72xf32> to vector<8x1xf32>
    %279 = vector.extract_strided_slice %259 {offsets = [3, 0], sizes = [1, 384], strides = [1, 1]} : vector<8x384xf32> to vector<1x384xf32>
    %280 = vector.broadcast %278 : vector<8x1xf32> to vector<8x384xf32>
    %281 = vector.broadcast %279 : vector<1x384xf32> to vector<8x384xf32>
    %282 = arith.mulf %280, %281 : vector<8x384xf32>
    %283 = arith.addf %277, %282 : vector<8x384xf32>
    %284 = vector.extract_strided_slice %13 {offsets = [0, 41], sizes = [8, 1], strides = [1, 1]} : vector<8x72xf32> to vector<8x1xf32>
    %285 = vector.extract_strided_slice %259 {offsets = [4, 0], sizes = [1, 384], strides = [1, 1]} : vector<8x384xf32> to vector<1x384xf32>
    %286 = vector.broadcast %284 : vector<8x1xf32> to vector<8x384xf32>
    %287 = vector.broadcast %285 : vector<1x384xf32> to vector<8x384xf32>
    %288 = arith.mulf %286, %287 : vector<8x384xf32>
    %289 = arith.addf %283, %288 : vector<8x384xf32>
    %290 = vector.extract_strided_slice %13 {offsets = [0, 50], sizes = [8, 1], strides = [1, 1]} : vector<8x72xf32> to vector<8x1xf32>
    %291 = vector.extract_strided_slice %259 {offsets = [5, 0], sizes = [1, 384], strides = [1, 1]} : vector<8x384xf32> to vector<1x384xf32>
    %292 = vector.broadcast %290 : vector<8x1xf32> to vector<8x384xf32>
    %293 = vector.broadcast %291 : vector<1x384xf32> to vector<8x384xf32>
    %294 = arith.mulf %292, %293 : vector<8x384xf32>
    %295 = arith.addf %289, %294 : vector<8x384xf32>
    %296 = vector.extract_strided_slice %13 {offsets = [0, 59], sizes = [8, 1], strides = [1, 1]} : vector<8x72xf32> to vector<8x1xf32>
    %297 = vector.extract_strided_slice %259 {offsets = [6, 0], sizes = [1, 384], strides = [1, 1]} : vector<8x384xf32> to vector<1x384xf32>
    %298 = vector.broadcast %296 : vector<8x1xf32> to vector<8x384xf32>
    %299 = vector.broadcast %297 : vector<1x384xf32> to vector<8x384xf32>
    %300 = arith.mulf %298, %299 : vector<8x384xf32>
    %301 = arith.addf %295, %300 : vector<8x384xf32>
    %302 = vector.extract_strided_slice %13 {offsets = [0, 68], sizes = [8, 1], strides = [1, 1]} : vector<8x72xf32> to vector<8x1xf32>
    %303 = vector.extract_strided_slice %259 {offsets = [7, 0], sizes = [1, 384], strides = [1, 1]} : vector<8x384xf32> to vector<1x384xf32>
    %304 = vector.broadcast %302 : vector<8x1xf32> to vector<8x384xf32>
    %305 = vector.broadcast %303 : vector<1x384xf32> to vector<8x384xf32>
    %306 = arith.mulf %304, %305 : vector<8x384xf32>
    %307 = arith.addf %301, %306 : vector<8x384xf32>
    %c367_i32 = arith.constant 367 : i32
    %308 = tpu.dynamic_rotate %12 by %c367_i32 dim 1 : vector<8x384xf32>, i32 -> vector<8x384xf32>
    %309 = vector.extract_strided_slice %13 {offsets = [0, 6], sizes = [8, 1], strides = [1, 1]} : vector<8x72xf32> to vector<8x1xf32>
    %310 = vector.extract_strided_slice %308 {offsets = [0, 0], sizes = [1, 384], strides = [1, 1]} : vector<8x384xf32> to vector<1x384xf32>
    %311 = vector.broadcast %309 : vector<8x1xf32> to vector<8x384xf32>
    %312 = vector.broadcast %310 : vector<1x384xf32> to vector<8x384xf32>
    %313 = arith.mulf %311, %312 : vector<8x384xf32>
    %314 = arith.addf %307, %313 : vector<8x384xf32>
    %315 = vector.extract_strided_slice %13 {offsets = [0, 15], sizes = [8, 1], strides = [1, 1]} : vector<8x72xf32> to vector<8x1xf32>
    %316 = vector.extract_strided_slice %308 {offsets = [1, 0], sizes = [1, 384], strides = [1, 1]} : vector<8x384xf32> to vector<1x384xf32>
    %317 = vector.broadcast %315 : vector<8x1xf32> to vector<8x384xf32>
    %318 = vector.broadcast %316 : vector<1x384xf32> to vector<8x384xf32>
    %319 = arith.mulf %317, %318 : vector<8x384xf32>
    %320 = arith.addf %314, %319 : vector<8x384xf32>
    %321 = vector.extract_strided_slice %13 {offsets = [0, 24], sizes = [8, 1], strides = [1, 1]} : vector<8x72xf32> to vector<8x1xf32>
    %322 = vector.extract_strided_slice %308 {offsets = [2, 0], sizes = [1, 384], strides = [1, 1]} : vector<8x384xf32> to vector<1x384xf32>
    %323 = vector.broadcast %321 : vector<8x1xf32> to vector<8x384xf32>
    %324 = vector.broadcast %322 : vector<1x384xf32> to vector<8x384xf32>
    %325 = arith.mulf %323, %324 : vector<8x384xf32>
    %326 = arith.addf %320, %325 : vector<8x384xf32>
    %327 = vector.extract_strided_slice %13 {offsets = [0, 33], sizes = [8, 1], strides = [1, 1]} : vector<8x72xf32> to vector<8x1xf32>
    %328 = vector.extract_strided_slice %308 {offsets = [3, 0], sizes = [1, 384], strides = [1, 1]} : vector<8x384xf32> to vector<1x384xf32>
    %329 = vector.broadcast %327 : vector<8x1xf32> to vector<8x384xf32>
    %330 = vector.broadcast %328 : vector<1x384xf32> to vector<8x384xf32>
    %331 = arith.mulf %329, %330 : vector<8x384xf32>
    %332 = arith.addf %326, %331 : vector<8x384xf32>
    %333 = vector.extract_strided_slice %13 {offsets = [0, 42], sizes = [8, 1], strides = [1, 1]} : vector<8x72xf32> to vector<8x1xf32>
    %334 = vector.extract_strided_slice %308 {offsets = [4, 0], sizes = [1, 384], strides = [1, 1]} : vector<8x384xf32> to vector<1x384xf32>
    %335 = vector.broadcast %333 : vector<8x1xf32> to vector<8x384xf32>
    %336 = vector.broadcast %334 : vector<1x384xf32> to vector<8x384xf32>
    %337 = arith.mulf %335, %336 : vector<8x384xf32>
    %338 = arith.addf %332, %337 : vector<8x384xf32>
    %339 = vector.extract_strided_slice %13 {offsets = [0, 51], sizes = [8, 1], strides = [1, 1]} : vector<8x72xf32> to vector<8x1xf32>
    %340 = vector.extract_strided_slice %308 {offsets = [5, 0], sizes = [1, 384], strides = [1, 1]} : vector<8x384xf32> to vector<1x384xf32>
    %341 = vector.broadcast %339 : vector<8x1xf32> to vector<8x384xf32>
    %342 = vector.broadcast %340 : vector<1x384xf32> to vector<8x384xf32>
    %343 = arith.mulf %341, %342 : vector<8x384xf32>
    %344 = arith.addf %338, %343 : vector<8x384xf32>
    %345 = vector.extract_strided_slice %13 {offsets = [0, 60], sizes = [8, 1], strides = [1, 1]} : vector<8x72xf32> to vector<8x1xf32>
    %346 = vector.extract_strided_slice %308 {offsets = [6, 0], sizes = [1, 384], strides = [1, 1]} : vector<8x384xf32> to vector<1x384xf32>
    %347 = vector.broadcast %345 : vector<8x1xf32> to vector<8x384xf32>
    %348 = vector.broadcast %346 : vector<1x384xf32> to vector<8x384xf32>
    %349 = arith.mulf %347, %348 : vector<8x384xf32>
    %350 = arith.addf %344, %349 : vector<8x384xf32>
    %351 = vector.extract_strided_slice %13 {offsets = [0, 69], sizes = [8, 1], strides = [1, 1]} : vector<8x72xf32> to vector<8x1xf32>
    %352 = vector.extract_strided_slice %308 {offsets = [7, 0], sizes = [1, 384], strides = [1, 1]} : vector<8x384xf32> to vector<1x384xf32>
    %353 = vector.broadcast %351 : vector<8x1xf32> to vector<8x384xf32>
    %354 = vector.broadcast %352 : vector<1x384xf32> to vector<8x384xf32>
    %355 = arith.mulf %353, %354 : vector<8x384xf32>
    %356 = arith.addf %350, %355 : vector<8x384xf32>
    %c366_i32 = arith.constant 366 : i32
    %357 = tpu.dynamic_rotate %12 by %c366_i32 dim 1 : vector<8x384xf32>, i32 -> vector<8x384xf32>
    %358 = vector.extract_strided_slice %13 {offsets = [0, 7], sizes = [8, 1], strides = [1, 1]} : vector<8x72xf32> to vector<8x1xf32>
    %359 = vector.extract_strided_slice %357 {offsets = [0, 0], sizes = [1, 384], strides = [1, 1]} : vector<8x384xf32> to vector<1x384xf32>
    %360 = vector.broadcast %358 : vector<8x1xf32> to vector<8x384xf32>
    %361 = vector.broadcast %359 : vector<1x384xf32> to vector<8x384xf32>
    %362 = arith.mulf %360, %361 : vector<8x384xf32>
    %363 = arith.addf %356, %362 : vector<8x384xf32>
    %364 = vector.extract_strided_slice %13 {offsets = [0, 16], sizes = [8, 1], strides = [1, 1]} : vector<8x72xf32> to vector<8x1xf32>
    %365 = vector.extract_strided_slice %357 {offsets = [1, 0], sizes = [1, 384], strides = [1, 1]} : vector<8x384xf32> to vector<1x384xf32>
    %366 = vector.broadcast %364 : vector<8x1xf32> to vector<8x384xf32>
    %367 = vector.broadcast %365 : vector<1x384xf32> to vector<8x384xf32>
    %368 = arith.mulf %366, %367 : vector<8x384xf32>
    %369 = arith.addf %363, %368 : vector<8x384xf32>
    %370 = vector.extract_strided_slice %13 {offsets = [0, 25], sizes = [8, 1], strides = [1, 1]} : vector<8x72xf32> to vector<8x1xf32>
    %371 = vector.extract_strided_slice %357 {offsets = [2, 0], sizes = [1, 384], strides = [1, 1]} : vector<8x384xf32> to vector<1x384xf32>
    %372 = vector.broadcast %370 : vector<8x1xf32> to vector<8x384xf32>
    %373 = vector.broadcast %371 : vector<1x384xf32> to vector<8x384xf32>
    %374 = arith.mulf %372, %373 : vector<8x384xf32>
    %375 = arith.addf %369, %374 : vector<8x384xf32>
    %376 = vector.extract_strided_slice %13 {offsets = [0, 34], sizes = [8, 1], strides = [1, 1]} : vector<8x72xf32> to vector<8x1xf32>
    %377 = vector.extract_strided_slice %357 {offsets = [3, 0], sizes = [1, 384], strides = [1, 1]} : vector<8x384xf32> to vector<1x384xf32>
    %378 = vector.broadcast %376 : vector<8x1xf32> to vector<8x384xf32>
    %379 = vector.broadcast %377 : vector<1x384xf32> to vector<8x384xf32>
    %380 = arith.mulf %378, %379 : vector<8x384xf32>
    %381 = arith.addf %375, %380 : vector<8x384xf32>
    %382 = vector.extract_strided_slice %13 {offsets = [0, 43], sizes = [8, 1], strides = [1, 1]} : vector<8x72xf32> to vector<8x1xf32>
    %383 = vector.extract_strided_slice %357 {offsets = [4, 0], sizes = [1, 384], strides = [1, 1]} : vector<8x384xf32> to vector<1x384xf32>
    %384 = vector.broadcast %382 : vector<8x1xf32> to vector<8x384xf32>
    %385 = vector.broadcast %383 : vector<1x384xf32> to vector<8x384xf32>
    %386 = arith.mulf %384, %385 : vector<8x384xf32>
    %387 = arith.addf %381, %386 : vector<8x384xf32>
    %388 = vector.extract_strided_slice %13 {offsets = [0, 52], sizes = [8, 1], strides = [1, 1]} : vector<8x72xf32> to vector<8x1xf32>
    %389 = vector.extract_strided_slice %357 {offsets = [5, 0], sizes = [1, 384], strides = [1, 1]} : vector<8x384xf32> to vector<1x384xf32>
    %390 = vector.broadcast %388 : vector<8x1xf32> to vector<8x384xf32>
    %391 = vector.broadcast %389 : vector<1x384xf32> to vector<8x384xf32>
    %392 = arith.mulf %390, %391 : vector<8x384xf32>
    %393 = arith.addf %387, %392 : vector<8x384xf32>
    %394 = vector.extract_strided_slice %13 {offsets = [0, 61], sizes = [8, 1], strides = [1, 1]} : vector<8x72xf32> to vector<8x1xf32>
    %395 = vector.extract_strided_slice %357 {offsets = [6, 0], sizes = [1, 384], strides = [1, 1]} : vector<8x384xf32> to vector<1x384xf32>
    %396 = vector.broadcast %394 : vector<8x1xf32> to vector<8x384xf32>
    %397 = vector.broadcast %395 : vector<1x384xf32> to vector<8x384xf32>
    %398 = arith.mulf %396, %397 : vector<8x384xf32>
    %399 = arith.addf %393, %398 : vector<8x384xf32>
    %400 = vector.extract_strided_slice %13 {offsets = [0, 70], sizes = [8, 1], strides = [1, 1]} : vector<8x72xf32> to vector<8x1xf32>
    %401 = vector.extract_strided_slice %357 {offsets = [7, 0], sizes = [1, 384], strides = [1, 1]} : vector<8x384xf32> to vector<1x384xf32>
    %402 = vector.broadcast %400 : vector<8x1xf32> to vector<8x384xf32>
    %403 = vector.broadcast %401 : vector<1x384xf32> to vector<8x384xf32>
    %404 = arith.mulf %402, %403 : vector<8x384xf32>
    %405 = arith.addf %399, %404 : vector<8x384xf32>
    %c365_i32 = arith.constant 365 : i32
    %406 = tpu.dynamic_rotate %12 by %c365_i32 dim 1 : vector<8x384xf32>, i32 -> vector<8x384xf32>
    %407 = vector.extract_strided_slice %13 {offsets = [0, 8], sizes = [8, 1], strides = [1, 1]} : vector<8x72xf32> to vector<8x1xf32>
    %408 = vector.extract_strided_slice %406 {offsets = [0, 0], sizes = [1, 384], strides = [1, 1]} : vector<8x384xf32> to vector<1x384xf32>
    %409 = vector.broadcast %407 : vector<8x1xf32> to vector<8x384xf32>
    %410 = vector.broadcast %408 : vector<1x384xf32> to vector<8x384xf32>
    %411 = arith.mulf %409, %410 : vector<8x384xf32>
    %412 = arith.addf %405, %411 : vector<8x384xf32>
    %413 = vector.extract_strided_slice %13 {offsets = [0, 17], sizes = [8, 1], strides = [1, 1]} : vector<8x72xf32> to vector<8x1xf32>
    %414 = vector.extract_strided_slice %406 {offsets = [1, 0], sizes = [1, 384], strides = [1, 1]} : vector<8x384xf32> to vector<1x384xf32>
    %415 = vector.broadcast %413 : vector<8x1xf32> to vector<8x384xf32>
    %416 = vector.broadcast %414 : vector<1x384xf32> to vector<8x384xf32>
    %417 = arith.mulf %415, %416 : vector<8x384xf32>
    %418 = arith.addf %412, %417 : vector<8x384xf32>
    %419 = vector.extract_strided_slice %13 {offsets = [0, 26], sizes = [8, 1], strides = [1, 1]} : vector<8x72xf32> to vector<8x1xf32>
    %420 = vector.extract_strided_slice %406 {offsets = [2, 0], sizes = [1, 384], strides = [1, 1]} : vector<8x384xf32> to vector<1x384xf32>
    %421 = vector.broadcast %419 : vector<8x1xf32> to vector<8x384xf32>
    %422 = vector.broadcast %420 : vector<1x384xf32> to vector<8x384xf32>
    %423 = arith.mulf %421, %422 : vector<8x384xf32>
    %424 = arith.addf %418, %423 : vector<8x384xf32>
    %425 = vector.extract_strided_slice %13 {offsets = [0, 35], sizes = [8, 1], strides = [1, 1]} : vector<8x72xf32> to vector<8x1xf32>
    %426 = vector.extract_strided_slice %406 {offsets = [3, 0], sizes = [1, 384], strides = [1, 1]} : vector<8x384xf32> to vector<1x384xf32>
    %427 = vector.broadcast %425 : vector<8x1xf32> to vector<8x384xf32>
    %428 = vector.broadcast %426 : vector<1x384xf32> to vector<8x384xf32>
    %429 = arith.mulf %427, %428 : vector<8x384xf32>
    %430 = arith.addf %424, %429 : vector<8x384xf32>
    %431 = vector.extract_strided_slice %13 {offsets = [0, 44], sizes = [8, 1], strides = [1, 1]} : vector<8x72xf32> to vector<8x1xf32>
    %432 = vector.extract_strided_slice %406 {offsets = [4, 0], sizes = [1, 384], strides = [1, 1]} : vector<8x384xf32> to vector<1x384xf32>
    %433 = vector.broadcast %431 : vector<8x1xf32> to vector<8x384xf32>
    %434 = vector.broadcast %432 : vector<1x384xf32> to vector<8x384xf32>
    %435 = arith.mulf %433, %434 : vector<8x384xf32>
    %436 = arith.addf %430, %435 : vector<8x384xf32>
    %437 = vector.extract_strided_slice %13 {offsets = [0, 53], sizes = [8, 1], strides = [1, 1]} : vector<8x72xf32> to vector<8x1xf32>
    %438 = vector.extract_strided_slice %406 {offsets = [5, 0], sizes = [1, 384], strides = [1, 1]} : vector<8x384xf32> to vector<1x384xf32>
    %439 = vector.broadcast %437 : vector<8x1xf32> to vector<8x384xf32>
    %440 = vector.broadcast %438 : vector<1x384xf32> to vector<8x384xf32>
    %441 = arith.mulf %439, %440 : vector<8x384xf32>
    %442 = arith.addf %436, %441 : vector<8x384xf32>
    %443 = vector.extract_strided_slice %13 {offsets = [0, 62], sizes = [8, 1], strides = [1, 1]} : vector<8x72xf32> to vector<8x1xf32>
    %444 = vector.extract_strided_slice %406 {offsets = [6, 0], sizes = [1, 384], strides = [1, 1]} : vector<8x384xf32> to vector<1x384xf32>
    %445 = vector.broadcast %443 : vector<8x1xf32> to vector<8x384xf32>
    %446 = vector.broadcast %444 : vector<1x384xf32> to vector<8x384xf32>
    %447 = arith.mulf %445, %446 : vector<8x384xf32>
    %448 = arith.addf %442, %447 : vector<8x384xf32>
    %449 = vector.extract_strided_slice %13 {offsets = [0, 71], sizes = [8, 1], strides = [1, 1]} : vector<8x72xf32> to vector<8x1xf32>
    %450 = vector.extract_strided_slice %406 {offsets = [7, 0], sizes = [1, 384], strides = [1, 1]} : vector<8x384xf32> to vector<1x384xf32>
    %451 = vector.broadcast %449 : vector<8x1xf32> to vector<8x384xf32>
    %452 = vector.broadcast %450 : vector<1x384xf32> to vector<8x384xf32>
    %453 = arith.mulf %451, %452 : vector<8x384xf32>
    %454 = arith.addf %448, %453 : vector<8x384xf32>
    %c0_11 = arith.constant 0 : index
    %c0_12 = arith.constant 0 : index
    %455 = vector.load %arg5[%c0_11, %c0_12] : memref<8x1xf32, #tpu.memory_space<vmem>>, vector<8x1xf32>
    %456 = vector.broadcast %455 : vector<8x1xf32> to vector<8x384xf32>
    %457 = arith.addf %454, %456 : vector<8x384xf32>
    %458 = vector.broadcast %0 : vector<1x384xf32> to vector<8x384xf32>
    %459 = arith.mulf %457, %458 : vector<8x384xf32>
    %c0_13 = arith.constant 0 : index
    %c0_14 = arith.constant 0 : index
    %c0_15 = arith.constant 0 : index
    %460 = vector.load %arg7[%c0_13, %c0_14, %c0_15] : memref<1x8x384xf32, #tpu.memory_space<vmem>>, vector<1x8x384xf32>
    %461 = vector.shape_cast %460 : vector<1x8x384xf32> to vector<8x384xf32>
    %462 = vector.shape_cast %459 : vector<8x384xf32> to vector<1x8x384xf32>
    tpu.vector_store %arg7[%c0_13, %c0_14, %c0_15], %462 {strides = array<i32>} : memref<1x8x384xf32, #tpu.memory_space<vmem>>, vector<1x8x384xf32>,
    %cst_16 = arith.constant dense<0.000000e+00> : vector<8xf32>
    %463 = vector.multi_reduction <add>, %459, %cst_16 [1] : vector<8x384xf32> to vector<8xf32>
    %464 = vector.shape_cast %463 : vector<8xf32> to vector<8x1xf32>
    %c0_17 = arith.constant 0 : index
    %c0_18 = arith.constant 0 : index
    %c0_19 = arith.constant 0 : index
    %465 = vector.load %arg8[%c0_17, %c0_18, %c0_19] : memref<1x8x2xf32, #tpu.memory_space<vmem>>, vector<1x8x1xf32>
    %466 = vector.shape_cast %465 : vector<1x8x1xf32> to vector<8x1xf32>
    %467 = vector.shape_cast %464 : vector<8x1xf32> to vector<1x8x1xf32>
    tpu.vector_store %arg8[%c0_17, %c0_18, %c0_19], %467 {strides = array<i32>} : memref<1x8x2xf32, #tpu.memory_space<vmem>>, vector<1x8x1xf32>,
    %468 = arith.mulf %459, %459 : vector<8x384xf32>
    %cst_20 = arith.constant dense<0.000000e+00> : vector<8xf32>
    %469 = vector.multi_reduction <add>, %468, %cst_20 [1] : vector<8x384xf32> to vector<8xf32>
    %470 = vector.shape_cast %469 : vector<8xf32> to vector<8x1xf32>
    %c0_21 = arith.constant 0 : index
    %c0_22 = arith.constant 0 : index
    %c1 = arith.constant 1 : index
    %471 = vector.load %arg8[%c0_21, %c0_22, %c1] : memref<1x8x2xf32, #tpu.memory_space<vmem>>, vector<1x8x1xf32>
    %472 = vector.shape_cast %471 : vector<1x8x1xf32> to vector<8x1xf32>
    %473 = vector.shape_cast %470 : vector<8x1xf32> to vector<1x8x1xf32>
    tpu.vector_store %arg8[%c0_21, %c0_22, %c1], %473 {strides = array<i32>} : memref<1x8x2xf32, #tpu.memory_space<vmem>>, vector<1x8x1xf32>,
    return
  }
  func.func @transform_0(%arg0: i32) -> (i32, i32, i32) {
    %c0_i32 = arith.constant 0 : i32
    %c0_i32_0 = arith.constant 0 : i32
    %c0_i32_1 = arith.constant 0 : i32
    return %arg0, %c0_i32, %c0_i32_0 : i32, i32, i32
  }
  func.func @transform_1(%arg0: i32) -> (i32, i32) {
    %c0_i32 = arith.constant 0 : i32
    %c0_i32_0 = arith.constant 0 : i32
    %c0_i32_1 = arith.constant 0 : i32
    return %c0_i32, %c0_i32_0 : i32, i32
  }
  func.func @transform_2(%arg0: i32) -> (i32, i32) {
    %c0_i32 = arith.constant 0 : i32
    %c0_i32_0 = arith.constant 0 : i32
    %c0_i32_1 = arith.constant 0 : i32
    return %c0_i32, %c0_i32_0 : i32, i32
  }
  func.func @transform_3(%arg0: i32) -> (i32, i32) {
    %c0_i32 = arith.constant 0 : i32
    %c0_i32_0 = arith.constant 0 : i32
    %c0_i32_1 = arith.constant 0 : i32
    return %c0_i32, %c0_i32_0 : i32, i32
  }
  func.func @transform_4(%arg0: i32) -> (i32, i32) {
    %c0_i32 = arith.constant 0 : i32
    %c0_i32_0 = arith.constant 0 : i32
    %c0_i32_1 = arith.constant 0 : i32
    return %c0_i32, %c0_i32_0 : i32, i32
  }
  func.func @transform_5(%arg0: i32) -> (i32, i32) {
    %c0_i32 = arith.constant 0 : i32
    %c0_i32_0 = arith.constant 0 : i32
    %c0_i32_1 = arith.constant 0 : i32
    return %c0_i32, %c0_i32_0 : i32, i32
  }
  func.func @transform_6(%arg0: i32) -> (i32, i32, i32) {
    %c0_i32 = arith.constant 0 : i32
    %c0_i32_0 = arith.constant 0 : i32
    %c0_i32_1 = arith.constant 0 : i32
    return %arg0, %c0_i32, %c0_i32_0 : i32, i32, i32
  }
  func.func @transform_7(%arg0: i32) -> (i32, i32, i32) {
    %c0_i32 = arith.constant 0 : i32
    %c0_i32_0 = arith.constant 0 : i32
    %c0_i32_1 = arith.constant 0 : i32
    return %arg0, %c0_i32, %c0_i32_0 : i32, i32, i32
  }
}

</mosaic_0001>

<llo_original>
// kernel: conv_relu_forward.2
$region0: #{conv_relu_forward.2}
  #allocation0 [shape = 'u32[]', space=smem, size = 0x4, offset = 0x4, fixed_abs, tag = 'smem constant byte address 0x4 - core index']
  #allocation1 [shape = 'u32[72,128]{1,0:T(1,128)}', space=vmem, size = 0x9000, scoped, tag = 'internal scratch']
  %s0 = inlined_call_operand.vmem [shape: f32[2,4,384], index: 0, kind: input, shape index: {}]
  %s1 = inlined_call_operand.vmem [shape: f32[4,1], index: 1, kind: input, shape index: {}]
  %s2 = inlined_call_operand.vmem [shape: f32[4,1], index: 2, kind: input, shape index: {}]
  %s3 = inlined_call_operand.vmem [shape: f32[8,36], index: 3, kind: input, shape index: {}]
  %s4 = inlined_call_operand.vmem [shape: f32[8,1], index: 4, kind: input, shape index: {}]
  %s5 = inlined_call_operand.vmem [shape: f32[1,384], index: 5, kind: input, shape index: {}]
  %s6 = inlined_call_operand.vmem [shape: f32[2,8,384], index: 6, kind: output, shape index: {0}]
  %s7 = inlined_call_operand.vmem [shape: f32[2,8,2], index: 7, kind: output, shape index: {1}]
  %8 = xla_tuple %s6, %s7
  %s9 = sld [smem:[#allocation0]]
  $region65: #{conv_relu_forward.2} parent=0
    _
  %s11 = ssub.s32 1, %s9
  %s12 = scalar_select 0, %s11, %s9
  loop: start=0, step=1, limit=4
  $region2: #{conv_relu_forward.2} parent=0 // loop_pre_header
    _
  $region3: #{conv_relu_forward.2} parent=0 // loop_header
    %s14 = sphi 0, %s18
    %p15 = scmp.ge.s32.totalorder %s14, 4
    %s24 = sphi 0, %s26
    %s27 = sphi 0, %s24
    %s28 = sphi 0, %s27
    %s44 = sphi 0, %s28
    %s48 = sphi 0, %s48
    %s50 = sphi 0, %s48
    %s51 = sphi 0, %s50
    %s65 = sphi 0, %s51
    %s69 = sphi 0, %s69
    %s71 = sphi 0, %s69
    %s72 = sphi 0, %s71
    %s86 = sphi 0, %s72
    %s90 = sphi 0, %s90
    %s92 = sphi 0, %s90
    %s93 = sphi 0, %s92
    %s107 = sphi 0, %s93
    %s111 = sphi 0, %s111
    %s113 = sphi 0, %s111
    %s114 = sphi 0, %s113
    %s128 = sphi 0, %s114
    %s132 = sphi 0, %s132
    %s134 = sphi 0, %s132
    %s135 = sphi 0, %s134
    %s149 = sphi 0, %s135
    %s155 = sphi 0, %s157
    %s158 = sphi 0, %s155
    %s159 = sphi 0, %s158
    %s175 = sphi 0, %s159
    %s181 = sphi 0, %s183
    %s184 = sphi 0, %s181
    %s185 = sphi 0, %s184
    %s201 = sphi 0, %s185
  $region4: #{conv_relu_forward.2} parent=0 // loop_header_branch
    %17 = sbr.rel (%p15) target = $region8
  $region5: #{conv_relu_forward.2} parent=0 // loop_body
    %s19 = ssub.s32 %s14, 1
    %s20 = ssub.s32 %s14, 2
    %s21 = sadd.s32 %s14, 1
    %s22 = ssub.s32 %s14, %s21
    %p23 = scmp.eq.s32.totalorder %s22, 0
    %s25 = sadd.s32 %s24, 1
    %s26 = scalar_select %p23, %s24, %s25
    %p29 = pneg %p23
    %p30 = scmp.eq.s32.totalorder %s14, 1
    %p31 = por %p29, %p30
    %p32 = scmp.ne.s32.totalorder %s24, %s27
    %p33 = scmp.eq.s32.totalorder %s14, 0
    %p34 = por %p32, %p33
    %p35 = scmp.ne.s32.totalorder %s24, %s27
    %p36 = scmp.eq.s32.totalorder %s19, 1
    %p37 = por %p35, %p36
    %p38 = scmp.ne.s32.totalorder %s27, %s28
    %p39 = scmp.eq.s32.totalorder %s19, 0
    %p40 = por %p38, %p39
    %p41 = scmp.ne.s32.totalorder %s27, %s28
    %p42 = scmp.eq.s32.totalorder %s20, 1
    %p43 = por %p41, %p42
    %p45 = scmp.ne.s32.totalorder %s28, %s44
    %p46 = scmp.eq.s32.totalorder %s20, 0
    %p47 = por %p45, %p46
    %s49 = sadd.s32 %s48, 1
    %p52 = scmp.eq.s32.totalorder %s14, 1
    %p53 = scmp.ne.s32.totalorder %s48, %s50
    %p54 = scmp.eq.s32.totalorder %s14, 0
    %p55 = por %p53, %p54
    %p56 = scmp.ne.s32.totalorder %s48, %s50
    %p57 = scmp.eq.s32.totalorder %s19, 1
    %p58 = por %p56, %p57
    %p59 = scmp.ne.s32.totalorder %s50, %s51
    %p60 = scmp.eq.s32.totalorder %s19, 0
    %p61 = por %p59, %p60
    %p62 = scmp.ne.s32.totalorder %s50, %s51
    %p63 = scmp.eq.s32.totalorder %s20, 1
    %p64 = por %p62, %p63
    %p66 = scmp.ne.s32.totalorder %s51, %s65
    %p67 = scmp.eq.s32.totalorder %s20, 0
    %p68 = por %p66, %p67
    %s70 = sadd.s32 %s69, 1
    %p73 = scmp.eq.s32.totalorder %s14, 1
    %p74 = scmp.ne.s32.totalorder %s69, %s71
    %p75 = scmp.eq.s32.totalorder %s14, 0
    %p76 = por %p74, %p75
    %p77 = scmp.ne.s32.totalorder %s69, %s71
    %p78 = scmp.eq.s32.totalorder %s19, 1
    %p79 = por %p77, %p78
    %p80 = scmp.ne.s32.totalorder %s71, %s72
    %p81 = scmp.eq.s32.totalorder %s19, 0
    %p82 = por %p80, %p81
    %p83 = scmp.ne.s32.totalorder %s71, %s72
    %p84 = scmp.eq.s32.totalorder %s20, 1
    %p85 = por %p83, %p84
    %p87 = scmp.ne.s32.totalorder %s72, %s86
    %p88 = scmp.eq.s32.totalorder %s20, 0
    %p89 = por %p87, %p88
    %s91 = sadd.s32 %s90, 1
    %p94 = scmp.eq.s32.totalorder %s14, 1
    %p95 = scmp.ne.s32.totalorder %s90, %s92
    %p96 = scmp.eq.s32.totalorder %s14, 0
    %p97 = por %p95, %p96
    %p98 = scmp.ne.s32.totalorder %s90, %s92
    %p99 = scmp.eq.s32.totalorder %s19, 1
    %p100 = por %p98, %p99
    %p101 = scmp.ne.s32.totalorder %s92, %s93
    %p102 = scmp.eq.s32.totalorder %s19, 0
    %p103 = por %p101, %p102
    %p104 = scmp.ne.s32.totalorder %s92, %s93
    %p105 = scmp.eq.s32.totalorder %s20, 1
    %p106 = por %p104, %p105
    %p108 = scmp.ne.s32.totalorder %s93, %s107
    %p109 = scmp.eq.s32.totalorder %s20, 0
    %p110 = por %p108, %p109
    %s112 = sadd.s32 %s111, 1
    %p115 = scmp.eq.s32.totalorder %s14, 1
    %p116 = scmp.ne.s32.totalorder %s111, %s113
    %p117 = scmp.eq.s32.totalorder %s14, 0
    %p118 = por %p116, %p117
    %p119 = scmp.ne.s32.totalorder %s111, %s113
    %p120 = scmp.eq.s32.totalorder %s19, 1
    %p121 = por %p119, %p120
    %p122 = scmp.ne.s32.totalorder %s113, %s114
    %p123 = scmp.eq.s32.totalorder %s19, 0
    %p124 = por %p122, %p123
    %p125 = scmp.ne.s32.totalorder %s113, %s114
    %p126 = scmp.eq.s32.totalorder %s20, 1
    %p127 = por %p125, %p126
    %p129 = scmp.ne.s32.totalorder %s114, %s128
    %p130 = scmp.eq.s32.totalorder %s20, 0
    %p131 = por %p129, %p130
    %s133 = sadd.s32 %s132, 1
    %p136 = scmp.eq.s32.totalorder %s14, 1
    %p137 = scmp.ne.s32.totalorder %s132, %s134
    %p138 = scmp.eq.s32.totalorder %s14, 0
    %p139 = por %p137, %p138
    %p140 = scmp.ne.s32.totalorder %s132, %s134
    %p141 = scmp.eq.s32.totalorder %s19, 1
    %p142 = por %p140, %p141
    %p143 = scmp.ne.s32.totalorder %s134, %s135
    %p144 = scmp.eq.s32.totalorder %s19, 0
    %p145 = por %p143, %p144
    %p146 = scmp.ne.s32.totalorder %s134, %s135
    %p147 = scmp.eq.s32.totalorder %s20, 1
    %p148 = por %p146, %p147
    %p150 = scmp.ne.s32.totalorder %s135, %s149
    %p151 = scmp.eq.s32.totalorder %s20, 0
    %p152 = por %p150, %p151
    %s153 = ssub.s32 %s14, %s21
    %p154 = scmp.eq.s32.totalorder %s153, 0
    %s156 = sadd.s32 %s155, 1
    %s157 = scalar_select %p154, %s155, %s156
    %p160 = pneg %p154
    %p161 = scmp.eq.s32.totalorder %s14, 1
    %p162 = por %p160, %p161
    %p163 = scmp.ne.s32.totalorder %s155, %s158
    %p164 = scmp.eq.s32.totalorder %s14, 0
    %p165 = por %p163, %p164
    %p166 = scmp.ne.s32.totalorder %s155, %s158
    %p167 = scmp.eq.s32.totalorder %s19, 1
    %p168 = por %p166, %p167
    %p169 = scmp.ne.s32.totalorder %s158, %s159
    %p170 = scmp.eq.s32.totalorder %s19, 0
    %p171 = por %p169, %p170
    %p172 = scmp.ne.s32.totalorder %s158, %s159
    %p173 = scmp.eq.s32.totalorder %s20, 1
    %p174 = por %p172, %p173
    %p176 = scmp.ne.s32.totalorder %s159, %s175
    %p177 = scmp.eq.s32.totalorder %s20, 0
    %p178 = por %p176, %p177
    %s179 = ssub.s32 %s14, %s21
    %p180 = scmp.eq.s32.totalorder %s179, 0
    %s182 = sadd.s32 %s181, 1
    %s183 = scalar_select %p180, %s181, %s182
    %p186 = pneg %p180
    %p187 = scmp.eq.s32.totalorder %s14, 1
    %p188 = por %p186, %p187
    %p189 = scmp.ne.s32.totalorder %s181, %s184
    %p190 = scmp.eq.s32.totalorder %s14, 0
    %p191 = por %p189, %p190
    %p192 = scmp.ne.s32.totalorder %s181, %s184
    %p193 = scmp.eq.s32.totalorder %s19, 1
    %p194 = por %p192, %p193
    %p195 = scmp.ne.s32.totalorder %s184, %s185
    %p196 = scmp.eq.s32.totalorder %s19, 0
    %p197 = por %p195, %p196
    %p198 = scmp.ne.s32.totalorder %s184, %s185
    %p199 = scmp.eq.s32.totalorder %s20, 1
    %p200 = por %p198, %p199
    %p202 = scmp.ne.s32.totalorder %s185, %s201
    %p203 = scmp.eq.s32.totalorder %s20, 0
    %p204 = por %p202, %p203
    %p205 = scmp.le.s32.totalorder 1, %s14
    %p206 = scmp.lt.s32.totalorder %s14, 3
    %p207 = pnand %p205, %p206
    %p208 = pneg %p207
    // Predicated region
    $region9: #{conv_relu_forward.2} parent=5 // pred_check
      _
    $region10: #{conv_relu_forward.2} parent=5 // pred_check_branch
      %210 = sbr.rel (%p207) target = $region12
    $region11: #{conv_relu_forward.2} parent=5 // pred_region
      %s211 = ssub.s32 %s14, 1
      // Predicated region
      $region13: #{conv_relu_forward.2} parent=11 // pred_check
        %p212 = pneg %p61
      $region14: #{conv_relu_forward.2} parent=11 // pred_check_branch
        %214 = sbr.rel (%p212) target = $region16
      $region15: #{conv_relu_forward.2} parent=11 // pred_region
        _
      $region16: #{conv_relu_forward.2} parent=11 // pred_fallthru
        _
      // Predicated region
      $region17: #{conv_relu_forward.2} parent=11 // pred_check
        %p215 = pneg %p82
      $region18: #{conv_relu_forward.2} parent=11 // pred_check_branch
        %217 = sbr.rel (%p215) target = $region20
      $region19: #{conv_relu_forward.2} parent=11 // pred_region
        _
      $region20: #{conv_relu_forward.2} parent=11 // pred_fallthru
        _
      // Predicated region
      $region21: #{conv_relu_forward.2} parent=11 // pred_check
        %p218 = pneg %p103
      $region22: #{conv_relu_forward.2} parent=11 // pred_check_branch
        %220 = sbr.rel (%p218) target = $region24
      $region23: #{conv_relu_forward.2} parent=11 // pred_region
        _
      $region24: #{conv_relu_forward.2} parent=11 // pred_fallthru
        _
      // Predicated region
      $region25: #{conv_relu_forward.2} parent=11 // pred_check
        %p221 = pneg %p124
      $region26: #{conv_relu_forward.2} parent=11 // pred_check_branch
        %223 = sbr.rel (%p221) target = $region28
      $region27: #{conv_relu_forward.2} parent=11 // pred_region
        _
      $region28: #{conv_relu_forward.2} parent=11 // pred_fallthru
        _
      // Predicated region
      $region29: #{conv_relu_forward.2} parent=11 // pred_check
        %p224 = pneg %p145
      $region30: #{conv_relu_forward.2} parent=11 // pred_check_branch
        %226 = sbr.rel (%p224) target = $region32
      $region31: #{conv_relu_forward.2} parent=11 // pred_region
        _
      $region32: #{conv_relu_forward.2} parent=11 // pred_fallthru
        _
    $region12: #{conv_relu_forward.2} parent=5 // pred_fallthru
      _
    %p227 = scmp.lt.s32.totalorder %s14, 2
    // Predicated region
    $region33: #{conv_relu_forward.2} parent=5 // pred_check
      %p228 = pneg %p227
    $region34: #{conv_relu_forward.2} parent=5 // pred_check_branch
      %230 = sbr.rel (%p228) target = $region36
    $region35: #{conv_relu_forward.2} parent=5 // pred_region
      // Predicated region
      $region37: #{conv_relu_forward.2} parent=35 // pred_check
        %p231 = pneg %p34
      $region38: #{conv_relu_forward.2} parent=35 // pred_check_branch
        %233 = sbr.rel (%p231) target = $region40
      $region39: #{conv_relu_forward.2} parent=35 // pred_region
        %p234 = scmp.lt.s32.totalorder %s14, 1
        %s235 = scalar_select %p234, %s14, 1
        %s236 = smul.addr %s235, 3
        %s237 = smul.addr %s236, 4
        %s238 = scalar_lea.vmem %s0, %s237
      $region40: #{conv_relu_forward.2} parent=35 // pred_fallthru
        _
    $region36: #{conv_relu_forward.2} parent=5 // pred_fallthru
      _
    %p239 = scmp.le.s32.totalorder 1, %s14
    %p240 = scmp.lt.s32.totalorder %s14, 3
    %p241 = pnand %p239, %p240
    %p242 = pneg %p241
    // Predicated region
    $region41: #{conv_relu_forward.2} parent=5 // pred_check
      _
    $region42: #{conv_relu_forward.2} parent=5 // pred_check_branch
      %244 = sbr.rel (%p241) target = $region44
    $region43: #{conv_relu_forward.2} parent=5 // pred_region
      %s245 = ssub.s32 %s14, 1
      %p246 = scmp.lt.s32.totalorder %s19, 1
      %s247 = scalar_select %p246, %s19, 1
      %s248 = smul.addr %s247, 3
      %s249 = smul.addr %s248, 4
      %s250 = scalar_lea.vmem %s0, %s249
      %p251 = pneg %p40
      %p252 = pneg %p37
      %p253 = pneg %p61
      %p254 = pneg %p58
      %p255 = pneg %p82
      %p256 = pneg %p79
      %p257 = pneg %p103
      %p258 = pneg %p100
      %p259 = pneg %p124
      %p260 = pneg %p121
      %p261 = pneg %p145
      %p262 = pneg %p142
      %p263 = pneg %p171
      %p264 = pneg %p168
      %p265 = scmp.lt.s32.totalorder %s19, 1
      %s266 = scalar_select %p265, %s19, 1
      %s267 = smul.addr %s266, 3
      %s268 = smul.addr %s267, 8
      %s269 = scalar_lea.vmem %s6, %s268
      %p270 = pneg %p197
      %p271 = pneg %p194
      %p272 = scmp.lt.s32.totalorder %s19, 1
      %s273 = scalar_select %p272, %s19, 1
      %s274 = smul.addr %s273, 8
      %s275 = scalar_lea.vmem %s7, %s274
      %p276 = scmp.lt.s32.totalorder %s19, 1
      %s277 = scalar_select %p276, %s19, 1
      %s278 = smul.addr %s277, 3
      %s279 = smul.addr %s278, 4
      %s280 = scalar_lea.vmem %s0, %s279
      %p281 = scmp.lt.s32.totalorder %s19, 1
      %s282 = scalar_select %p281, %s19, 1
      %s283 = smul.addr %s282, 3
      %s284 = smul.addr %s283, 8
      %s285 = scalar_lea.vmem %s6, %s284
      %p286 = scmp.lt.s32.totalorder %s19, 1
      %s287 = scalar_select %p286, %s19, 1
      %s288 = smul.addr %s287, 8
      %s289 = scalar_lea.vmem %s7, %s288
      %v290 = vld [vmem:[%s5] sm:$0x7]
      %v291 = vld [vmem:[%s280] sm:$0xff]
      %v292 = vld [vmem:[%s280 + $0x8] sm:$0xf]
      %v293 = vld [vmem:[%s3] sm:$0xff]
      %296 = vst [vmem:[#allocation1] ss:$2 sm:$0xff] %v291
      %s297 = scalar_lea.vmem [#allocation1], 16
      %298 = vst [vmem:[%s297] ss:$2 sm:$0xff] %v292
      %v299 = vld.sshfl [vmem:[#allocation1] sm:$0xff pattern:$0x75316420]
      %v300 = vld.sshfl [vmem:[#allocation1 + $0x8] sm:$0xff pattern:$0x75316420]
      %v301 = vld.sshfl [vmem:[#allocation1 + $0x10] sm:$0xff pattern:$0x75316420]
      %305 = vrot.lane.b32.xlu0 %v299, 19
      %v306 = vpop.permute.xlu0 %305
      %307 = vrot.lane.b32.xlu0 %v300, 19
      %v308 = vpop.permute.xlu0 %307
      %309 = vrot.lane.b32.xlu0 %v301, 19
      %v310 = vpop.permute.xlu0 %309
      %v311 = vlaneseq
      %v312 = vand.u32 %v311, 127
      %vm313 = vcmp.lt.s32.totalorder %v312, 19
      %v314 = vsel %vm313, %v308, %v310
      %v315 = vsel %vm313, %v306, %v308
      %v316 = vsel %vm313, %v310, %v306
      %318 = vset.pattern.permute.xlu0 0
      %319 = vperm.xlu0 %318, %v293
      %v320 = vpop.permute.xlu0 %319
      %v322 = vperm.slane %v316, 0
      %v323 = vperm.slane %v315, 0
      %v324 = vperm.slane %v314, 0
      %v325 = vmul.f32 %v320, %v322
      %v326 = vmul.f32 %v320, %v323
      %v327 = vmul.f32 %v320, %v324
      %v328 = vadd.f32 %v325, 0.0
      %v329 = vadd.f32 %v326, 0.0
      %v330 = vadd.f32 %v327, 0.0
      %331 = vset.pattern.permute.xlu0 9
      %332 = vperm.xlu0 %331, %v293
      %v333 = vpop.permute.xlu0 %332
      %v335 = vperm.slane %v316, 1
      %v336 = vperm.slane %v315, 1
      %v337 = vperm.slane %v314, 1
      %v338 = vmul.f32 %v333, %v335
      %v339 = vmul.f32 %v333, %v336
      %v340 = vmul.f32 %v333, %v337
      %v341 = vadd.f32 %v328, %v338
      %v342 = vadd.f32 %v329, %v339
      %v343 = vadd.f32 %v330, %v340
      %344 = vset.pattern.permute.xlu0 18
      %345 = vperm.xlu0 %344, %v293
      %v346 = vpop.permute.xlu0 %345
      %v348 = vperm.slane %v316, 2
      %v349 = vperm.slane %v315, 2
      %v350 = vperm.slane %v314, 2
      %v351 = vmul.f32 %v346, %v348
      %v352 = vmul.f32 %v346, %v349
      %v353 = vmul.f32 %v346, %v350
      %v354 = vadd.f32 %v341, %v351
      %v355 = vadd.f32 %v342, %v352
      %v356 = vadd.f32 %v343, %v353
      %357 = vset.pattern.permute.xlu0 27
      %358 = vperm.xlu0 %357, %v293
      %v359 = vpop.permute.xlu0 %358
      %v361 = vperm.slane %v316, 3
      %v362 = vperm.slane %v315, 3
      %v363 = vperm.slane %v314, 3
      %v364 = vmul.f32 %v359, %v361
      %v365 = vmul.f32 %v359, %v362
      %v366 = vmul.f32 %v359, %v363
      %v367 = vadd.f32 %v354, %v364
      %v368 = vadd.f32 %v355, %v365
      %v369 = vadd.f32 %v356, %v366
      %370 = vst [vmem:[#allocation1] ss:$2 sm:$0xff] %v291
      %s371 = scalar_lea.vmem [#allocation1], 16
      %372 = vst [vmem:[%s371] ss:$2 sm:$0xff] %v292
      %v373 = vld.sshfl [vmem:[#allocation1] sm:$0xff pattern:$0x75316420]
      %v374 = vld.sshfl [vmem:[#allocation1 + $0x8] sm:$0xff pattern:$0x75316420]
      %v375 = vld.sshfl [vmem:[#allocation1 + $0x10] sm:$0xff pattern:$0x75316420]
      %379 = vrot.lane.b32.xlu0 %v373, 18
      %v380 = vpop.permute.xlu0 %379
      %381 = vrot.lane.b32.xlu0 %v374, 18
      %v382 = vpop.permute.xlu0 %381
      %383 = vrot.lane.b32.xlu0 %v375, 18
      %v384 = vpop.permute.xlu0 %383
      %vm385 = vcmp.lt.s32.totalorder %v312, 18
      %v386 = vsel %vm385, %v382, %v384
      %v387 = vsel %vm385, %v380, %v382
      %v388 = vsel %vm385, %v384, %v380
      %389 = vset.pattern.permute.xlu0 1
      %390 = vperm.xlu0 %389, %v293
      %v391 = vpop.permute.xlu0 %390
      %v393 = vperm.slane %v388, 0
      %v394 = vperm.slane %v387, 0
      %v395 = vperm.slane %v386, 0
      %v396 = vmul.f32 %v391, %v393
      %v397 = vmul.f32 %v391, %v394
      %v398 = vmul.f32 %v391, %v395
      %v399 = vadd.f32 %v367, %v396
      %v400 = vadd.f32 %v368, %v397
      %v401 = vadd.f32 %v369, %v398
      %402 = vset.pattern.permute.xlu0 10
      %403 = vperm.xlu0 %402, %v293
      %v404 = vpop.permute.xlu0 %403
      %v406 = vperm.slane %v388, 1
      %v407 = vperm.slane %v387, 1
      %v408 = vperm.slane %v386, 1
      %v409 = vmul.f32 %v404, %v406
      %v410 = vmul.f32 %v404, %v407
      %v411 = vmul.f32 %v404, %v408
      %v412 = vadd.f32 %v399, %v409
      %v413 = vadd.f32 %v400, %v410
      %v414 = vadd.f32 %v401, %v411
      %415 = vset.pattern.permute.xlu0 19
      %416 = vperm.xlu0 %415, %v293
      %v417 = vpop.permute.xlu0 %416
      %v419 = vperm.slane %v388, 2
      %v420 = vperm.slane %v387, 2
      %v421 = vperm.slane %v386, 2
      %v422 = vmul.f32 %v417, %v419
      %v423 = vmul.f32 %v417, %v420
      %v424 = vmul.f32 %v417, %v421
      %v425 = vadd.f32 %v412, %v422
      %v426 = vadd.f32 %v413, %v423
      %v427 = vadd.f32 %v414, %v424
      %428 = vset.pattern.permute.xlu0 28
      %429 = vperm.xlu0 %428, %v293
      %v430 = vpop.permute.xlu0 %429
      %v432 = vperm.slane %v388, 3
      %v433 = vperm.slane %v387, 3
      %v434 = vperm.slane %v386, 3
      %v435 = vmul.f32 %v430, %v432
      %v436 = vmul.f32 %v430, %v433
      %v437 = vmul.f32 %v430, %v434
      %v438 = vadd.f32 %v425, %v435
      %v439 = vadd.f32 %v426, %v436
      %v440 = vadd.f32 %v427, %v437
      %441 = vst [vmem:[#allocation1] ss:$2 sm:$0xff] %v291
      %s442 = scalar_lea.vmem [#allocation1], 16
      %443 = vst [vmem:[%s442] ss:$2 sm:$0xff] %v292
      %v444 = vld.sshfl [vmem:[#allocation1] sm:$0xff pattern:$0x75316420]
      %v445 = vld.sshfl [vmem:[#allocation1 + $0x8] sm:$0xff pattern:$0x75316420]
      %v446 = vld.sshfl [vmem:[#allocation1 + $0x10] sm:$0xff pattern:$0x75316420]
      %450 = vrot.lane.b32.xlu0 %v444, 17
      %v451 = vpop.permute.xlu0 %450
      %452 = vrot.lane.b32.xlu0 %v445, 17
      %v453 = vpop.permute.xlu0 %452
      %454 = vrot.lane.b32.xlu0 %v446, 17
      %v455 = vpop.permute.xlu0 %454
      %vm456 = vcmp.lt.s32.totalorder %v312, 17
      %v457 = vsel %vm456, %v453, %v455
      %v458 = vsel %vm456, %v451, %v453
      %v459 = vsel %vm456, %v455, %v451
      %460 = vset.pattern.permute.xlu0 2
      %461 = vperm.xlu0 %460, %v293
      %v462 = vpop.permute.xlu0 %461
      %v464 = vperm.slane %v459, 0
      %v465 = vperm.slane %v458, 0
      %v466 = vperm.slane %v457, 0
      %v467 = vmul.f32 %v462, %v464
      %v468 = vmul.f32 %v462, %v465
      %v469 = vmul.f32 %v462, %v466
      %v470 = vadd.f32 %v438, %v467
      %v471 = vadd.f32 %v439, %v468
      %v472 = vadd.f32 %v440, %v469
      %473 = vset.pattern.permute.xlu0 11
      %474 = vperm.xlu0 %473, %v293
      %v475 = vpop.permute.xlu0 %474
      %v477 = vperm.slane %v459, 1
      %v478 = vperm.slane %v458, 1
      %v479 = vperm.slane %v457, 1
      %v480 = vmul.f32 %v475, %v477
      %v481 = vmul.f32 %v475, %v478
      %v482 = vmul.f32 %v475, %v479
      %v483 = vadd.f32 %v470, %v480
      %v484 = vadd.f32 %v471, %v481
      %v485 = vadd.f32 %v472, %v482
      %486 = vset.pattern.permute.xlu0 20
      %487 = vperm.xlu0 %486, %v293
      %v488 = vpop.permute.xlu0 %487
      %v490 = vperm.slane %v459, 2
      %v491 = vperm.slane %v458, 2
      %v492 = vperm.slane %v457, 2
      %v493 = vmul.f32 %v488, %v490
      %v494 = vmul.f32 %v488, %v491
      %v495 = vmul.f32 %v488, %v492
      %v496 = vadd.f32 %v483, %v493
      %v497 = vadd.f32 %v484, %v494
      %v498 = vadd.f32 %v485, %v495
      %499 = vset.pattern.permute.xlu0 29
      %500 = vperm.xlu0 %499, %v293
      %v501 = vpop.permute.xlu0 %500
      %v503 = vperm.slane %v459, 3
      %v504 = vperm.slane %v458, 3
      %v505 = vperm.slane %v457, 3
      %v506 = vmul.f32 %v501, %v503
      %v507 = vmul.f32 %v501, %v504
      %v508 = vmul.f32 %v501, %v505
      %v509 = vadd.f32 %v496, %v506
      %v510 = vadd.f32 %v497, %v507
      %v511 = vadd.f32 %v498, %v508
      %512 = vst [vmem:[#allocation1] ss:$2 sm:$0xff] %v291
      %s513 = scalar_lea.vmem [#allocation1], 16
      %514 = vst [vmem:[%s513] ss:$2 sm:$0xff] %v292
      %v515 = vld.sshfl [vmem:[#allocation1] sm:$0xff pattern:$0x75316420]
      %v516 = vld.sshfl [vmem:[#allocation1 + $0x8] sm:$0xff pattern:$0x75316420]
      %v517 = vld.sshfl [vmem:[#allocation1 + $0x10] sm:$0xff pattern:$0x75316420]
      %521 = vrot.lane.b32.xlu0 %v515, 1
      %v522 = vpop.permute.xlu0 %521
      %523 = vrot.lane.b32.xlu0 %v516, 1
      %v524 = vpop.permute.xlu0 %523
      %525 = vrot.lane.b32.xlu0 %v517, 1
      %v526 = vpop.permute.xlu0 %525
      %vm527 = vcmp.lt.s32.totalorder %v312, 1
      %v528 = vsel %vm527, %v524, %v526
      %v529 = vsel %vm527, %v522, %v524
      %v530 = vsel %vm527, %v526, %v522
      %531 = vset.pattern.permute.xlu0 3
      %532 = vperm.xlu0 %531, %v293
      %v533 = vpop.permute.xlu0 %532
      %v535 = vperm.slane %v530, 0
      %v536 = vperm.slane %v529, 0
      %v537 = vperm.slane %v528, 0
      %v538 = vmul.f32 %v533, %v535
      %v539 = vmul.f32 %v533, %v536
      %v540 = vmul.f32 %v533, %v537
      %v541 = vadd.f32 %v509, %v538
      %v542 = vadd.f32 %v510, %v539
      %v543 = vadd.f32 %v511, %v540
      %544 = vset.pattern.permute.xlu0 12
      %545 = vperm.xlu0 %544, %v293
      %v546 = vpop.permute.xlu0 %545
      %v548 = vperm.slane %v530, 1
      %v549 = vperm.slane %v529, 1
      %v550 = vperm.slane %v528, 1
      %v551 = vmul.f32 %v546, %v548
      %v552 = vmul.f32 %v546, %v549
      %v553 = vmul.f32 %v546, %v550
      %v554 = vadd.f32 %v541, %v551
      %v555 = vadd.f32 %v542, %v552
      %v556 = vadd.f32 %v543, %v553
      %557 = vset.pattern.permute.xlu0 21
      %558 = vperm.xlu0 %557, %v293
      %v559 = vpop.permute.xlu0 %558
      %v561 = vperm.slane %v530, 2
      %v562 = vperm.slane %v529, 2
      %v563 = vperm.slane %v528, 2
      %v564 = vmul.f32 %v559, %v561
      %v565 = vmul.f32 %v559, %v562
      %v566 = vmul.f32 %v559, %v563
      %v567 = vadd.f32 %v554, %v564
      %v568 = vadd.f32 %v555, %v565
      %v569 = vadd.f32 %v556, %v566
      %570 = vset.pattern.permute.xlu0 30
      %571 = vperm.xlu0 %570, %v293
      %v572 = vpop.permute.xlu0 %571
      %v574 = vperm.slane %v530, 3
      %v575 = vperm.slane %v529, 3
      %v576 = vperm.slane %v528, 3
      %v577 = vmul.f32 %v572, %v574
      %v578 = vmul.f32 %v572, %v575
      %v579 = vmul.f32 %v572, %v576
      %v580 = vadd.f32 %v567, %v577
      %v581 = vadd.f32 %v568, %v578
      %v582 = vadd.f32 %v569, %v579
      %583 = vset.pattern.permute.xlu0 4
      %584 = vperm.xlu0 %583, %v293
      %v585 = vpop.permute.xlu0 %584
      %v587 = vperm.slane %v291, 0
      %v588 = vperm.slane %v291, 4
      %v589 = vperm.slane %v292, 0
      %v593 = vperm.slane %v587, 0
      %v594 = vperm.slane %v588, 0
      %v595 = vperm.slane %v589, 0
      %v596 = vmul.f32 %v585, %v593
      %v597 = vmul.f32 %v585, %v594
      %v598 = vmul.f32 %v585, %v595
      %v599 = vadd.f32 %v580, %v596
      %v600 = vadd.f32 %v581, %v597
      %v601 = vadd.f32 %v582, %v598
      %602 = vset.pattern.permute.xlu0 13
      %603 = vperm.xlu0 %602, %v293
      %v604 = vpop.permute.xlu0 %603
      %v606 = vperm.slane %v291, 1
      %v607 = vperm.slane %v291, 5
      %v608 = vperm.slane %v292, 1
      %v612 = vperm.slane %v606, 1
      %v613 = vperm.slane %v607, 1
      %v614 = vperm.slane %v608, 1
      %v615 = vmul.f32 %v604, %v612
      %v616 = vmul.f32 %v604, %v613
      %v617 = vmul.f32 %v604, %v614
      %v618 = vadd.f32 %v599, %v615
      %v619 = vadd.f32 %v600, %v616
      %v620 = vadd.f32 %v601, %v617
      %621 = vset.pattern.permute.xlu0 22
      %622 = vperm.xlu0 %621, %v293
      %v623 = vpop.permute.xlu0 %622
      %v625 = vperm.slane %v291, 2
      %v626 = vperm.slane %v291, 6
      %v627 = vperm.slane %v292, 2
      %v631 = vperm.slane %v625, 2
      %v632 = vperm.slane %v626, 2
      %v633 = vperm.slane %v627, 2
      %v634 = vmul.f32 %v623, %v631
      %v635 = vmul.f32 %v623, %v632
      %v636 = vmul.f32 %v623, %v633
      %v637 = vadd.f32 %v618, %v634
      %v638 = vadd.f32 %v619, %v635
      %v639 = vadd.f32 %v620, %v636
      %640 = vset.pattern.permute.xlu0 31
      %641 = vperm.xlu0 %640, %v293
      %v642 = vpop.permute.xlu0 %641
      %v644 = vperm.slane %v291, 3
      %v645 = vperm.slane %v291, 7
      %v646 = vperm.slane %v292, 3
      %v650 = vperm.slane %v644, 3
      %v651 = vperm.slane %v645, 3
      %v652 = vperm.slane %v646, 3
      %v653 = vmul.f32 %v642, %v650
      %v654 = vmul.f32 %v642, %v651
      %v655 = vmul.f32 %v642, %v652
      %v656 = vadd.f32 %v637, %v653
      %v657 = vadd.f32 %v638, %v654
      %v658 = vadd.f32 %v639, %v655
      %659 = vst [vmem:[#allocation1] ss:$2 sm:$0xff] %v291
      %s660 = scalar_lea.vmem [#allocation1], 16
      %661 = vst [vmem:[%s660] ss:$2 sm:$0xff] %v292
      %v662 = vld.sshfl [vmem:[#allocation1] sm:$0xff pattern:$0x75316420]
      %v663 = vld.sshfl [vmem:[#allocation1 + $0x8] sm:$0xff pattern:$0x75316420]
      %v664 = vld.sshfl [vmem:[#allocation1 + $0x10] sm:$0xff pattern:$0x75316420]
      %668 = vrot.lane.b32.xlu0 %v662, 127
      %v669 = vpop.permute.xlu0 %668
      %670 = vrot.lane.b32.xlu0 %v663, 127
      %v671 = vpop.permute.xlu0 %670
      %672 = vrot.lane.b32.xlu0 %v664, 127
      %v673 = vpop.permute.xlu0 %672
      %vm674 = vcmp.lt.s32.totalorder %v312, 127
      %v675 = vsel %vm674, %v671, %v673
      %v676 = vsel %vm674, %v669, %v671
      %v677 = vsel %vm674, %v673, %v669
      %678 = vset.pattern.permute.xlu0 5
      %679 = vperm.xlu0 %678, %v293
      %v680 = vpop.permute.xlu0 %679
      %v682 = vperm.slane %v676, 0
      %v683 = vperm.slane %v675, 0
      %v684 = vperm.slane %v677, 0
      %v685 = vmul.f32 %v680, %v682
      %v686 = vmul.f32 %v680, %v683
      %v687 = vmul.f32 %v680, %v684
      %v688 = vadd.f32 %v656, %v685
      %v689 = vadd.f32 %v657, %v686
      %v690 = vadd.f32 %v658, %v687
      %691 = vset.pattern.permute.xlu0 14
      %692 = vperm.xlu0 %691, %v293
      %v693 = vpop.permute.xlu0 %692
      %v695 = vperm.slane %v676, 1
      %v696 = vperm.slane %v675, 1
      %v697 = vperm.slane %v677, 1
      %v698 = vmul.f32 %v693, %v695
      %v699 = vmul.f32 %v693, %v696
      %v700 = vmul.f32 %v693, %v697
      %v701 = vadd.f32 %v688, %v698
      %v702 = vadd.f32 %v689, %v699
      %v703 = vadd.f32 %v690, %v700
      %704 = vset.pattern.permute.xlu0 23
      %705 = vperm.xlu0 %704, %v293
      %v706 = vpop.permute.xlu0 %705
      %v708 = vperm.slane %v676, 2
      %v709 = vperm.slane %v675, 2
      %v710 = vperm.slane %v677, 2
      %v711 = vmul.f32 %v706, %v708
      %v712 = vmul.f32 %v706, %v709
      %v713 = vmul.f32 %v706, %v710
      %v714 = vadd.f32 %v701, %v711
      %v715 = vadd.f32 %v702, %v712
      %v716 = vadd.f32 %v703, %v713
      %717 = vset.pattern.permute.xlu0 32
      %718 = vperm.xlu0 %717, %v293
      %v719 = vpop.permute.xlu0 %718
      %v721 = vperm.slane %v676, 3
      %v722 = vperm.slane %v675, 3
      %v723 = vperm.slane %v677, 3
      %v724 = vmul.f32 %v719, %v721
      %v725 = vmul.f32 %v719, %v722
      %v726 = vmul.f32 %v719, %v723
      %v727 = vadd.f32 %v714, %v724
      %v728 = vadd.f32 %v715, %v725
      %v729 = vadd.f32 %v716, %v726
      %730 = vst [vmem:[#allocation1] ss:$2 sm:$0xff] %v291
      %s731 = scalar_lea.vmem [#allocation1], 16
      %732 = vst [vmem:[%s731] ss:$2 sm:$0xff] %v292
      %v733 = vld.sshfl [vmem:[#allocation1] sm:$0xff pattern:$0x75316420]
      %v734 = vld.sshfl [vmem:[#allocation1 + $0x8] sm:$0xff pattern:$0x75316420]
      %v735 = vld.sshfl [vmem:[#allocation1 + $0x10] sm:$0xff pattern:$0x75316420]
      %739 = vrot.lane.b32.xlu0 %v733, 111
      %v740 = vpop.permute.xlu0 %739
      %741 = vrot.lane.b32.xlu0 %v734, 111
      %v742 = vpop.permute.xlu0 %741
      %743 = vrot.lane.b32.xlu0 %v735, 111
      %v744 = vpop.permute.xlu0 %743
      %vm745 = vcmp.lt.s32.totalorder %v312, 111
      %v746 = vsel %vm745, %v742, %v744
      %v747 = vsel %vm745, %v740, %v742
      %v748 = vsel %vm745, %v744, %v740
      %749 = vset.pattern.permute.xlu0 6
      %750 = vperm.xlu0 %749, %v293
      %v751 = vpop.permute.xlu0 %750
      %v753 = vperm.slane %v747, 0
      %v754 = vperm.slane %v746, 0
      %v755 = vperm.slane %v748, 0
      %v756 = vmul.f32 %v751, %v753
      %v757 = vmul.f32 %v751, %v754
      %v758 = vmul.f32 %v751, %v755
      %v759 = vadd.f32 %v727, %v756
      %v760 = vadd.f32 %v728, %v757
      %v761 = vadd.f32 %v729, %v758
      %762 = vset.pattern.permute.xlu0 15
      %763 = vperm.xlu0 %762, %v293
      %v764 = vpop.permute.xlu0 %763
      %v766 = vperm.slane %v747, 1
      %v767 = vperm.slane %v746, 1
      %v768 = vperm.slane %v748, 1
      %v769 = vmul.f32 %v764, %v766
      %v770 = vmul.f32 %v764, %v767
      %v771 = vmul.f32 %v764, %v768
      %v772 = vadd.f32 %v759, %v769
      %v773 = vadd.f32 %v760, %v770
      %v774 = vadd.f32 %v761, %v771
      %775 = vset.pattern.permute.xlu0 24
      %776 = vperm.xlu0 %775, %v293
      %v777 = vpop.permute.xlu0 %776
      %v779 = vperm.slane %v747, 2
      %v780 = vperm.slane %v746, 2
      %v781 = vperm.slane %v748, 2
      %v782 = vmul.f32 %v777, %v779
      %v783 = vmul.f32 %v777, %v780
      %v784 = vmul.f32 %v777, %v781
      %v785 = vadd.f32 %v772, %v782
      %v786 = vadd.f32 %v773, %v783
      %v787 = vadd.f32 %v774, %v784
      %788 = vset.pattern.permute.xlu0 33
      %789 = vperm.xlu0 %788, %v293
      %v790 = vpop.permute.xlu0 %789
      %v792 = vperm.slane %v747, 3
      %v793 = vperm.slane %v746, 3
      %v794 = vperm.slane %v748, 3
      %v795 = vmul.f32 %v790, %v792
      %v796 = vmul.f32 %v790, %v793
      %v797 = vmul.f32 %v790, %v794
      %v798 = vadd.f32 %v785, %v795
      %v799 = vadd.f32 %v786, %v796
      %v800 = vadd.f32 %v787, %v797
      %801 = vst [vmem:[#allocation1] ss:$2 sm:$0xff] %v291
      %s802 = scalar_lea.vmem [#allocation1], 16
      %803 = vst [vmem:[%s802] ss:$2 sm:$0xff] %v292
      %v804 = vld.sshfl [vmem:[#allocation1] sm:$0xff pattern:$0x75316420]
      %v805 = vld.sshfl [vmem:[#allocation1 + $0x8] sm:$0xff pattern:$0x75316420]
      %v806 = vld.sshfl [vmem:[#allocation1 + $0x10] sm:$0xff pattern:$0x75316420]
      %810 = vrot.lane.b32.xlu0 %v804, 110
      %v811 = vpop.permute.xlu0 %810
      %812 = vrot.lane.b32.xlu0 %v805, 110
      %v813 = vpop.permute.xlu0 %812
      %814 = vrot.lane.b32.xlu0 %v806, 110
      %v815 = vpop.permute.xlu0 %814
      %vm816 = vcmp.lt.s32.totalorder %v312, 110
      %v817 = vsel %vm816, %v813, %v815
      %v818 = vsel %vm816, %v811, %v813
      %v819 = vsel %vm816, %v815, %v811
      %820 = vset.pattern.permute.xlu0 7
      %821 = vperm.xlu0 %820, %v293
      %v822 = vpop.permute.xlu0 %821
      %v824 = vperm.slane %v818, 0
      %v825 = vperm.slane %v817, 0
      %v826 = vperm.slane %v819, 0
      %v827 = vmul.f32 %v822, %v824
      %v828 = vmul.f32 %v822, %v825
      %v829 = vmul.f32 %v822, %v826
      %v830 = vadd.f32 %v798, %v827
      %v831 = vadd.f32 %v799, %v828
      %v832 = vadd.f32 %v800, %v829
      %833 = vset.pattern.permute.xlu0 16
      %834 = vperm.xlu0 %833, %v293
      %v835 = vpop.permute.xlu0 %834
      %v837 = vperm.slane %v818, 1
      %v838 = vperm.slane %v817, 1
      %v839 = vperm.slane %v819, 1
      %v840 = vmul.f32 %v835, %v837
      %v841 = vmul.f32 %v835, %v838
      %v842 = vmul.f32 %v835, %v839
      %v843 = vadd.f32 %v830, %v840
      %v844 = vadd.f32 %v831, %v841
      %v845 = vadd.f32 %v832, %v842
      %846 = vset.pattern.permute.xlu0 25
      %847 = vperm.xlu0 %846, %v293
      %v848 = vpop.permute.xlu0 %847
      %v850 = vperm.slane %v818, 2
      %v851 = vperm.slane %v817, 2
      %v852 = vperm.slane %v819, 2
      %v853 = vmul.f32 %v848, %v850
      %v854 = vmul.f32 %v848, %v851
      %v855 = vmul.f32 %v848, %v852
      %v856 = vadd.f32 %v843, %v853
      %v857 = vadd.f32 %v844, %v854
      %v858 = vadd.f32 %v845, %v855
      %859 = vset.pattern.permute.xlu0 34
      %860 = vperm.xlu0 %859, %v293
      %v861 = vpop.permute.xlu0 %860
      %v863 = vperm.slane %v818, 3
      %v864 = vperm.slane %v817, 3
      %v865 = vperm.slane %v819, 3
      %v866 = vmul.f32 %v861, %v863
      %v867 = vmul.f32 %v861, %v864
      %v868 = vmul.f32 %v861, %v865
      %v869 = vadd.f32 %v856, %v866
      %v870 = vadd.f32 %v857, %v867
      %v871 = vadd.f32 %v858, %v868
      %872 = vst [vmem:[#allocation1] ss:$2 sm:$0xff] %v291
      %s873 = scalar_lea.vmem [#allocation1], 16
      %874 = vst [vmem:[%s873] ss:$2 sm:$0xff] %v292
      %v875 = vld.sshfl [vmem:[#allocation1] sm:$0xff pattern:$0x75316420]
      %v876 = vld.sshfl [vmem:[#allocation1 + $0x8] sm:$0xff pattern:$0x75316420]
      %v877 = vld.sshfl [vmem:[#allocation1 + $0x10] sm:$0xff pattern:$0x75316420]
      %881 = vrot.lane.b32.xlu0 %v875, 109
      %v882 = vpop.permute.xlu0 %881
      %883 = vrot.lane.b32.xlu0 %v876, 109
      %v884 = vpop.permute.xlu0 %883
      %885 = vrot.lane.b32.xlu0 %v877, 109
      %v886 = vpop.permute.xlu0 %885
      %vm887 = vcmp.lt.s32.totalorder %v312, 109
      %v888 = vsel %vm887, %v884, %v886
      %v889 = vsel %vm887, %v882, %v884
      %v890 = vsel %vm887, %v886, %v882
      %891 = vset.pattern.permute.xlu0 8
      %892 = vperm.xlu0 %891, %v293
      %v893 = vpop.permute.xlu0 %892
      %v895 = vperm.slane %v889, 0
      %v896 = vperm.slane %v888, 0
      %v897 = vperm.slane %v890, 0
      %v898 = vmul.f32 %v893, %v895
      %v899 = vmul.f32 %v893, %v896
      %v900 = vmul.f32 %v893, %v897
      %v901 = vadd.f32 %v869, %v898
      %v902 = vadd.f32 %v870, %v899
      %v903 = vadd.f32 %v871, %v900
      %904 = vset.pattern.permute.xlu0 17
      %905 = vperm.xlu0 %904, %v293
      %v906 = vpop.permute.xlu0 %905
      %v908 = vperm.slane %v889, 1
      %v909 = vperm.slane %v888, 1
      %v910 = vperm.slane %v890, 1
      %v911 = vmul.f32 %v906, %v908
      %v912 = vmul.f32 %v906, %v909
      %v913 = vmul.f32 %v906, %v910
      %v914 = vadd.f32 %v901, %v911
      %v915 = vadd.f32 %v902, %v912
      %v916 = vadd.f32 %v903, %v913
      %917 = vset.pattern.permute.xlu0 26
      %918 = vperm.xlu0 %917, %v293
      %v919 = vpop.permute.xlu0 %918
      %v921 = vperm.slane %v889, 2
      %v922 = vperm.slane %v888, 2
      %v923 = vperm.slane %v890, 2
      %v924 = vmul.f32 %v919, %v921
      %v925 = vmul.f32 %v919, %v922
      %v926 = vmul.f32 %v919, %v923
      %v927 = vadd.f32 %v914, %v924
      %v928 = vadd.f32 %v915, %v925
      %v929 = vadd.f32 %v916, %v926
      %930 = vset.pattern.permute.xlu0 35
      %931 = vperm.xlu0 %930, %v293
      %v932 = vpop.permute.xlu0 %931
      %v934 = vperm.slane %v889, 3
      %v935 = vperm.slane %v888, 3
      %v936 = vperm.slane %v890, 3
      %v937 = vmul.f32 %v932, %v934
      %v938 = vmul.f32 %v932, %v935
      %v939 = vmul.f32 %v932, %v936
      %v940 = vadd.f32 %v927, %v937
      %v941 = vadd.f32 %v928, %v938
      %v942 = vadd.f32 %v929, %v939
      %v943 = vld [vmem:[%s4] sm:$0xff]
      %945 = vset.pattern.permute.xlu0 0
      %946 = vperm.xlu0 %945, %v943
      %v947 = vpop.permute.xlu0 %946
      %v949 = vadd.f32 %v940, %v947
      %v950 = vadd.f32 %v941, %v947
      %v951 = vadd.f32 %v942, %v947
      %v953 = vperm.slane %v290, 0
      %v954 = vperm.slane %v290, 1
      %v955 = vperm.slane %v290, 2
      %v959 = vmul.f32 %v949, %v953
      %v960 = vmul.f32 %v950, %v954
      %v961 = vmul.f32 %v951, %v955
      %962 = vst [vmem:[%s285] sm:$0xff] %v959
      %963 = vst [vmem:[%s285 + $0x8] sm:$0xff] %v960
      %964 = vst [vmem:[%s285 + $0x10] sm:$0xff] %v961
      %v965 = vadd.f32 %v959, %v960
      %v966 = vadd.f32 %v965, %v961
      %967 = vadd.xlane.f32.xlu0 %v966
      %v968 = vpop.xlane.xlu0 %967
      %vm969 = vcmask 7168
      %970 = vst.msk [vmem:[%s289] sm:$0xff] %vm969, %v968
      %v971 = vmul.f32 %v959, %v959
      %v972 = vmul.f32 %v960, %v960
      %v973 = vmul.f32 %v961, %v961
      %v974 = vadd.f32 %v971, %v972
      %v975 = vadd.f32 %v974, %v973
      %976 = vadd.xlane.f32.xlu0 %v975
      %v977 = vpop.xlane.xlu0 %976
      %vm978 = vcmask 15368
      %979 = vst.msk [vmem:[%s289] sm:$0xff] %vm978, %v977
      %p980 = scmp.lt.s32.totalorder %s19, 1
      %s981 = scalar_select %p980, %s19, 1
      %s982 = smul.addr %s981, 3
      %s983 = smul.addr %s982, 8
      %s984 = scalar_lea.vmem %s6, %s983
      %p985 = scmp.lt.s32.totalorder %s19, 1
      %s986 = scalar_select %p985, %s19, 1
      %s987 = smul.addr %s986, 8
      %s988 = scalar_lea.vmem %s7, %s987
      // Predicated region
      $region45: #{conv_relu_forward.2} parent=43 // pred_check
        %p989 = pneg %p168
      $region46: #{conv_relu_forward.2} parent=43 // pred_check_branch
        %991 = sbr.rel (%p989) target = $region48
      $region47: #{conv_relu_forward.2} parent=43 // pred_region
        _
      $region48: #{conv_relu_forward.2} parent=43 // pred_fallthru
        _
      // Predicated region
      $region49: #{conv_relu_forward.2} parent=43 // pred_check
        %p992 = pneg %p194
      $region50: #{conv_relu_forward.2} parent=43 // pred_check_branch
        %994 = sbr.rel (%p992) target = $region52
      $region51: #{conv_relu_forward.2} parent=43 // pred_region
        _
      $region52: #{conv_relu_forward.2} parent=43 // pred_fallthru
        _
    $region44: #{conv_relu_forward.2} parent=5 // pred_fallthru
      _
    %p995 = scmp.le.s32.totalorder 2, %s14
    // Predicated region
    $region53: #{conv_relu_forward.2} parent=5 // pred_check
      %p996 = pneg %p995
    $region54: #{conv_relu_forward.2} parent=5 // pred_check_branch
      %998 = sbr.rel (%p996) target = $region56
    $region55: #{conv_relu_forward.2} parent=5 // pred_region
      %s999 = ssub.s32 %s14, 2
      // Predicated region
      $region57: #{conv_relu_forward.2} parent=55 // pred_check
        %p1000 = pneg %p174
      $region58: #{conv_relu_forward.2} parent=55 // pred_check_branch
        %1002 = sbr.rel (%p1000) target = $region60
      $region59: #{conv_relu_forward.2} parent=55 // pred_region
        %p1003 = scmp.lt.s32.totalorder %s20, 1
        %s1004 = scalar_select %p1003, %s20, 1
        %s1005 = smul.addr %s1004, 3
        %s1006 = smul.addr %s1005, 8
        %s1007 = scalar_lea.vmem %s6, %s1006
      $region60: #{conv_relu_forward.2} parent=55 // pred_fallthru
        _
      // Predicated region
      $region61: #{conv_relu_forward.2} parent=55 // pred_check
        %p1008 = pneg %p200
      $region62: #{conv_relu_forward.2} parent=55 // pred_check_branch
        %1010 = sbr.rel (%p1008) target = $region64
      $region63: #{conv_relu_forward.2} parent=55 // pred_region
        %p1011 = scmp.lt.s32.totalorder %s20, 1
        %s1012 = scalar_select %p1011, %s20, 1
        %s1013 = smul.addr %s1012, 8
        %s1014 = scalar_lea.vmem %s7, %s1013
      $region64: #{conv_relu_forward.2} parent=55 // pred_fallthru
        _
    $region56: #{conv_relu_forward.2} parent=5 // pred_fallthru
      _
  $region6: #{conv_relu_forward.2} parent=0 // loop_footer
    %s18 = sadd.s32 1, %s14
  $region7: #{conv_relu_forward.2} parent=0 // loop_footer_branch
    %13 = sbr.rel target = $region3
  $region8: #{conv_relu_forward.2} parent=0 // loop_exit
    _

// kernel: conv_relu_forward.3
$region0: #{conv_relu_forward.3}
  #allocation0 [shape = 'u32[]', space=smem, size = 0x4, offset = 0x4, fixed_abs, tag = 'smem constant byte address 0x4 - core index']
  #allocation1 [shape = 'u32[72,128]{1,0:T(1,128)}', space=vmem, size = 0x9000, scoped, tag = 'internal scratch']
  %s0 = inlined_call_operand.vmem [shape: f32[2,8,384], index: 0, kind: input, shape index: {}]
  %s1 = inlined_call_operand.vmem [shape: f32[8,1], index: 1, kind: input, shape index: {}]
  %s2 = inlined_call_operand.vmem [shape: f32[8,1], index: 2, kind: input, shape index: {}]
  %s3 = inlined_call_operand.vmem [shape: f32[8,72], index: 3, kind: input, shape index: {}]
  %s4 = inlined_call_operand.vmem [shape: f32[8,1], index: 4, kind: input, shape index: {}]
  %s5 = inlined_call_operand.vmem [shape: f32[1,384], index: 5, kind: input, shape index: {}]
  %s6 = inlined_call_operand.vmem [shape: f32[2,8,384], index: 6, kind: output, shape index: {0}]
  %s7 = inlined_call_operand.vmem [shape: f32[2,8,2], index: 7, kind: output, shape index: {1}]
  %8 = xla_tuple %s6, %s7
  %s9 = sld [smem:[#allocation0]]
  $region65: #{conv_relu_forward.3} parent=0
    _
  %s11 = ssub.s32 1, %s9
  %s12 = scalar_select 0, %s11, %s9
  loop: start=0, step=1, limit=4
  $region2: #{conv_relu_forward.3} parent=0 // loop_pre_header
    _
  $region3: #{conv_relu_forward.3} parent=0 // loop_header
    %s14 = sphi 0, %s18
    %p15 = scmp.ge.s32.totalorder %s14, 4
    %s24 = sphi 0, %s26
    %s27 = sphi 0, %s24
    %s28 = sphi 0, %s27
    %s44 = sphi 0, %s28
    %s48 = sphi 0, %s48
    %s50 = sphi 0, %s48
    %s51 = sphi 0, %s50
    %s65 = sphi 0, %s51
    %s69 = sphi 0, %s69
    %s71 = sphi 0, %s69
    %s72 = sphi 0, %s71
    %s86 = sphi 0, %s72
    %s90 = sphi 0, %s90
    %s92 = sphi 0, %s90
    %s93 = sphi 0, %s92
    %s107 = sphi 0, %s93
    %s111 = sphi 0, %s111
    %s113 = sphi 0, %s111
    %s114 = sphi 0, %s113
    %s128 = sphi 0, %s114
    %s132 = sphi 0, %s132
    %s134 = sphi 0, %s132
    %s135 = sphi 0, %s134
    %s149 = sphi 0, %s135
    %s155 = sphi 0, %s157
    %s158 = sphi 0, %s155
    %s159 = sphi 0, %s158
    %s175 = sphi 0, %s159
    %s181 = sphi 0, %s183
    %s184 = sphi 0, %s181
    %s185 = sphi 0, %s184
    %s201 = sphi 0, %s185
  $region4: #{conv_relu_forward.3} parent=0 // loop_header_branch
    %17 = sbr.rel (%p15) target = $region8
  $region5: #{conv_relu_forward.3} parent=0 // loop_body
    %s19 = ssub.s32 %s14, 1
    %s20 = ssub.s32 %s14, 2
    %s21 = sadd.s32 %s14, 1
    %s22 = ssub.s32 %s14, %s21
    %p23 = scmp.eq.s32.totalorder %s22, 0
    %s25 = sadd.s32 %s24, 1
    %s26 = scalar_select %p23, %s24, %s25
    %p29 = pneg %p23
    %p30 = scmp.eq.s32.totalorder %s14, 1
    %p31 = por %p29, %p30
    %p32 = scmp.ne.s32.totalorder %s24, %s27
    %p33 = scmp.eq.s32.totalorder %s14, 0
    %p34 = por %p32, %p33
    %p35 = scmp.ne.s32.totalorder %s24, %s27
    %p36 = scmp.eq.s32.totalorder %s19, 1
    %p37 = por %p35, %p36
    %p38 = scmp.ne.s32.totalorder %s27, %s28
    %p39 = scmp.eq.s32.totalorder %s19, 0
    %p40 = por %p38, %p39
    %p41 = scmp.ne.s32.totalorder %s27, %s28
    %p42 = scmp.eq.s32.totalorder %s20, 1
    %p43 = por %p41, %p42
    %p45 = scmp.ne.s32.totalorder %s28, %s44
    %p46 = scmp.eq.s32.totalorder %s20, 0
    %p47 = por %p45, %p46
    %s49 = sadd.s32 %s48, 1
    %p52 = scmp.eq.s32.totalorder %s14, 1
    %p53 = scmp.ne.s32.totalorder %s48, %s50
    %p54 = scmp.eq.s32.totalorder %s14, 0
    %p55 = por %p53, %p54
    %p56 = scmp.ne.s32.totalorder %s48, %s50
    %p57 = scmp.eq.s32.totalorder %s19, 1
    %p58 = por %p56, %p57
    %p59 = scmp.ne.s32.totalorder %s50, %s51
    %p60 = scmp.eq.s32.totalorder %s19, 0
    %p61 = por %p59, %p60
    %p62 = scmp.ne.s32.totalorder %s50, %s51
    %p63 = scmp.eq.s32.totalorder %s20, 1
    %p64 = por %p62, %p63
    %p66 = scmp.ne.s32.totalorder %s51, %s65
    %p67 = scmp.eq.s32.totalorder %s20, 0
    %p68 = por %p66, %p67
    %s70 = sadd.s32 %s69, 1
    %p73 = scmp.eq.s32.totalorder %s14, 1
    %p74 = scmp.ne.s32.totalorder %s69, %s71
    %p75 = scmp.eq.s32.totalorder %s14, 0
    %p76 = por %p74, %p75
    %p77 = scmp.ne.s32.totalorder %s69, %s71
    %p78 = scmp.eq.s32.totalorder %s19, 1
    %p79 = por %p77, %p78
    %p80 = scmp.ne.s32.totalorder %s71, %s72
    %p81 = scmp.eq.s32.totalorder %s19, 0
    %p82 = por %p80, %p81
    %p83 = scmp.ne.s32.totalorder %s71, %s72
    %p84 = scmp.eq.s32.totalorder %s20, 1
    %p85 = por %p83, %p84
    %p87 = scmp.ne.s32.totalorder %s72, %s86
    %p88 = scmp.eq.s32.totalorder %s20, 0
    %p89 = por %p87, %p88
    %s91 = sadd.s32 %s90, 1
    %p94 = scmp.eq.s32.totalorder %s14, 1
    %p95 = scmp.ne.s32.totalorder %s90, %s92
    %p96 = scmp.eq.s32.totalorder %s14, 0
    %p97 = por %p95, %p96
    %p98 = scmp.ne.s32.totalorder %s90, %s92
    %p99 = scmp.eq.s32.totalorder %s19, 1
    %p100 = por %p98, %p99
    %p101 = scmp.ne.s32.totalorder %s92, %s93
    %p102 = scmp.eq.s32.totalorder %s19, 0
    %p103 = por %p101, %p102
    %p104 = scmp.ne.s32.totalorder %s92, %s93
    %p105 = scmp.eq.s32.totalorder %s20, 1
    %p106 = por %p104, %p105
    %p108 = scmp.ne.s32.totalorder %s93, %s107
    %p109 = scmp.eq.s32.totalorder %s20, 0
    %p110 = por %p108, %p109
    %s112 = sadd.s32 %s111, 1
    %p115 = scmp.eq.s32.totalorder %s14, 1
    %p116 = scmp.ne.s32.totalorder %s111, %s113
    %p117 = scmp.eq.s32.totalorder %s14, 0
    %p118 = por %p116, %p117
    %p119 = scmp.ne.s32.totalorder %s111, %s113
    %p120 = scmp.eq.s32.totalorder %s19, 1
    %p121 = por %p119, %p120
    %p122 = scmp.ne.s32.totalorder %s113, %s114
    %p123 = scmp.eq.s32.totalorder %s19, 0
    %p124 = por %p122, %p123
    %p125 = scmp.ne.s32.totalorder %s113, %s114
    %p126 = scmp.eq.s32.totalorder %s20, 1
    %p127 = por %p125, %p126
    %p129 = scmp.ne.s32.totalorder %s114, %s128
    %p130 = scmp.eq.s32.totalorder %s20, 0
    %p131 = por %p129, %p130
    %s133 = sadd.s32 %s132, 1
    %p136 = scmp.eq.s32.totalorder %s14, 1
    %p137 = scmp.ne.s32.totalorder %s132, %s134
    %p138 = scmp.eq.s32.totalorder %s14, 0
    %p139 = por %p137, %p138
    %p140 = scmp.ne.s32.totalorder %s132, %s134
    %p141 = scmp.eq.s32.totalorder %s19, 1
    %p142 = por %p140, %p141
    %p143 = scmp.ne.s32.totalorder %s134, %s135
    %p144 = scmp.eq.s32.totalorder %s19, 0
    %p145 = por %p143, %p144
    %p146 = scmp.ne.s32.totalorder %s134, %s135
    %p147 = scmp.eq.s32.totalorder %s20, 1
    %p148 = por %p146, %p147
    %p150 = scmp.ne.s32.totalorder %s135, %s149
    %p151 = scmp.eq.s32.totalorder %s20, 0
    %p152 = por %p150, %p151
    %s153 = ssub.s32 %s14, %s21
    %p154 = scmp.eq.s32.totalorder %s153, 0
    %s156 = sadd.s32 %s155, 1
    %s157 = scalar_select %p154, %s155, %s156
    %p160 = pneg %p154
    %p161 = scmp.eq.s32.totalorder %s14, 1
    %p162 = por %p160, %p161
    %p163 = scmp.ne.s32.totalorder %s155, %s158
    %p164 = scmp.eq.s32.totalorder %s14, 0
    %p165 = por %p163, %p164
    %p166 = scmp.ne.s32.totalorder %s155, %s158
    %p167 = scmp.eq.s32.totalorder %s19, 1
    %p168 = por %p166, %p167
    %p169 = scmp.ne.s32.totalorder %s158, %s159
    %p170 = scmp.eq.s32.totalorder %s19, 0
    %p171 = por %p169, %p170
    %p172 = scmp.ne.s32.totalorder %s158, %s159
    %p173 = scmp.eq.s32.totalorder %s20, 1
    %p174 = por %p172, %p173
    %p176 = scmp.ne.s32.totalorder %s159, %s175
    %p177 = scmp.eq.s32.totalorder %s20, 0
    %p178 = por %p176, %p177
    %s179 = ssub.s32 %s14, %s21
    %p180 = scmp.eq.s32.totalorder %s179, 0
    %s182 = sadd.s32 %s181, 1
    %s183 = scalar_select %p180, %s181, %s182
    %p186 = pneg %p180
    %p187 = scmp.eq.s32.totalorder %s14, 1
    %p188 = por %p186, %p187
    %p189 = scmp.ne.s32.totalorder %s181, %s184
    %p190 = scmp.eq.s32.totalorder %s14, 0
    %p191 = por %p189, %p190
    %p192 = scmp.ne.s32.totalorder %s181, %s184
    %p193 = scmp.eq.s32.totalorder %s19, 1
    %p194 = por %p192, %p193
    %p195 = scmp.ne.s32.totalorder %s184, %s185
    %p196 = scmp.eq.s32.totalorder %s19, 0
    %p197 = por %p195, %p196
    %p198 = scmp.ne.s32.totalorder %s184, %s185
    %p199 = scmp.eq.s32.totalorder %s20, 1
    %p200 = por %p198, %p199
    %p202 = scmp.ne.s32.totalorder %s185, %s201
    %p203 = scmp.eq.s32.totalorder %s20, 0
    %p204 = por %p202, %p203
    %p205 = scmp.le.s32.totalorder 1, %s14
    %p206 = scmp.lt.s32.totalorder %s14, 3
    %p207 = pnand %p205, %p206
    %p208 = pneg %p207
    // Predicated region
    $region9: #{conv_relu_forward.3} parent=5 // pred_check
      _
    $region10: #{conv_relu_forward.3} parent=5 // pred_check_branch
      %210 = sbr.rel (%p207) target = $region12
    $region11: #{conv_relu_forward.3} parent=5 // pred_region
      %s211 = ssub.s32 %s14, 1
      // Predicated region
      $region13: #{conv_relu_forward.3} parent=11 // pred_check
        %p212 = pneg %p61
      $region14: #{conv_relu_forward.3} parent=11 // pred_check_branch
        %214 = sbr.rel (%p212) target = $region16
      $region15: #{conv_relu_forward.3} parent=11 // pred_region
        _
      $region16: #{conv_relu_forward.3} parent=11 // pred_fallthru
        _
      // Predicated region
      $region17: #{conv_relu_forward.3} parent=11 // pred_check
        %p215 = pneg %p82
      $region18: #{conv_relu_forward.3} parent=11 // pred_check_branch
        %217 = sbr.rel (%p215) target = $region20
      $region19: #{conv_relu_forward.3} parent=11 // pred_region
        _
      $region20: #{conv_relu_forward.3} parent=11 // pred_fallthru
        _
      // Predicated region
      $region21: #{conv_relu_forward.3} parent=11 // pred_check
        %p218 = pneg %p103
      $region22: #{conv_relu_forward.3} parent=11 // pred_check_branch
        %220 = sbr.rel (%p218) target = $region24
      $region23: #{conv_relu_forward.3} parent=11 // pred_region
        _
      $region24: #{conv_relu_forward.3} parent=11 // pred_fallthru
        _
      // Predicated region
      $region25: #{conv_relu_forward.3} parent=11 // pred_check
        %p221 = pneg %p124
      $region26: #{conv_relu_forward.3} parent=11 // pred_check_branch
        %223 = sbr.rel (%p221) target = $region28
      $region27: #{conv_relu_forward.3} parent=11 // pred_region
        _
      $region28: #{conv_relu_forward.3} parent=11 // pred_fallthru
        _
      // Predicated region
      $region29: #{conv_relu_forward.3} parent=11 // pred_check
        %p224 = pneg %p145
      $region30: #{conv_relu_forward.3} parent=11 // pred_check_branch
        %226 = sbr.rel (%p224) target = $region32
      $region31: #{conv_relu_forward.3} parent=11 // pred_region
        _
      $region32: #{conv_relu_forward.3} parent=11 // pred_fallthru
        _
    $region12: #{conv_relu_forward.3} parent=5 // pred_fallthru
      _
    %p227 = scmp.lt.s32.totalorder %s14, 2
    // Predicated region
    $region33: #{conv_relu_forward.3} parent=5 // pred_check
      %p228 = pneg %p227
    $region34: #{conv_relu_forward.3} parent=5 // pred_check_branch
      %230 = sbr.rel (%p228) target = $region36
    $region35: #{conv_relu_forward.3} parent=5 // pred_region
      // Predicated region
      $region37: #{conv_relu_forward.3} parent=35 // pred_check
        %p231 = pneg %p34
      $region38: #{conv_relu_forward.3} parent=35 // pred_check_branch
        %233 = sbr.rel (%p231) target = $region40
      $region39: #{conv_relu_forward.3} parent=35 // pred_region
        %p234 = scmp.lt.s32.totalorder %s14, 1
        %s235 = scalar_select %p234, %s14, 1
        %s236 = smul.addr %s235, 3
        %s237 = smul.addr %s236, 8
        %s238 = scalar_lea.vmem %s0, %s237
      $region40: #{conv_relu_forward.3} parent=35 // pred_fallthru
        _
    $region36: #{conv_relu_forward.3} parent=5 // pred_fallthru
      _
    %p239 = scmp.le.s32.totalorder 1, %s14
    %p240 = scmp.lt.s32.totalorder %s14, 3
    %p241 = pnand %p239, %p240
    %p242 = pneg %p241
    // Predicated region
    $region41: #{conv_relu_forward.3} parent=5 // pred_check
      _
    $region42: #{conv_relu_forward.3} parent=5 // pred_check_branch
      %244 = sbr.rel (%p241) target = $region44
    $region43: #{conv_relu_forward.3} parent=5 // pred_region
      %s245 = ssub.s32 %s14, 1
      %p246 = scmp.lt.s32.totalorder %s19, 1
      %s247 = scalar_select %p246, %s19, 1
      %s248 = smul.addr %s247, 3
      %s249 = smul.addr %s248, 8
      %s250 = scalar_lea.vmem %s0, %s249
      %p251 = pneg %p40
      %p252 = pneg %p37
      %p253 = pneg %p61
      %p254 = pneg %p58
      %p255 = pneg %p82
      %p256 = pneg %p79
      %p257 = pneg %p103
      %p258 = pneg %p100
      %p259 = pneg %p124
      %p260 = pneg %p121
      %p261 = pneg %p145
      %p262 = pneg %p142
      %p263 = pneg %p171
      %p264 = pneg %p168
      %p265 = scmp.lt.s32.totalorder %s19, 1
      %s266 = scalar_select %p265, %s19, 1
      %s267 = smul.addr %s266, 3
      %s268 = smul.addr %s267, 8
      %s269 = scalar_lea.vmem %s6, %s268
      %p270 = pneg %p197
      %p271 = pneg %p194
      %p272 = scmp.lt.s32.totalorder %s19, 1
      %s273 = scalar_select %p272, %s19, 1
      %s274 = smul.addr %s273, 8
      %s275 = scalar_lea.vmem %s7, %s274
      %p276 = scmp.lt.s32.totalorder %s19, 1
      %s277 = scalar_select %p276, %s19, 1
      %s278 = smul.addr %s277, 3
      %s279 = smul.addr %s278, 8
      %s280 = scalar_lea.vmem %s0, %s279
      %p281 = scmp.lt.s32.totalorder %s19, 1
      %s282 = scalar_select %p281, %s19, 1
      %s283 = smul.addr %s282, 3
      %s284 = smul.addr %s283, 8
      %s285 = scalar_lea.vmem %s6, %s284
      %p286 = scmp.lt.s32.totalorder %s19, 1
      %s287 = scalar_select %p286, %s19, 1
      %s288 = smul.addr %s287, 8
      %s289 = scalar_lea.vmem %s7, %s288
      %v290 = vld [vmem:[%s5] sm:$0x7]
      %v291 = vld [vmem:[%s280] sm:$0xff]
      %v292 = vld [vmem:[%s280 + $0x8] sm:$0xff]
      %v293 = vld [vmem:[%s280 + $0x10] sm:$0xff]
      %v294 = vld [vmem:[%s1] sm:$0xff]
      %296 = vset.pattern.permute.xlu0 0
      %297 = vperm.xlu0 %296, %v294
      %v298 = vpop.permute.xlu0 %297
      %v300 = vmul.f32 %v291, %v298
      %v301 = vmul.f32 %v292, %v298
      %v302 = vmul.f32 %v293, %v298
      %v303 = vld [vmem:[%s2] sm:$0xff]
      %305 = vset.pattern.permute.xlu0 0
      %306 = vperm.xlu0 %305, %v303
      %v307 = vpop.permute.xlu0 %306
      %v309 = vadd.f32 %v300, %v307
      %v310 = vadd.f32 %v301, %v307
      %v311 = vadd.f32 %v302, %v307
      %v312 = vmax.f32 %v309, 0.0
      %v313 = vmax.f32 %v310, 0.0
      %v314 = vmax.f32 %v311, 0.0
      %v316 = vperm.slane %v290, 0
      %v317 = vperm.slane %v290, 1
      %v318 = vperm.slane %v290, 2
      %v322 = vmul.f32 %v312, %v316
      %v323 = vmul.f32 %v313, %v317
      %v324 = vmul.f32 %v314, %v318
      %v325 = vld [vmem:[%s3] sm:$0xff]
      %326 = vrot.lane.b32.xlu0 %v322, 19
      %v327 = vpop.permute.xlu0 %326
      %328 = vrot.lane.b32.xlu0 %v323, 19
      %v329 = vpop.permute.xlu0 %328
      %330 = vrot.lane.b32.xlu0 %v324, 19
      %v331 = vpop.permute.xlu0 %330
      %v332 = vlaneseq
      %v333 = vand.u32 %v332, 127
      %vm334 = vcmp.lt.s32.totalorder %v333, 19
      %v335 = vsel %vm334, %v329, %v331
      %v336 = vsel %vm334, %v327, %v329
      %v337 = vsel %vm334, %v331, %v327
      %339 = vset.pattern.permute.xlu0 0
      %340 = vperm.xlu0 %339, %v325
      %v341 = vpop.permute.xlu0 %340
      %v343 = vperm.slane %v337, 0
      %v344 = vperm.slane %v336, 0
      %v345 = vperm.slane %v335, 0
      %v346 = vmul.f32 %v341, %v343
      %v347 = vmul.f32 %v341, %v344
      %v348 = vmul.f32 %v341, %v345
      %v349 = vadd.f32 %v346, 0.0
      %v350 = vadd.f32 %v347, 0.0
      %v351 = vadd.f32 %v348, 0.0
      %352 = vset.pattern.permute.xlu0 9
      %353 = vperm.xlu0 %352, %v325
      %v354 = vpop.permute.xlu0 %353
      %v356 = vperm.slane %v337, 1
      %v357 = vperm.slane %v336, 1
      %v358 = vperm.slane %v335, 1
      %v359 = vmul.f32 %v354, %v356
      %v360 = vmul.f32 %v354, %v357
      %v361 = vmul.f32 %v354, %v358
      %v362 = vadd.f32 %v349, %v359
      %v363 = vadd.f32 %v350, %v360
      %v364 = vadd.f32 %v351, %v361
      %365 = vset.pattern.permute.xlu0 18
      %366 = vperm.xlu0 %365, %v325
      %v367 = vpop.permute.xlu0 %366
      %v369 = vperm.slane %v337, 2
      %v370 = vperm.slane %v336, 2
      %v371 = vperm.slane %v335, 2
      %v372 = vmul.f32 %v367, %v369
      %v373 = vmul.f32 %v367, %v370
      %v374 = vmul.f32 %v367, %v371
      %v375 = vadd.f32 %v362, %v372
      %v376 = vadd.f32 %v363, %v373
      %v377 = vadd.f32 %v364, %v374
      %378 = vset.pattern.permute.xlu0 27
      %379 = vperm.xlu0 %378, %v325
      %v380 = vpop.permute.xlu0 %379
      %v382 = vperm.slane %v337, 3
      %v383 = vperm.slane %v336, 3
      %v384 = vperm.slane %v335, 3
      %v385 = vmul.f32 %v380, %v382
      %v386 = vmul.f32 %v380, %v383
      %v387 = vmul.f32 %v380, %v384
      %v388 = vadd.f32 %v375, %v385
      %v389 = vadd.f32 %v376, %v386
      %v390 = vadd.f32 %v377, %v387
      %391 = vset.pattern.permute.xlu0 36
      %392 = vperm.xlu0 %391, %v325
      %v393 = vpop.permute.xlu0 %392
      %v395 = vperm.slane %v337, 4
      %v396 = vperm.slane %v336, 4
      %v397 = vperm.slane %v335, 4
      %v398 = vmul.f32 %v393, %v395
      %v399 = vmul.f32 %v393, %v396
      %v400 = vmul.f32 %v393, %v397
      %v401 = vadd.f32 %v388, %v398
      %v402 = vadd.f32 %v389, %v399
      %v403 = vadd.f32 %v390, %v400
      %404 = vset.pattern.permute.xlu0 45
      %405 = vperm.xlu0 %404, %v325
      %v406 = vpop.permute.xlu0 %405
      %v408 = vperm.slane %v337, 5
      %v409 = vperm.slane %v336, 5
      %v410 = vperm.slane %v335, 5
      %v411 = vmul.f32 %v406, %v408
      %v412 = vmul.f32 %v406, %v409
      %v413 = vmul.f32 %v406, %v410
      %v414 = vadd.f32 %v401, %v411
      %v415 = vadd.f32 %v402, %v412
      %v416 = vadd.f32 %v403, %v413
      %417 = vset.pattern.permute.xlu0 54
      %418 = vperm.xlu0 %417, %v325
      %v419 = vpop.permute.xlu0 %418
      %v421 = vperm.slane %v337, 6
      %v422 = vperm.slane %v336, 6
      %v423 = vperm.slane %v335, 6
      %v424 = vmul.f32 %v419, %v421
      %v425 = vmul.f32 %v419, %v422
      %v426 = vmul.f32 %v419, %v423
      %v427 = vadd.f32 %v414, %v424
      %v428 = vadd.f32 %v415, %v425
      %v429 = vadd.f32 %v416, %v426
      %430 = vset.pattern.permute.xlu0 63
      %431 = vperm.xlu0 %430, %v325
      %v432 = vpop.permute.xlu0 %431
      %v434 = vperm.slane %v337, 7
      %v435 = vperm.slane %v336, 7
      %v436 = vperm.slane %v335, 7
      %v437 = vmul.f32 %v432, %v434
      %v438 = vmul.f32 %v432, %v435
      %v439 = vmul.f32 %v432, %v436
      %v440 = vadd.f32 %v427, %v437
      %v441 = vadd.f32 %v428, %v438
      %v442 = vadd.f32 %v429, %v439
      %443 = vrot.lane.b32.xlu0 %v322, 18
      %v444 = vpop.permute.xlu0 %443
      %445 = vrot.lane.b32.xlu0 %v323, 18
      %v446 = vpop.permute.xlu0 %445
      %447 = vrot.lane.b32.xlu0 %v324, 18
      %v448 = vpop.permute.xlu0 %447
      %vm449 = vcmp.lt.s32.totalorder %v333, 18
      %v450 = vsel %vm449, %v446, %v448
      %v451 = vsel %vm449, %v444, %v446
      %v452 = vsel %vm449, %v448, %v444
      %453 = vset.pattern.permute.xlu0 1
      %454 = vperm.xlu0 %453, %v325
      %v455 = vpop.permute.xlu0 %454
      %v457 = vperm.slane %v452, 0
      %v458 = vperm.slane %v451, 0
      %v459 = vperm.slane %v450, 0
      %v460 = vmul.f32 %v455, %v457
      %v461 = vmul.f32 %v455, %v458
      %v462 = vmul.f32 %v455, %v459
      %v463 = vadd.f32 %v440, %v460
      %v464 = vadd.f32 %v441, %v461
      %v465 = vadd.f32 %v442, %v462
      %466 = vset.pattern.permute.xlu0 10
      %467 = vperm.xlu0 %466, %v325
      %v468 = vpop.permute.xlu0 %467
      %v470 = vperm.slane %v452, 1
      %v471 = vperm.slane %v451, 1
      %v472 = vperm.slane %v450, 1
      %v473 = vmul.f32 %v468, %v470
      %v474 = vmul.f32 %v468, %v471
      %v475 = vmul.f32 %v468, %v472
      %v476 = vadd.f32 %v463, %v473
      %v477 = vadd.f32 %v464, %v474
      %v478 = vadd.f32 %v465, %v475
      %479 = vset.pattern.permute.xlu0 19
      %480 = vperm.xlu0 %479, %v325
      %v481 = vpop.permute.xlu0 %480
      %v483 = vperm.slane %v452, 2
      %v484 = vperm.slane %v451, 2
      %v485 = vperm.slane %v450, 2
      %v486 = vmul.f32 %v481, %v483
      %v487 = vmul.f32 %v481, %v484
      %v488 = vmul.f32 %v481, %v485
      %v489 = vadd.f32 %v476, %v486
      %v490 = vadd.f32 %v477, %v487
      %v491 = vadd.f32 %v478, %v488
      %492 = vset.pattern.permute.xlu0 28
      %493 = vperm.xlu0 %492, %v325
      %v494 = vpop.permute.xlu0 %493
      %v496 = vperm.slane %v452, 3
      %v497 = vperm.slane %v451, 3
      %v498 = vperm.slane %v450, 3
      %v499 = vmul.f32 %v494, %v496
      %v500 = vmul.f32 %v494, %v497
      %v501 = vmul.f32 %v494, %v498
      %v502 = vadd.f32 %v489, %v499
      %v503 = vadd.f32 %v490, %v500
      %v504 = vadd.f32 %v491, %v501
      %505 = vset.pattern.permute.xlu0 37
      %506 = vperm.xlu0 %505, %v325
      %v507 = vpop.permute.xlu0 %506
      %v509 = vperm.slane %v452, 4
      %v510 = vperm.slane %v451, 4
      %v511 = vperm.slane %v450, 4
      %v512 = vmul.f32 %v507, %v509
      %v513 = vmul.f32 %v507, %v510
      %v514 = vmul.f32 %v507, %v511
      %v515 = vadd.f32 %v502, %v512
      %v516 = vadd.f32 %v503, %v513
      %v517 = vadd.f32 %v504, %v514
      %518 = vset.pattern.permute.xlu0 46
      %519 = vperm.xlu0 %518, %v325
      %v520 = vpop.permute.xlu0 %519
      %v522 = vperm.slane %v452, 5
      %v523 = vperm.slane %v451, 5
      %v524 = vperm.slane %v450, 5
      %v525 = vmul.f32 %v520, %v522
      %v526 = vmul.f32 %v520, %v523
      %v527 = vmul.f32 %v520, %v524
      %v528 = vadd.f32 %v515, %v525
      %v529 = vadd.f32 %v516, %v526
      %v530 = vadd.f32 %v517, %v527
      %531 = vset.pattern.permute.xlu0 55
      %532 = vperm.xlu0 %531, %v325
      %v533 = vpop.permute.xlu0 %532
      %v535 = vperm.slane %v452, 6
      %v536 = vperm.slane %v451, 6
      %v537 = vperm.slane %v450, 6
      %v538 = vmul.f32 %v533, %v535
      %v539 = vmul.f32 %v533, %v536
      %v540 = vmul.f32 %v533, %v537
      %v541 = vadd.f32 %v528, %v538
      %v542 = vadd.f32 %v529, %v539
      %v543 = vadd.f32 %v530, %v540
      %544 = vset.pattern.permute.xlu0 64
      %545 = vperm.xlu0 %544, %v325
      %v546 = vpop.permute.xlu0 %545
      %v548 = vperm.slane %v452, 7
      %v549 = vperm.slane %v451, 7
      %v550 = vperm.slane %v450, 7
      %v551 = vmul.f32 %v546, %v548
      %v552 = vmul.f32 %v546, %v549
      %v553 = vmul.f32 %v546, %v550
      %v554 = vadd.f32 %v541, %v551
      %v555 = vadd.f32 %v542, %v552
      %v556 = vadd.f32 %v543, %v553
      %557 = vrot.lane.b32.xlu0 %v322, 17
      %v558 = vpop.permute.xlu0 %557
      %559 = vrot.lane.b32.xlu0 %v323, 17
      %v560 = vpop.permute.xlu0 %559
      %561 = vrot.lane.b32.xlu0 %v324, 17
      %v562 = vpop.permute.xlu0 %561
      %vm563 = vcmp.lt.s32.totalorder %v333, 17
      %v564 = vsel %vm563, %v560, %v562
      %v565 = vsel %vm563, %v558, %v560
      %v566 = vsel %vm563, %v562, %v558
      %567 = vset.pattern.permute.xlu0 2
      %568 = vperm.xlu0 %567, %v325
      %v569 = vpop.permute.xlu0 %568
      %v571 = vperm.slane %v566, 0
      %v572 = vperm.slane %v565, 0
      %v573 = vperm.slane %v564, 0
      %v574 = vmul.f32 %v569, %v571
      %v575 = vmul.f32 %v569, %v572
      %v576 = vmul.f32 %v569, %v573
      %v577 = vadd.f32 %v554, %v574
      %v578 = vadd.f32 %v555, %v575
      %v579 = vadd.f32 %v556, %v576
      %580 = vset.pattern.permute.xlu0 11
      %581 = vperm.xlu0 %580, %v325
      %v582 = vpop.permute.xlu0 %581
      %v584 = vperm.slane %v566, 1
      %v585 = vperm.slane %v565, 1
      %v586 = vperm.slane %v564, 1
      %v587 = vmul.f32 %v582, %v584
      %v588 = vmul.f32 %v582, %v585
      %v589 = vmul.f32 %v582, %v586
      %v590 = vadd.f32 %v577, %v587
      %v591 = vadd.f32 %v578, %v588
      %v592 = vadd.f32 %v579, %v589
      %593 = vset.pattern.permute.xlu0 20
      %594 = vperm.xlu0 %593, %v325
      %v595 = vpop.permute.xlu0 %594
      %v597 = vperm.slane %v566, 2
      %v598 = vperm.slane %v565, 2
      %v599 = vperm.slane %v564, 2
      %v600 = vmul.f32 %v595, %v597
      %v601 = vmul.f32 %v595, %v598
      %v602 = vmul.f32 %v595, %v599
      %v603 = vadd.f32 %v590, %v600
      %v604 = vadd.f32 %v591, %v601
      %v605 = vadd.f32 %v592, %v602
      %606 = vset.pattern.permute.xlu0 29
      %607 = vperm.xlu0 %606, %v325
      %v608 = vpop.permute.xlu0 %607
      %v610 = vperm.slane %v566, 3
      %v611 = vperm.slane %v565, 3
      %v612 = vperm.slane %v564, 3
      %v613 = vmul.f32 %v608, %v610
      %v614 = vmul.f32 %v608, %v611
      %v615 = vmul.f32 %v608, %v612
      %v616 = vadd.f32 %v603, %v613
      %v617 = vadd.f32 %v604, %v614
      %v618 = vadd.f32 %v605, %v615
      %619 = vset.pattern.permute.xlu0 38
      %620 = vperm.xlu0 %619, %v325
      %v621 = vpop.permute.xlu0 %620
      %v623 = vperm.slane %v566, 4
      %v624 = vperm.slane %v565, 4
      %v625 = vperm.slane %v564, 4
      %v626 = vmul.f32 %v621, %v623
      %v627 = vmul.f32 %v621, %v624
      %v628 = vmul.f32 %v621, %v625
      %v629 = vadd.f32 %v616, %v626
      %v630 = vadd.f32 %v617, %v627
      %v631 = vadd.f32 %v618, %v628
      %632 = vset.pattern.permute.xlu0 47
      %633 = vperm.xlu0 %632, %v325
      %v634 = vpop.permute.xlu0 %633
      %v636 = vperm.slane %v566, 5
      %v637 = vperm.slane %v565, 5
      %v638 = vperm.slane %v564, 5
      %v639 = vmul.f32 %v634, %v636
      %v640 = vmul.f32 %v634, %v637
      %v641 = vmul.f32 %v634, %v638
      %v642 = vadd.f32 %v629, %v639
      %v643 = vadd.f32 %v630, %v640
      %v644 = vadd.f32 %v631, %v641
      %645 = vset.pattern.permute.xlu0 56
      %646 = vperm.xlu0 %645, %v325
      %v647 = vpop.permute.xlu0 %646
      %v649 = vperm.slane %v566, 6
      %v650 = vperm.slane %v565, 6
      %v651 = vperm.slane %v564, 6
      %v652 = vmul.f32 %v647, %v649
      %v653 = vmul.f32 %v647, %v650
      %v654 = vmul.f32 %v647, %v651
      %v655 = vadd.f32 %v642, %v652
      %v656 = vadd.f32 %v643, %v653
      %v657 = vadd.f32 %v644, %v654
      %658 = vset.pattern.permute.xlu0 65
      %659 = vperm.xlu0 %658, %v325
      %v660 = vpop.permute.xlu0 %659
      %v662 = vperm.slane %v566, 7
      %v663 = vperm.slane %v565, 7
      %v664 = vperm.slane %v564, 7
      %v665 = vmul.f32 %v660, %v662
      %v666 = vmul.f32 %v660, %v663
      %v667 = vmul.f32 %v660, %v664
      %v668 = vadd.f32 %v655, %v665
      %v669 = vadd.f32 %v656, %v666
      %v670 = vadd.f32 %v657, %v667
      %671 = vrot.lane.b32.xlu0 %v322, 1
      %v672 = vpop.permute.xlu0 %671
      %673 = vrot.lane.b32.xlu0 %v323, 1
      %v674 = vpop.permute.xlu0 %673
      %675 = vrot.lane.b32.xlu0 %v324, 1
      %v676 = vpop.permute.xlu0 %675
      %vm677 = vcmp.lt.s32.totalorder %v333, 1
      %v678 = vsel %vm677, %v674, %v676
      %v679 = vsel %vm677, %v672, %v674
      %v680 = vsel %vm677, %v676, %v672
      %681 = vset.pattern.permute.xlu0 3
      %682 = vperm.xlu0 %681, %v325
      %v683 = vpop.permute.xlu0 %682
      %v685 = vperm.slane %v680, 0
      %v686 = vperm.slane %v679, 0
      %v687 = vperm.slane %v678, 0
      %v688 = vmul.f32 %v683, %v685
      %v689 = vmul.f32 %v683, %v686
      %v690 = vmul.f32 %v683, %v687
      %v691 = vadd.f32 %v668, %v688
      %v692 = vadd.f32 %v669, %v689
      %v693 = vadd.f32 %v670, %v690
      %694 = vset.pattern.permute.xlu0 12
      %695 = vperm.xlu0 %694, %v325
      %v696 = vpop.permute.xlu0 %695
      %v698 = vperm.slane %v680, 1
      %v699 = vperm.slane %v679, 1
      %v700 = vperm.slane %v678, 1
      %v701 = vmul.f32 %v696, %v698
      %v702 = vmul.f32 %v696, %v699
      %v703 = vmul.f32 %v696, %v700
      %v704 = vadd.f32 %v691, %v701
      %v705 = vadd.f32 %v692, %v702
      %v706 = vadd.f32 %v693, %v703
      %707 = vset.pattern.permute.xlu0 21
      %708 = vperm.xlu0 %707, %v325
      %v709 = vpop.permute.xlu0 %708
      %v711 = vperm.slane %v680, 2
      %v712 = vperm.slane %v679, 2
      %v713 = vperm.slane %v678, 2
      %v714 = vmul.f32 %v709, %v711
      %v715 = vmul.f32 %v709, %v712
      %v716 = vmul.f32 %v709, %v713
      %v717 = vadd.f32 %v704, %v714
      %v718 = vadd.f32 %v705, %v715
      %v719 = vadd.f32 %v706, %v716
      %720 = vset.pattern.permute.xlu0 30
      %721 = vperm.xlu0 %720, %v325
      %v722 = vpop.permute.xlu0 %721
      %v724 = vperm.slane %v680, 3
      %v725 = vperm.slane %v679, 3
      %v726 = vperm.slane %v678, 3
      %v727 = vmul.f32 %v722, %v724
      %v728 = vmul.f32 %v722, %v725
      %v729 = vmul.f32 %v722, %v726
      %v730 = vadd.f32 %v717, %v727
      %v731 = vadd.f32 %v718, %v728
      %v732 = vadd.f32 %v719, %v729
      %733 = vset.pattern.permute.xlu0 39
      %734 = vperm.xlu0 %733, %v325
      %v735 = vpop.permute.xlu0 %734
      %v737 = vperm.slane %v680, 4
      %v738 = vperm.slane %v679, 4
      %v739 = vperm.slane %v678, 4
      %v740 = vmul.f32 %v735, %v737
      %v741 = vmul.f32 %v735, %v738
      %v742 = vmul.f32 %v735, %v739
      %v743 = vadd.f32 %v730, %v740
      %v744 = vadd.f32 %v731, %v741
      %v745 = vadd.f32 %v732, %v742
      %746 = vset.pattern.permute.xlu0 48
      %747 = vperm.xlu0 %746, %v325
      %v748 = vpop.permute.xlu0 %747
      %v750 = vperm.slane %v680, 5
      %v751 = vperm.slane %v679, 5
      %v752 = vperm.slane %v678, 5
      %v753 = vmul.f32 %v748, %v750
      %v754 = vmul.f32 %v748, %v751
      %v755 = vmul.f32 %v748, %v752
      %v756 = vadd.f32 %v743, %v753
      %v757 = vadd.f32 %v744, %v754
      %v758 = vadd.f32 %v745, %v755
      %759 = vset.pattern.permute.xlu0 57
      %760 = vperm.xlu0 %759, %v325
      %v761 = vpop.permute.xlu0 %760
      %v763 = vperm.slane %v680, 6
      %v764 = vperm.slane %v679, 6
      %v765 = vperm.slane %v678, 6
      %v766 = vmul.f32 %v761, %v763
      %v767 = vmul.f32 %v761, %v764
      %v768 = vmul.f32 %v761, %v765
      %v769 = vadd.f32 %v756, %v766
      %v770 = vadd.f32 %v757, %v767
      %v771 = vadd.f32 %v758, %v768
      %772 = vset.pattern.permute.xlu0 66
      %773 = vperm.xlu0 %772, %v325
      %v774 = vpop.permute.xlu0 %773
      %v776 = vperm.slane %v680, 7
      %v777 = vperm.slane %v679, 7
      %v778 = vperm.slane %v678, 7
      %v779 = vmul.f32 %v774, %v776
      %v780 = vmul.f32 %v774, %v777
      %v781 = vmul.f32 %v774, %v778
      %v782 = vadd.f32 %v769, %v779
      %v783 = vadd.f32 %v770, %v780
      %v784 = vadd.f32 %v771, %v781
      %785 = vset.pattern.permute.xlu0 4
      %786 = vperm.xlu0 %785, %v325
      %v787 = vpop.permute.xlu0 %786
      %v789 = vperm.slane %v322, 0
      %v790 = vperm.slane %v323, 0
      %v791 = vperm.slane %v324, 0
      %v792 = vmul.f32 %v787, %v789
      %v793 = vmul.f32 %v787, %v790
      %v794 = vmul.f32 %v787, %v791
      %v795 = vadd.f32 %v782, %v792
      %v796 = vadd.f32 %v783, %v793
      %v797 = vadd.f32 %v784, %v794
      %798 = vset.pattern.permute.xlu0 13
      %799 = vperm.xlu0 %798, %v325
      %v800 = vpop.permute.xlu0 %799
      %v802 = vperm.slane %v322, 1
      %v803 = vperm.slane %v323, 1
      %v804 = vperm.slane %v324, 1
      %v805 = vmul.f32 %v800, %v802
      %v806 = vmul.f32 %v800, %v803
      %v807 = vmul.f32 %v800, %v804
      %v808 = vadd.f32 %v795, %v805
      %v809 = vadd.f32 %v796, %v806
      %v810 = vadd.f32 %v797, %v807
      %811 = vset.pattern.permute.xlu0 22
      %812 = vperm.xlu0 %811, %v325
      %v813 = vpop.permute.xlu0 %812
      %v815 = vperm.slane %v322, 2
      %v816 = vperm.slane %v323, 2
      %v817 = vperm.slane %v324, 2
      %v818 = vmul.f32 %v813, %v815
      %v819 = vmul.f32 %v813, %v816
      %v820 = vmul.f32 %v813, %v817
      %v821 = vadd.f32 %v808, %v818
      %v822 = vadd.f32 %v809, %v819
      %v823 = vadd.f32 %v810, %v820
      %824 = vset.pattern.permute.xlu0 31
      %825 = vperm.xlu0 %824, %v325
      %v826 = vpop.permute.xlu0 %825
      %v828 = vperm.slane %v322, 3
      %v829 = vperm.slane %v323, 3
      %v830 = vperm.slane %v324, 3
      %v831 = vmul.f32 %v826, %v828
      %v832 = vmul.f32 %v826, %v829
      %v833 = vmul.f32 %v826, %v830
      %v834 = vadd.f32 %v821, %v831
      %v835 = vadd.f32 %v822, %v832
      %v836 = vadd.f32 %v823, %v833
      %837 = vset.pattern.permute.xlu0 40
      %838 = vperm.xlu0 %837, %v325
      %v839 = vpop.permute.xlu0 %838
      %v841 = vperm.slane %v322, 4
      %v842 = vperm.slane %v323, 4
      %v843 = vperm.slane %v324, 4
      %v844 = vmul.f32 %v839, %v841
      %v845 = vmul.f32 %v839, %v842
      %v846 = vmul.f32 %v839, %v843
      %v847 = vadd.f32 %v834, %v844
      %v848 = vadd.f32 %v835, %v845
      %v849 = vadd.f32 %v836, %v846
      %850 = vset.pattern.permute.xlu0 49
      %851 = vperm.xlu0 %850, %v325
      %v852 = vpop.permute.xlu0 %851
      %v854 = vperm.slane %v322, 5
      %v855 = vperm.slane %v323, 5
      %v856 = vperm.slane %v324, 5
      %v857 = vmul.f32 %v852, %v854
      %v858 = vmul.f32 %v852, %v855
      %v859 = vmul.f32 %v852, %v856
      %v860 = vadd.f32 %v847, %v857
      %v861 = vadd.f32 %v848, %v858
      %v862 = vadd.f32 %v849, %v859
      %863 = vset.pattern.permute.xlu0 58
      %864 = vperm.xlu0 %863, %v325
      %v865 = vpop.permute.xlu0 %864
      %v867 = vperm.slane %v322, 6
      %v868 = vperm.slane %v323, 6
      %v869 = vperm.slane %v324, 6
      %v870 = vmul.f32 %v865, %v867
      %v871 = vmul.f32 %v865, %v868
      %v872 = vmul.f32 %v865, %v869
      %v873 = vadd.f32 %v860, %v870
      %v874 = vadd.f32 %v861, %v871
      %v875 = vadd.f32 %v862, %v872
      %876 = vset.pattern.permute.xlu0 67
      %877 = vperm.xlu0 %876, %v325
      %v878 = vpop.permute.xlu0 %877
      %v880 = vperm.slane %v322, 7
      %v881 = vperm.slane %v323, 7
      %v882 = vperm.slane %v324, 7
      %v883 = vmul.f32 %v878, %v880
      %v884 = vmul.f32 %v878, %v881
      %v885 = vmul.f32 %v878, %v882
      %v886 = vadd.f32 %v873, %v883
      %v887 = vadd.f32 %v874, %v884
      %v888 = vadd.f32 %v875, %v885
      %889 = vrot.lane.b32.xlu0 %v322, 127
      %v890 = vpop.permute.xlu0 %889
      %891 = vrot.lane.b32.xlu0 %v323, 127
      %v892 = vpop.permute.xlu0 %891
      %893 = vrot.lane.b32.xlu0 %v324, 127
      %v894 = vpop.permute.xlu0 %893
      %vm895 = vcmp.lt.s32.totalorder %v333, 127
      %v896 = vsel %vm895, %v892, %v894
      %v897 = vsel %vm895, %v890, %v892
      %v898 = vsel %vm895, %v894, %v890
      %899 = vset.pattern.permute.xlu0 5
      %900 = vperm.xlu0 %899, %v325
      %v901 = vpop.permute.xlu0 %900
      %v903 = vperm.slane %v897, 0
      %v904 = vperm.slane %v896, 0
      %v905 = vperm.slane %v898, 0
      %v906 = vmul.f32 %v901, %v903
      %v907 = vmul.f32 %v901, %v904
      %v908 = vmul.f32 %v901, %v905
      %v909 = vadd.f32 %v886, %v906
      %v910 = vadd.f32 %v887, %v907
      %v911 = vadd.f32 %v888, %v908
      %912 = vset.pattern.permute.xlu0 14
      %913 = vperm.xlu0 %912, %v325
      %v914 = vpop.permute.xlu0 %913
      %v916 = vperm.slane %v897, 1
      %v917 = vperm.slane %v896, 1
      %v918 = vperm.slane %v898, 1
      %v919 = vmul.f32 %v914, %v916
      %v920 = vmul.f32 %v914, %v917
      %v921 = vmul.f32 %v914, %v918
      %v922 = vadd.f32 %v909, %v919
      %v923 = vadd.f32 %v910, %v920
      %v924 = vadd.f32 %v911, %v921
      %925 = vset.pattern.permute.xlu0 23
      %926 = vperm.xlu0 %925, %v325
      %v927 = vpop.permute.xlu0 %926
      %v929 = vperm.slane %v897, 2
      %v930 = vperm.slane %v896, 2
      %v931 = vperm.slane %v898, 2
      %v932 = vmul.f32 %v927, %v929
      %v933 = vmul.f32 %v927, %v930
      %v934 = vmul.f32 %v927, %v931
      %v935 = vadd.f32 %v922, %v932
      %v936 = vadd.f32 %v923, %v933
      %v937 = vadd.f32 %v924, %v934
      %938 = vset.pattern.permute.xlu0 32
      %939 = vperm.xlu0 %938, %v325
      %v940 = vpop.permute.xlu0 %939
      %v942 = vperm.slane %v897, 3
      %v943 = vperm.slane %v896, 3
      %v944 = vperm.slane %v898, 3
      %v945 = vmul.f32 %v940, %v942
      %v946 = vmul.f32 %v940, %v943
      %v947 = vmul.f32 %v940, %v944
      %v948 = vadd.f32 %v935, %v945
      %v949 = vadd.f32 %v936, %v946
      %v950 = vadd.f32 %v937, %v947
      %951 = vset.pattern.permute.xlu0 41
      %952 = vperm.xlu0 %951, %v325
      %v953 = vpop.permute.xlu0 %952
      %v955 = vperm.slane %v897, 4
      %v956 = vperm.slane %v896, 4
      %v957 = vperm.slane %v898, 4
      %v958 = vmul.f32 %v953, %v955
      %v959 = vmul.f32 %v953, %v956
      %v960 = vmul.f32 %v953, %v957
      %v961 = vadd.f32 %v948, %v958
      %v962 = vadd.f32 %v949, %v959
      %v963 = vadd.f32 %v950, %v960
      %964 = vset.pattern.permute.xlu0 50
      %965 = vperm.xlu0 %964, %v325
      %v966 = vpop.permute.xlu0 %965
      %v968 = vperm.slane %v897, 5
      %v969 = vperm.slane %v896, 5
      %v970 = vperm.slane %v898, 5
      %v971 = vmul.f32 %v966, %v968
      %v972 = vmul.f32 %v966, %v969
      %v973 = vmul.f32 %v966, %v970
      %v974 = vadd.f32 %v961, %v971
      %v975 = vadd.f32 %v962, %v972
      %v976 = vadd.f32 %v963, %v973
      %977 = vset.pattern.permute.xlu0 59
      %978 = vperm.xlu0 %977, %v325
      %v979 = vpop.permute.xlu0 %978
      %v981 = vperm.slane %v897, 6
      %v982 = vperm.slane %v896, 6
      %v983 = vperm.slane %v898, 6
      %v984 = vmul.f32 %v979, %v981
      %v985 = vmul.f32 %v979, %v982
      %v986 = vmul.f32 %v979, %v983
      %v987 = vadd.f32 %v974, %v984
      %v988 = vadd.f32 %v975, %v985
      %v989 = vadd.f32 %v976, %v986
      %990 = vset.pattern.permute.xlu0 68
      %991 = vperm.xlu0 %990, %v325
      %v992 = vpop.permute.xlu0 %991
      %v994 = vperm.slane %v897, 7
      %v995 = vperm.slane %v896, 7
      %v996 = vperm.slane %v898, 7
      %v997 = vmul.f32 %v992, %v994
      %v998 = vmul.f32 %v992, %v995
      %v999 = vmul.f32 %v992, %v996
      %v1000 = vadd.f32 %v987, %v997
      %v1001 = vadd.f32 %v988, %v998
      %v1002 = vadd.f32 %v989, %v999
      %1003 = vrot.lane.b32.xlu0 %v322, 111
      %v1004 = vpop.permute.xlu0 %1003
      %1005 = vrot.lane.b32.xlu0 %v323, 111
      %v1006 = vpop.permute.xlu0 %1005
      %1007 = vrot.lane.b32.xlu0 %v324, 111
      %v1008 = vpop.permute.xlu0 %1007
      %vm1009 = vcmp.lt.s32.totalorder %v333, 111
      %v1010 = vsel %vm1009, %v1006, %v1008
      %v1011 = vsel %vm1009, %v1004, %v1006
      %v1012 = vsel %vm1009, %v1008, %v1004
      %1013 = vset.pattern.permute.xlu0 6
      %1014 = vperm.xlu0 %1013, %v325
      %v1015 = vpop.permute.xlu0 %1014
      %v1017 = vperm.slane %v1011, 0
      %v1018 = vperm.slane %v1010, 0
      %v1019 = vperm.slane %v1012, 0
      %v1020 = vmul.f32 %v1015, %v1017
      %v1021 = vmul.f32 %v1015, %v1018
      %v1022 = vmul.f32 %v1015, %v1019
      %v1023 = vadd.f32 %v1000, %v1020
      %v1024 = vadd.f32 %v1001, %v1021
      %v1025 = vadd.f32 %v1002, %v1022
      %1026 = vset.pattern.permute.xlu0 15
      %1027 = vperm.xlu0 %1026, %v325
      %v1028 = vpop.permute.xlu0 %1027
      %v1030 = vperm.slane %v1011, 1
      %v1031 = vperm.slane %v1010, 1
      %v1032 = vperm.slane %v1012, 1
      %v1033 = vmul.f32 %v1028, %v1030
      %v1034 = vmul.f32 %v1028, %v1031
      %v1035 = vmul.f32 %v1028, %v1032
      %v1036 = vadd.f32 %v1023, %v1033
      %v1037 = vadd.f32 %v1024, %v1034
      %v1038 = vadd.f32 %v1025, %v1035
      %1039 = vset.pattern.permute.xlu0 24
      %1040 = vperm.xlu0 %1039, %v325
      %v1041 = vpop.permute.xlu0 %1040
      %v1043 = vperm.slane %v1011, 2
      %v1044 = vperm.slane %v1010, 2
      %v1045 = vperm.slane %v1012, 2
      %v1046 = vmul.f32 %v1041, %v1043
      %v1047 = vmul.f32 %v1041, %v1044
      %v1048 = vmul.f32 %v1041, %v1045
      %v1049 = vadd.f32 %v1036, %v1046
      %v1050 = vadd.f32 %v1037, %v1047
      %v1051 = vadd.f32 %v1038, %v1048
      %1052 = vset.pattern.permute.xlu0 33
      %1053 = vperm.xlu0 %1052, %v325
      %v1054 = vpop.permute.xlu0 %1053
      %v1056 = vperm.slane %v1011, 3
      %v1057 = vperm.slane %v1010, 3
      %v1058 = vperm.slane %v1012, 3
      %v1059 = vmul.f32 %v1054, %v1056
      %v1060 = vmul.f32 %v1054, %v1057
      %v1061 = vmul.f32 %v1054, %v1058
      %v1062 = vadd.f32 %v1049, %v1059
      %v1063 = vadd.f32 %v1050, %v1060
      %v1064 = vadd.f32 %v1051, %v1061
      %1065 = vset.pattern.permute.xlu0 42
      %1066 = vperm.xlu0 %1065, %v325
      %v1067 = vpop.permute.xlu0 %1066
      %v1069 = vperm.slane %v1011, 4
      %v1070 = vperm.slane %v1010, 4
      %v1071 = vperm.slane %v1012, 4
      %v1072 = vmul.f32 %v1067, %v1069
      %v1073 = vmul.f32 %v1067, %v1070
      %v1074 = vmul.f32 %v1067, %v1071
      %v1075 = vadd.f32 %v1062, %v1072
      %v1076 = vadd.f32 %v1063, %v1073
      %v1077 = vadd.f32 %v1064, %v1074
      %1078 = vset.pattern.permute.xlu0 51
      %1079 = vperm.xlu0 %1078, %v325
      %v1080 = vpop.permute.xlu0 %1079
      %v1082 = vperm.slane %v1011, 5
      %v1083 = vperm.slane %v1010, 5
      %v1084 = vperm.slane %v1012, 5
      %v1085 = vmul.f32 %v1080, %v1082
      %v1086 = vmul.f32 %v1080, %v1083
      %v1087 = vmul.f32 %v1080, %v1084
      %v1088 = vadd.f32 %v1075, %v1085
      %v1089 = vadd.f32 %v1076, %v1086
      %v1090 = vadd.f32 %v1077, %v1087
      %1091 = vset.pattern.permute.xlu0 60
      %1092 = vperm.xlu0 %1091, %v325
      %v1093 = vpop.permute.xlu0 %1092
      %v1095 = vperm.slane %v1011, 6
      %v1096 = vperm.slane %v1010, 6
      %v1097 = vperm.slane %v1012, 6
      %v1098 = vmul.f32 %v1093, %v1095
      %v1099 = vmul.f32 %v1093, %v1096
      %v1100 = vmul.f32 %v1093, %v1097
      %v1101 = vadd.f32 %v1088, %v1098
      %v1102 = vadd.f32 %v1089, %v1099
      %v1103 = vadd.f32 %v1090, %v1100
      %1104 = vset.pattern.permute.xlu0 69
      %1105 = vperm.xlu0 %1104, %v325
      %v1106 = vpop.permute.xlu0 %1105
      %v1108 = vperm.slane %v1011, 7
      %v1109 = vperm.slane %v1010, 7
      %v1110 = vperm.slane %v1012, 7
      %v1111 = vmul.f32 %v1106, %v1108
      %v1112 = vmul.f32 %v1106, %v1109
      %v1113 = vmul.f32 %v1106, %v1110
      %v1114 = vadd.f32 %v1101, %v1111
      %v1115 = vadd.f32 %v1102, %v1112
      %v1116 = vadd.f32 %v1103, %v1113
      %1117 = vrot.lane.b32.xlu0 %v322, 110
      %v1118 = vpop.permute.xlu0 %1117
      %1119 = vrot.lane.b32.xlu0 %v323, 110
      %v1120 = vpop.permute.xlu0 %1119
      %1121 = vrot.lane.b32.xlu0 %v324, 110
      %v1122 = vpop.permute.xlu0 %1121
      %vm1123 = vcmp.lt.s32.totalorder %v333, 110
      %v1124 = vsel %vm1123, %v1120, %v1122
      %v1125 = vsel %vm1123, %v1118, %v1120
      %v1126 = vsel %vm1123, %v1122, %v1118
      %1127 = vset.pattern.permute.xlu0 7
      %1128 = vperm.xlu0 %1127, %v325
      %v1129 = vpop.permute.xlu0 %1128
      %v1131 = vperm.slane %v1125, 0
      %v1132 = vperm.slane %v1124, 0
      %v1133 = vperm.slane %v1126, 0
      %v1134 = vmul.f32 %v1129, %v1131
      %v1135 = vmul.f32 %v1129, %v1132
      %v1136 = vmul.f32 %v1129, %v1133
      %v1137 = vadd.f32 %v1114, %v1134
      %v1138 = vadd.f32 %v1115, %v1135
      %v1139 = vadd.f32 %v1116, %v1136
      %1140 = vset.pattern.permute.xlu0 16
      %1141 = vperm.xlu0 %1140, %v325
      %v1142 = vpop.permute.xlu0 %1141
      %v1144 = vperm.slane %v1125, 1
      %v1145 = vperm.slane %v1124, 1
      %v1146 = vperm.slane %v1126, 1
      %v1147 = vmul.f32 %v1142, %v1144
      %v1148 = vmul.f32 %v1142, %v1145
      %v1149 = vmul.f32 %v1142, %v1146
      %v1150 = vadd.f32 %v1137, %v1147
      %v1151 = vadd.f32 %v1138, %v1148
      %v1152 = vadd.f32 %v1139, %v1149
      %1153 = vset.pattern.permute.xlu0 25
      %1154 = vperm.xlu0 %1153, %v325
      %v1155 = vpop.permute.xlu0 %1154
      %v1157 = vperm.slane %v1125, 2
      %v1158 = vperm.slane %v1124, 2
      %v1159 = vperm.slane %v1126, 2
      %v1160 = vmul.f32 %v1155, %v1157
      %v1161 = vmul.f32 %v1155, %v1158
      %v1162 = vmul.f32 %v1155, %v1159
      %v1163 = vadd.f32 %v1150, %v1160
      %v1164 = vadd.f32 %v1151, %v1161
      %v1165 = vadd.f32 %v1152, %v1162
      %1166 = vset.pattern.permute.xlu0 34
      %1167 = vperm.xlu0 %1166, %v325
      %v1168 = vpop.permute.xlu0 %1167
      %v1170 = vperm.slane %v1125, 3
      %v1171 = vperm.slane %v1124, 3
      %v1172 = vperm.slane %v1126, 3
      %v1173 = vmul.f32 %v1168, %v1170
      %v1174 = vmul.f32 %v1168, %v1171
      %v1175 = vmul.f32 %v1168, %v1172
      %v1176 = vadd.f32 %v1163, %v1173
      %v1177 = vadd.f32 %v1164, %v1174
      %v1178 = vadd.f32 %v1165, %v1175
      %1179 = vset.pattern.permute.xlu0 43
      %1180 = vperm.xlu0 %1179, %v325
      %v1181 = vpop.permute.xlu0 %1180
      %v1183 = vperm.slane %v1125, 4
      %v1184 = vperm.slane %v1124, 4
      %v1185 = vperm.slane %v1126, 4
      %v1186 = vmul.f32 %v1181, %v1183
      %v1187 = vmul.f32 %v1181, %v1184
      %v1188 = vmul.f32 %v1181, %v1185
      %v1189 = vadd.f32 %v1176, %v1186
      %v1190 = vadd.f32 %v1177, %v1187
      %v1191 = vadd.f32 %v1178, %v1188
      %1192 = vset.pattern.permute.xlu0 52
      %1193 = vperm.xlu0 %1192, %v325
      %v1194 = vpop.permute.xlu0 %1193
      %v1196 = vperm.slane %v1125, 5
      %v1197 = vperm.slane %v1124, 5
      %v1198 = vperm.slane %v1126, 5
      %v1199 = vmul.f32 %v1194, %v1196
      %v1200 = vmul.f32 %v1194, %v1197
      %v1201 = vmul.f32 %v1194, %v1198
      %v1202 = vadd.f32 %v1189, %v1199
      %v1203 = vadd.f32 %v1190, %v1200
      %v1204 = vadd.f32 %v1191, %v1201
      %1205 = vset.pattern.permute.xlu0 61
      %1206 = vperm.xlu0 %1205, %v325
      %v1207 = vpop.permute.xlu0 %1206
      %v1209 = vperm.slane %v1125, 6
      %v1210 = vperm.slane %v1124, 6
      %v1211 = vperm.slane %v1126, 6
      %v1212 = vmul.f32 %v1207, %v1209
      %v1213 = vmul.f32 %v1207, %v1210
      %v1214 = vmul.f32 %v1207, %v1211
      %v1215 = vadd.f32 %v1202, %v1212
      %v1216 = vadd.f32 %v1203, %v1213
      %v1217 = vadd.f32 %v1204, %v1214
      %1218 = vset.pattern.permute.xlu0 70
      %1219 = vperm.xlu0 %1218, %v325
      %v1220 = vpop.permute.xlu0 %1219
      %v1222 = vperm.slane %v1125, 7
      %v1223 = vperm.slane %v1124, 7
      %v1224 = vperm.slane %v1126, 7
      %v1225 = vmul.f32 %v1220, %v1222
      %v1226 = vmul.f32 %v1220, %v1223
      %v1227 = vmul.f32 %v1220, %v1224
      %v1228 = vadd.f32 %v1215, %v1225
      %v1229 = vadd.f32 %v1216, %v1226
      %v1230 = vadd.f32 %v1217, %v1227
      %1231 = vrot.lane.b32.xlu0 %v322, 109
      %v1232 = vpop.permute.xlu0 %1231
      %1233 = vrot.lane.b32.xlu0 %v323, 109
      %v1234 = vpop.permute.xlu0 %1233
      %1235 = vrot.lane.b32.xlu0 %v324, 109
      %v1236 = vpop.permute.xlu0 %1235
      %vm1237 = vcmp.lt.s32.totalorder %v333, 109
      %v1238 = vsel %vm1237, %v1234, %v1236
      %v1239 = vsel %vm1237, %v1232, %v1234
      %v1240 = vsel %vm1237, %v1236, %v1232
      %1241 = vset.pattern.permute.xlu0 8
      %1242 = vperm.xlu0 %1241, %v325
      %v1243 = vpop.permute.xlu0 %1242
      %v1245 = vperm.slane %v1239, 0
      %v1246 = vperm.slane %v1238, 0
      %v1247 = vperm.slane %v1240, 0
      %v1248 = vmul.f32 %v1243, %v1245
      %v1249 = vmul.f32 %v1243, %v1246
      %v1250 = vmul.f32 %v1243, %v1247
      %v1251 = vadd.f32 %v1228, %v1248
      %v1252 = vadd.f32 %v1229, %v1249
      %v1253 = vadd.f32 %v1230, %v1250
      %1254 = vset.pattern.permute.xlu0 17
      %1255 = vperm.xlu0 %1254, %v325
      %v1256 = vpop.permute.xlu0 %1255
      %v1258 = vperm.slane %v1239, 1
      %v1259 = vperm.slane %v1238, 1
      %v1260 = vperm.slane %v1240, 1
      %v1261 = vmul.f32 %v1256, %v1258
      %v1262 = vmul.f32 %v1256, %v1259
      %v1263 = vmul.f32 %v1256, %v1260
      %v1264 = vadd.f32 %v1251, %v1261
      %v1265 = vadd.f32 %v1252, %v1262
      %v1266 = vadd.f32 %v1253, %v1263
      %1267 = vset.pattern.permute.xlu0 26
      %1268 = vperm.xlu0 %1267, %v325
      %v1269 = vpop.permute.xlu0 %1268
      %v1271 = vperm.slane %v1239, 2
      %v1272 = vperm.slane %v1238, 2
      %v1273 = vperm.slane %v1240, 2
      %v1274 = vmul.f32 %v1269, %v1271
      %v1275 = vmul.f32 %v1269, %v1272
      %v1276 = vmul.f32 %v1269, %v1273
      %v1277 = vadd.f32 %v1264, %v1274
      %v1278 = vadd.f32 %v1265, %v1275
      %v1279 = vadd.f32 %v1266, %v1276
      %1280 = vset.pattern.permute.xlu0 35
      %1281 = vperm.xlu0 %1280, %v325
      %v1282 = vpop.permute.xlu0 %1281
      %v1284 = vperm.slane %v1239, 3
      %v1285 = vperm.slane %v1238, 3
      %v1286 = vperm.slane %v1240, 3
      %v1287 = vmul.f32 %v1282, %v1284
      %v1288 = vmul.f32 %v1282, %v1285
      %v1289 = vmul.f32 %v1282, %v1286
      %v1290 = vadd.f32 %v1277, %v1287
      %v1291 = vadd.f32 %v1278, %v1288
      %v1292 = vadd.f32 %v1279, %v1289
      %1293 = vset.pattern.permute.xlu0 44
      %1294 = vperm.xlu0 %1293, %v325
      %v1295 = vpop.permute.xlu0 %1294
      %v1297 = vperm.slane %v1239, 4
      %v1298 = vperm.slane %v1238, 4
      %v1299 = vperm.slane %v1240, 4
      %v1300 = vmul.f32 %v1295, %v1297
      %v1301 = vmul.f32 %v1295, %v1298
      %v1302 = vmul.f32 %v1295, %v1299
      %v1303 = vadd.f32 %v1290, %v1300
      %v1304 = vadd.f32 %v1291, %v1301
      %v1305 = vadd.f32 %v1292, %v1302
      %1306 = vset.pattern.permute.xlu0 53
      %1307 = vperm.xlu0 %1306, %v325
      %v1308 = vpop.permute.xlu0 %1307
      %v1310 = vperm.slane %v1239, 5
      %v1311 = vperm.slane %v1238, 5
      %v1312 = vperm.slane %v1240, 5
      %v1313 = vmul.f32 %v1308, %v1310
      %v1314 = vmul.f32 %v1308, %v1311
      %v1315 = vmul.f32 %v1308, %v1312
      %v1316 = vadd.f32 %v1303, %v1313
      %v1317 = vadd.f32 %v1304, %v1314
      %v1318 = vadd.f32 %v1305, %v1315
      %1319 = vset.pattern.permute.xlu0 62
      %1320 = vperm.xlu0 %1319, %v325
      %v1321 = vpop.permute.xlu0 %1320
      %v1323 = vperm.slane %v1239, 6
      %v1324 = vperm.slane %v1238, 6
      %v1325 = vperm.slane %v1240, 6
      %v1326 = vmul.f32 %v1321, %v1323
      %v1327 = vmul.f32 %v1321, %v1324
      %v1328 = vmul.f32 %v1321, %v1325
      %v1329 = vadd.f32 %v1316, %v1326
      %v1330 = vadd.f32 %v1317, %v1327
      %v1331 = vadd.f32 %v1318, %v1328
      %1332 = vset.pattern.permute.xlu0 71
      %1333 = vperm.xlu0 %1332, %v325
      %v1334 = vpop.permute.xlu0 %1333
      %v1336 = vperm.slane %v1239, 7
      %v1337 = vperm.slane %v1238, 7
      %v1338 = vperm.slane %v1240, 7
      %v1339 = vmul.f32 %v1334, %v1336
      %v1340 = vmul.f32 %v1334, %v1337
      %v1341 = vmul.f32 %v1334, %v1338
      %v1342 = vadd.f32 %v1329, %v1339
      %v1343 = vadd.f32 %v1330, %v1340
      %v1344 = vadd.f32 %v1331, %v1341
      %v1345 = vld [vmem:[%s4] sm:$0xff]
      %1347 = vset.pattern.permute.xlu0 0
      %1348 = vperm.xlu0 %1347, %v1345
      %v1349 = vpop.permute.xlu0 %1348
      %v1351 = vadd.f32 %v1342, %v1349
      %v1352 = vadd.f32 %v1343, %v1349
      %v1353 = vadd.f32 %v1344, %v1349
      %v1354 = vmul.f32 %v1351, %v316
      %v1355 = vmul.f32 %v1352, %v317
      %v1356 = vmul.f32 %v1353, %v318
      %1357 = vst [vmem:[%s285] sm:$0xff] %v1354
      %1358 = vst [vmem:[%s285 + $0x8] sm:$0xff] %v1355
      %1359 = vst [vmem:[%s285 + $0x10] sm:$0xff] %v1356
      %v1360 = vadd.f32 %v1354, %v1355
      %v1361 = vadd.f32 %v1360, %v1356
      %1362 = vadd.xlane.f32.xlu0 %v1361
      %v1363 = vpop.xlane.xlu0 %1362
      %vm1364 = vcmask 7168
      %1365 = vst.msk [vmem:[%s289] sm:$0xff] %vm1364, %v1363
      %v1366 = vmul.f32 %v1354, %v1354
      %v1367 = vmul.f32 %v1355, %v1355
      %v1368 = vmul.f32 %v1356, %v1356
      %v1369 = vadd.f32 %v1366, %v1367
      %v1370 = vadd.f32 %v1369, %v1368
      %1371 = vadd.xlane.f32.xlu0 %v1370
      %v1372 = vpop.xlane.xlu0 %1371
      %vm1373 = vcmask 15368
      %1374 = vst.msk [vmem:[%s289] sm:$0xff] %vm1373, %v1372
      %p1375 = scmp.lt.s32.totalorder %s19, 1
      %s1376 = scalar_select %p1375, %s19, 1
      %s1377 = smul.addr %s1376, 3
      %s1378 = smul.addr %s1377, 8
      %s1379 = scalar_lea.vmem %s6, %s1378
      %p1380 = scmp.lt.s32.totalorder %s19, 1
      %s1381 = scalar_select %p1380, %s19, 1
      %s1382 = smul.addr %s1381, 8
      %s1383 = scalar_lea.vmem %s7, %s1382
      // Predicated region
      $region45: #{conv_relu_forward.3} parent=43 // pred_check
        %p1384 = pneg %p168
      $region46: #{conv_relu_forward.3} parent=43 // pred_check_branch
        %1386 = sbr.rel (%p1384) target = $region48
      $region47: #{conv_relu_forward.3} parent=43 // pred_region
        _
      $region48: #{conv_relu_forward.3} parent=43 // pred_fallthru
        _
      // Predicated region
      $region49: #{conv_relu_forward.3} parent=43 // pred_check
        %p1387 = pneg %p194
      $region50: #{conv_relu_forward.3} parent=43 // pred_check_branch
        %1389 = sbr.rel (%p1387) target = $region52
      $region51: #{conv_relu_forward.3} parent=43 // pred_region
        _
      $region52: #{conv_relu_forward.3} parent=43 // pred_fallthru
        _
    $region44: #{conv_relu_forward.3} parent=5 // pred_fallthru
      _
    %p1390 = scmp.le.s32.totalorder 2, %s14
    // Predicated region
    $region53: #{conv_relu_forward.3} parent=5 // pred_check
      %p1391 = pneg %p1390
    $region54: #{conv_relu_forward.3} parent=5 // pred_check_branch
      %1393 = sbr.rel (%p1391) target = $region56
    $region55: #{conv_relu_forward.3} parent=5 // pred_region
      %s1394 = ssub.s32 %s14, 2
      // Predicated region
      $region57: #{conv_relu_forward.3} parent=55 // pred_check
        %p1395 = pneg %p174
      $region58: #{conv_relu_forward.3} parent=55 // pred_check_branch
        %1397 = sbr.rel (%p1395) target = $region60
      $region59: #{conv_relu_forward.3} parent=55 // pred_region
        %p1398 = scmp.lt.s32.totalorder %s20, 1
        %s1399 = scalar_select %p1398, %s20, 1
        %s1400 = smul.addr %s1399, 3
        %s1401 = smul.addr %s1400, 8
        %s1402 = scalar_lea.vmem %s6, %s1401
      $region60: #{conv_relu_forward.3} parent=55 // pred_fallthru
        _
      // Predicated region
      $region61: #{conv_relu_forward.3} parent=55 // pred_check
        %p1403 = pneg %p200
      $region62: #{conv_relu_forward.3} parent=55 // pred_check_branch
        %1405 = sbr.rel (%p1403) target = $region64
      $region63: #{conv_relu_forward.3} parent=55 // pred_region
        %p1406 = scmp.lt.s32.totalorder %s20, 1
        %s1407 = scalar_select %p1406, %s20, 1
        %s1408 = smul.addr %s1407, 8
        %s1409 = scalar_lea.vmem %s7, %s1408
      $region64: #{conv_relu_forward.3} parent=55 // pred_fallthru
        _
    $region56: #{conv_relu_forward.3} parent=5 // pred_fallthru
      _
  $region6: #{conv_relu_forward.3} parent=0 // loop_footer
    %s18 = sadd.s32 1, %s14
  $region7: #{conv_relu_forward.3} parent=0 // loop_footer_branch
    %13 = sbr.rel target = $region3
  $region8: #{conv_relu_forward.3} parent=0 // loop_exit
    _

</llo_original>
